<compile_context>
chip_gen: v5e
topology: v5e:2x2
jax: 0.10.0
libtpu: 0.0.40
codegen_flags: <defaults>
</compile_context>

<pallas_src>
from functools import partial

import jax
import jax.numpy as jnp
from jax.experimental import pallas as pl
from jax.experimental.pallas import tpu as pltpu


def round_up(x, m):
    return (x + m - 1) // m * m


_DUAL_TC = None


def _is_dual_tc():
    """Heuristic: v7x exposes ~64 MiB VMEM per TensorCore (2 TCs/chip); v5e/v6e
    report 128 MiB and are single-TC. Guarded so it can never break the run."""
    global _DUAL_TC
    if _DUAL_TC is None:
        try:
            info = pltpu.get_tpu_info()
            _DUAL_TC = int(getattr(info, "vmem_capacity_bytes", 128 << 20)) <= (64 << 20)
        except Exception:
            _DUAL_TC = False
    return _DUAL_TC


# ----------------------------------------------------------------------------
# Pallas kernels
# ----------------------------------------------------------------------------
def _mm_kernel(*refs, relu, has_residual):
    """out = act(a @ b + bias [+ residual]); single K step, f32 on the MXU."""
    if has_residual:
        a_ref, b_ref, t_ref, r_ref, o_ref = refs
    else:
        a_ref, b_ref, t_ref, o_ref = refs
        r_ref = None
    y = jnp.dot(a_ref[...], b_ref[...], preferred_element_type=jnp.float32)
    y = y + t_ref[...]
    if has_residual:
        y = y + r_ref[...].astype(jnp.float32)
    if relu:
        y = jnp.maximum(y, 0.0)
    o_ref[...] = y.astype(o_ref.dtype)


def _conv3x3_kernel(x_ref, w_ref, b_ref, o_ref, *, relu):
    """3x3 stride-1 pad-1 conv for one image: in-kernel tap loop, f32 acc.

    x_ref: (1, oh+2, ow+2, ci)  w_ref: (9, ci, co)  b_ref: (1, co)
    o_ref: (1, oh, ow, co)
    """
    _, oh, ow, co = o_ref.shape
    ci = x_ref.shape[-1]
    acc = None
    for t in range(9):
        di, dj = t // 3, t % 3
        xs = x_ref[0, di:di + oh, dj:dj + ow, :]          # (oh, ow, ci)
        a = xs.reshape(oh * ow, ci)
        d = jnp.dot(a, w_ref[t], preferred_element_type=jnp.float32)
        acc = d if acc is None else acc + d
    y = acc + b_ref[...]
    if relu:
        y = jnp.maximum(y, 0.0)
    o_ref[...] = y.reshape(1, oh, ow, co).astype(o_ref.dtype)


def _maxpool_kernel(x_ref, o_ref):
    """3x3 stride-2 max-pool, single pass over a phase-reshaped padded input.

    x_ref: (1, hq, 2, wq, 2c) where the last dim holds the two W phases
    (lanes [0:c] = even columns, [c:2c] = odd columns) and the size-2 dim
    holds the two H phases.  o_ref: (1, oh, ow, c).
    Input is post-ReLU, so the zero padding is exact for max.
    """
    _, oh, ow, c = o_ref.shape
    m = None
    for h0, hr in ((0, 0), (0, 1), (1, 0)):               # row taps i = 0,1,2
        for w0, c0 in ((0, 0), (0, c), (1, 0)):           # col taps j = 0,1,2
            v = x_ref[0, h0:h0 + oh, hr, w0:w0 + ow, c0:c0 + c]
            m = v if m is None else jnp.maximum(m, v)
    o_ref[0] = m


# ----------------------------------------------------------------------------
# Fused matmul wrapper (single K step, no accumulator scratch)
# ----------------------------------------------------------------------------
def matmul_bias_act(a, w, bias, *, relu, residual=None):
    """a:(M,K) bf16 activations, w:(K,N) bf16 folded weights, bias:(1,N) f32."""
    m, k = a.shape
    kw, n = w.shape
    assert k == kw, (k, kw)

    mp = round_up(m, 8)
    if mp <= 1024:
        tm = mp
    else:
        tm = 512
        mp = round_up(mp, tm)
    tn = n                                   # full-N lane-dense output tile

    # Dual-TC (v7x) only: make sure the grid has >= 2 parallel blocks.
    if _is_dual_tc() and (mp // tm) < 2:
        if tm % 16 == 0:
            tm //= 2
        elif n % 256 == 0 and n >= 256:
            tn = n // 2

    a_p = a.astype(jnp.bfloat16)
    if mp != m:
        a_p = jnp.pad(a_p, ((0, mp - m), (0, 0)))

    inputs = [a_p, w, bias]
    in_specs = [
        pl.BlockSpec((tm, k), lambda i, j: (i, 0)),
        pl.BlockSpec((k, tn), lambda i, j: (0, j)),
        pl.BlockSpec((1, tn), lambda i, j: (0, j)),
    ]
    has_res = residual is not None
    if has_res:
        r_p = residual.astype(jnp.bfloat16)
        if mp != m:
            r_p = jnp.pad(r_p, ((0, mp - m), (0, 0)))
        inputs.append(r_p)
        in_specs.append(pl.BlockSpec((tm, tn), lambda i, j: (i, j)))

    bytes_accessed = 2 * (mp * k + k * n + mp * n) + 4 * n
    if has_res:
        bytes_accessed += 2 * mp * n

    out = pl.pallas_call(
        partial(_mm_kernel, relu=relu, has_residual=has_res),
        out_shape=jax.ShapeDtypeStruct((mp, n), jnp.bfloat16),
        grid_spec=pltpu.PrefetchScalarGridSpec(
            num_scalar_prefetch=0,
            grid=(mp // tm, n // tn),
            in_specs=in_specs,
            out_specs=pl.BlockSpec((tm, tn), lambda i, j: (i, j)),
        ),
        compiler_params=pltpu.CompilerParams(
            dimension_semantics=("parallel", "parallel")),
        cost_estimate=pl.CostEstimate(flops=2 * mp * n * k,
                                      transcendentals=0,
                                      bytes_accessed=bytes_accessed),
    )(*inputs)
    if mp != m:
        out = out[:m]
    return out


# ----------------------------------------------------------------------------
# NN building blocks
# ----------------------------------------------------------------------------
def conv1x1(x, w_mat, bias, *, relu, residual=None):
    n, h, w, c = x.shape
    m = n * h * w
    a = x.reshape(m, c)
    r = residual.reshape(m, residual.shape[-1]) if residual is not None else None
    out = matmul_bias_act(a, w_mat, bias, relu=relu, residual=r)
    return out.reshape(n, h, w, out.shape[-1])


def conv3x3(x, w_taps, bias, *, relu):
    """3x3 / stride 1 / pad 1 conv + folded BN (+ReLU), in-kernel tap loop."""
    n, h, w, ci = x.shape
    co = w_taps.shape[-1]
    xp = jnp.pad(x, ((0, 0), (1, 1), (1, 1), (0, 0)))
    return pl.pallas_call(
        partial(_conv3x3_kernel, relu=relu),
        out_shape=jax.ShapeDtypeStruct((n, h, w, co), jnp.bfloat16),
        grid_spec=pltpu.PrefetchScalarGridSpec(
            num_scalar_prefetch=0,
            grid=(n,),
            in_specs=[
                pl.BlockSpec((1, h + 2, w + 2, ci), lambda i: (i, 0, 0, 0)),
                pl.BlockSpec((9, ci, co), lambda i: (0, 0, 0)),
                pl.BlockSpec((1, co), lambda i: (0, 0)),
            ],
            out_specs=pl.BlockSpec((1, h, w, co), lambda i: (i, 0, 0, 0)),
        ),
        compiler_params=pltpu.CompilerParams(dimension_semantics=("parallel",)),
    )(xp, w_taps, bias)


def maxpool3x3s2(x):
    """3x3 / stride 2 / pad 1 max-pool, single-pass kernel."""
    n, h, w, c = x.shape
    xp = jnp.pad(x, ((0, 0), (1, 1), (1, 1), (0, 0)))
    hp, wp = h + 2, w + 2
    oh = (hp - 3) // 2 + 1
    ow = (wp - 3) // 2 + 1
    hp_e, wp_e = round_up(hp, 2), round_up(wp, 2)
    if (hp_e, wp_e) != (hp, wp):
        xp = jnp.pad(xp, ((0, 0), (0, hp_e - hp), (0, wp_e - wp), (0, 0)))
    hq, wq = hp_e // 2, wp_e // 2
    # Free, order-preserving reshape: W phase folded into lanes, H phase into
    # an explicit size-2 (major) dim -> no strided reads inside the kernel.
    xr = xp.reshape(n, hq, 2, wq, 2 * c)
    return pl.pallas_call(
        _maxpool_kernel,
        out_shape=jax.ShapeDtypeStruct((n, oh, ow, c), x.dtype),
        grid_spec=pltpu.PrefetchScalarGridSpec(
            num_scalar_prefetch=0,
            grid=(n,),
            in_specs=[pl.BlockSpec((1, hq, 2, wq, 2 * c),
                                   lambda i: (i, 0, 0, 0, 0))],
            out_specs=pl.BlockSpec((1, oh, ow, c), lambda i: (i, 0, 0, 0)),
        ),
        compiler_params=pltpu.CompilerParams(dimension_semantics=("parallel",)),
    )(xr)


def stem_conv(x, w_mat, bias):
    """7x7 / stride 2 / pad 3 conv + BN + ReLU via host-side im2col.

    TODO(synk): im2col is still host-side; with only 3 input channels the
    49-tap column blowup is 147 columns, which is tiny in absolute bytes.
    K is padded up to a 128 multiple (zeros) purely for MXU/layout alignment.
    """
    n, h, w, c = x.shape
    xp = jnp.pad(x, ((0, 0), (3, 3), (3, 3), (0, 0)))
    oh = (h + 6 - 7) // 2 + 1
    ow = (w + 6 - 7) // 2 + 1
    cols = [xp[:, i:i + 2 * oh:2, j:j + 2 * ow:2, :]
            for i in range(7) for j in range(7)]
    kk = 49 * c
    kp = w_mat.shape[0]
    if kp > kk:
        cols.append(jnp.zeros((n, oh, ow, kp - kk), x.dtype))
    a = jnp.concatenate(cols, axis=-1).reshape(n * oh * ow, kp)
    out = matmul_bias_act(a, w_mat, bias, relu=True)
    return out.reshape(n, oh, ow, out.shape[-1])


def bottleneck(x, p):
    h = conv1x1(x, p['w1'], p['b1'], relu=True)
    h = conv3x3(h, p['w2'], p['b2'], relu=True)
    if 'wd' in p:
        identity = conv1x1(x, p['wd'], p['bd'], relu=False)
    else:
        identity = x
    # Residual add + ReLU fused into conv3's matmul epilogue.
    return conv1x1(h, p['w3'], p['b3'], relu=True, residual=identity)


def resnet101_encoder_share(prepped, x_nchw, *, seg, s):
    """Mirrors ResNet101EncoderShare.forward(x, seg, s). seg/s are static."""
    x = jnp.transpose(x_nchw, (0, 2, 3, 1)).astype(jnp.bfloat16)  # NCHW -> NHWC
    if seg:
        x = jnp.pad(x, ((0, 0), (99, 99), (99, 99), (0, 0)))
    stem = prepped['stem2'] if s else prepped['stem1']
    h = stem_conv(x, stem['w'], stem['b'])
    h = maxpool3x3s2(h)
    for blk in prepped['layer1']:
        h = bottleneck(h, blk)
    return jnp.transpose(h, (0, 3, 1, 2)).astype(jnp.float32)     # back to NCHW


# ----------------------------------------------------------------------------
# One-time weight preparation (hoisted out of the per-forward path)
# ----------------------------------------------------------------------------
def _fold_bn(w_oihw, bn):
    gamma, beta, mean, var = bn
    scale = gamma * jax.lax.rsqrt(var + 1e-5)
    bias = beta - mean * scale
    w = jnp.transpose(w_oihw, (2, 3, 1, 0)) * scale        # (kh, kw, i, o)
    o = w_oihw.shape[0]
    return w, bias.reshape(1, o).astype(jnp.float32)


def prep_conv_mat(w_oihw, bn, k_multiple=None):
    w, b = _fold_bn(w_oihw, bn)
    kh, kw, i, o = w.shape
    wm = w.reshape(kh * kw * i, o)
    if k_multiple is not None:
        kp = round_up(wm.shape[0], k_multiple)
        if kp != wm.shape[0]:
            wm = jnp.pad(wm, ((0, kp - wm.shape[0]), (0, 0)))
    return wm.astype(jnp.bfloat16), b


def prep_conv_taps(w_oihw, bn):
    w, b = _fold_bn(w_oihw, bn)
    kh, kw, i, o = w.shape
    return w.reshape(kh * kw, i, o).astype(jnp.bfloat16), b


def prepare_params(params):
    prepped = {}
    for name in ('stem1', 'stem2'):
        wm, b = prep_conv_mat(params[name]['conv'], params[name]['bn'],
                              k_multiple=128)
        prepped[name] = {'w': wm, 'b': b}
    blocks = []
    for blk in params['layer1']:
        p = {}
        p['w1'], p['b1'] = prep_conv_mat(blk['conv1'], blk['bn1'])
        p['w2'], p['b2'] = prep_conv_taps(blk['conv2'], blk['bn2'])
        p['w3'], p['b3'] = prep_conv_mat(blk['conv3'], blk['bn3'])
        if 'downsample' in blk:
            p['wd'], p['bd'] = prep_conv_mat(blk['downsample']['conv'],
                                             blk['downsample']['bn'])
        blocks.append(p)
    prepped['layer1'] = blocks
    return prepped


# ----------------------------------------------------------------------------
# Deterministic parameter initialization (synthetic, resnet101 layer1 shapes)
# ----------------------------------------------------------------------------
def init_conv(key, o, i, kh, kw):
    return jax.random.normal(key, (o, i, kh, kw), jnp.float32) * 0.05


def init_bn(key, c):
    k1, k2, k3, k4 = jax.random.split(key, 4)
    gamma = 1.0 + 0.1 * jax.random.normal(k1, (c,), jnp.float32)
    beta = 0.1 * jax.random.normal(k2, (c,), jnp.float32)
    mean = 0.1 * jax.random.normal(k3, (c,), jnp.float32)
    var = jnp.abs(jax.random.normal(k4, (c,), jnp.float32)) * 0.1 + 0.5
    return (gamma, beta, mean, var)


def init_params(key):
    keys = iter(jax.random.split(key, 64))
    params = {}
    for name in ('stem1', 'stem2'):         # conv_block1 and conv_block1_2 stems
        params[name] = {
            'conv': init_conv(next(keys), 64, 3, 7, 7),
            'bn': init_bn(next(keys), 64),
        }
    layer1 = []
    inplanes = 64
    for b in range(3):                      # layer1: 3 bottlenecks, 64 -> 256
        blk = {
            'conv1': init_conv(next(keys), 64, inplanes, 1, 1),
            'bn1': init_bn(next(keys), 64),
            'conv2': init_conv(next(keys), 64, 64, 3, 3),
            'bn2': init_bn(next(keys), 64),
            'conv3': init_conv(next(keys), 256, 64, 1, 1),
            'bn3': init_bn(next(keys), 256),
        }
        if b == 0:
            blk['downsample'] = {
                'conv': init_conv(next(keys), 256, inplanes, 1, 1),
                'bn': init_bn(next(keys), 256),
            }
        layer1.append(blk)
        inplanes = 256
    params['layer1'] = layer1
    return params


if __name__ == "__main__":
    key = jax.random.PRNGKey(0)
    k_param, k_x = jax.random.split(key)
    params = init_params(k_param)
    prepped = prepare_params(params)          # one-time BN fold / relayout / bf16

    # small input consistent with the module: NCHW, 3 input channels
    x = jax.random.normal(k_x, (2, 3, 32, 32), jnp.float32)

    fwd = jax.jit(partial(resnet101_encoder_share, seg=False, s=False))
    out = jax.block_until_ready(fwd(prepped, x))

    assert out.shape == (2, 256, 8, 8), out.shape
    assert bool(jnp.all(jnp.isfinite(out)))
    print("KERNEL_OK")
</pallas_src>

<mosaic_0001>
module attributes {stable_mosaic.version = 11 : i64} {
  func.func @_mm_kernel(%arg0: i32, %arg1: i32, %arg2: memref<512x256xbf16, #tpu.memory_space<vmem>>, %arg3: memref<256x64xbf16, #tpu.memory_space<vmem>>, %arg4: memref<1x64xf32, #tpu.memory_space<vmem>>, %arg5: memref<512x64xbf16, #tpu.memory_space<vmem>>) attributes {dimension_semantics = [#tpu.dimension_semantics<parallel>, #tpu.dimension_semantics<parallel>], iteration_bounds = array<i64: 1, 1>, scalar_prefetch = 0 : i64, scratch_operands = 0 : i64, tpu.core_type = #tpu.core_type<tc>, window_params = [{transform_indices = @transform_0, window_bounds = array<i64: 512, 256>}, {transform_indices = @transform_1, window_bounds = array<i64: 256, 64>}, {transform_indices = @transform_2, window_bounds = array<i64: 1, 64>}, {transform_indices = @transform_3, window_bounds = array<i64: 512, 64>}]} {
    %c0 = arith.constant 0 : index
    %c0_0 = arith.constant 0 : index
    %0 = vector.load %arg2[%c0, %c0_0] : memref<512x256xbf16, #tpu.memory_space<vmem>>, vector<512x256xbf16>
    %c0_1 = arith.constant 0 : index
    %c0_2 = arith.constant 0 : index
    %1 = vector.load %arg3[%c0_1, %c0_2] : memref<256x64xbf16, #tpu.memory_space<vmem>>, vector<256x64xbf16>
    %cst = arith.constant dense<0.000000e+00> : vector<512x64xf32>
    %2 = tpu.matmul %0, %1, %cst {dimension_numbers = #tpu.dot_dimension_numbers<[1], [0], [0], [1], [0, 0, 1, 1], [], []>} : vector<512x256xbf16>, vector<256x64xbf16>, vector<512x64xf32> -> vector<512x64xf32>
    %c0_3 = arith.constant 0 : index
    %c0_4 = arith.constant 0 : index
    %3 = vector.load %arg4[%c0_3, %c0_4] : memref<1x64xf32, #tpu.memory_space<vmem>>, vector<1x64xf32>
    %4 = vector.broadcast %3 : vector<1x64xf32> to vector<512x64xf32>
    %5 = arith.addf %2, %4 : vector<512x64xf32>
    %cst_5 = arith.constant 0.000000e+00 : f32
    %6 = vector.broadcast %cst_5 : f32 to vector<512x64xf32>
    %7 = arith.maximumf %5, %6 : vector<512x64xf32>
    %8 = arith.truncf %7 : vector<512x64xf32> to vector<512x64xbf16>
    %c0_6 = arith.constant 0 : index
    %c0_7 = arith.constant 0 : index
    %9 = vector.load %arg5[%c0_6, %c0_7] : memref<512x64xbf16, #tpu.memory_space<vmem>>, vector<512x64xbf16>
    tpu.vector_store %arg5[%c0_6, %c0_7], %8 {strides = array<i32>} : memref<512x64xbf16, #tpu.memory_space<vmem>>, vector<512x64xbf16>,
    return
  }
  func.func @transform_0(%arg0: i32, %arg1: i32) -> (i32, i32) {
    %c0_i32 = arith.constant 0 : i32
    %c0_i32_0 = arith.constant 0 : i32
    return %arg0, %c0_i32 : i32, i32
  }
  func.func @transform_1(%arg0: i32, %arg1: i32) -> (i32, i32) {
    %c0_i32 = arith.constant 0 : i32
    %c0_i32_0 = arith.constant 0 : i32
    return %c0_i32, %arg1 : i32, i32
  }
  func.func @transform_2(%arg0: i32, %arg1: i32) -> (i32, i32) {
    %c0_i32 = arith.constant 0 : i32
    %c0_i32_0 = arith.constant 0 : i32
    return %c0_i32, %arg1 : i32, i32
  }
  func.func @transform_3(%arg0: i32, %arg1: i32) -> (i32, i32) {
    %c0_i32 = arith.constant 0 : i32
    return %arg0, %arg1 : i32, i32
  }
}

module attributes {stable_mosaic.version = 11 : i64} {
  func.func @_maxpool_kernel(%arg0: i32, %arg1: memref<1x9x2x9x128xbf16, #tpu.memory_space<vmem>>, %arg2: memref<1x8x8x64xbf16, #tpu.memory_space<vmem>>) attributes {dimension_semantics = [#tpu.dimension_semantics<parallel>], iteration_bounds = array<i64: 2>, scalar_prefetch = 0 : i64, scratch_operands = 0 : i64, tpu.core_type = #tpu.core_type<tc>, window_params = [{transform_indices = @transform_0, window_bounds = array<i64: 1, 9, 2, 9, 128>}, {transform_indices = @transform_1, window_bounds = array<i64: 1, 8, 8, 64>}]} {
    %c0 = arith.constant 0 : index
    %c0_0 = arith.constant 0 : index
    %c0_1 = arith.constant 0 : index
    %c0_2 = arith.constant 0 : index
    %c0_3 = arith.constant 0 : index
    %0 = vector.load %arg1[%c0, %c0_0, %c0_1, %c0_2, %c0_3] : memref<1x9x2x9x128xbf16, #tpu.memory_space<vmem>>, vector<1x8x1x8x64xbf16>
    %1 = vector.shape_cast %0 : vector<1x8x1x8x64xbf16> to vector<8x8x64xbf16>
    %c0_4 = arith.constant 0 : index
    %c0_5 = arith.constant 0 : index
    %c0_6 = arith.constant 0 : index
    %c0_7 = arith.constant 0 : index
    %c64 = arith.constant 64 : index
    %2 = vector.load %arg1[%c0_4, %c0_5, %c0_6, %c0_7, %c64] : memref<1x9x2x9x128xbf16, #tpu.memory_space<vmem>>, vector<1x8x1x8x64xbf16>
    %3 = vector.shape_cast %2 : vector<1x8x1x8x64xbf16> to vector<8x8x64xbf16>
    %4 = arith.maximumf %1, %3 : vector<8x8x64xbf16>
    %c0_8 = arith.constant 0 : index
    %c0_9 = arith.constant 0 : index
    %c0_10 = arith.constant 0 : index
    %c1 = arith.constant 1 : index
    %c0_11 = arith.constant 0 : index
    %5 = vector.load %arg1[%c0_8, %c0_9, %c0_10, %c1, %c0_11] : memref<1x9x2x9x128xbf16, #tpu.memory_space<vmem>>, vector<1x8x1x8x64xbf16>
    %6 = vector.shape_cast %5 : vector<1x8x1x8x64xbf16> to vector<8x8x64xbf16>
    %7 = arith.maximumf %4, %6 : vector<8x8x64xbf16>
    %c0_12 = arith.constant 0 : index
    %c0_13 = arith.constant 0 : index
    %c1_14 = arith.constant 1 : index
    %c0_15 = arith.constant 0 : index
    %c0_16 = arith.constant 0 : index
    %8 = vector.load %arg1[%c0_12, %c0_13, %c1_14, %c0_15, %c0_16] : memref<1x9x2x9x128xbf16, #tpu.memory_space<vmem>>, vector<1x8x1x8x64xbf16>
    %9 = vector.shape_cast %8 : vector<1x8x1x8x64xbf16> to vector<8x8x64xbf16>
    %10 = arith.maximumf %7, %9 : vector<8x8x64xbf16>
    %c0_17 = arith.constant 0 : index
    %c0_18 = arith.constant 0 : index
    %c1_19 = arith.constant 1 : index
    %c0_20 = arith.constant 0 : index
    %c64_21 = arith.constant 64 : index
    %11 = vector.load %arg1[%c0_17, %c0_18, %c1_19, %c0_20, %c64_21] : memref<1x9x2x9x128xbf16, #tpu.memory_space<vmem>>, vector<1x8x1x8x64xbf16>
    %12 = vector.shape_cast %11 : vector<1x8x1x8x64xbf16> to vector<8x8x64xbf16>
    %13 = arith.maximumf %10, %12 : vector<8x8x64xbf16>
    %c0_22 = arith.constant 0 : index
    %c0_23 = arith.constant 0 : index
    %c1_24 = arith.constant 1 : index
    %c1_25 = arith.constant 1 : index
    %c0_26 = arith.constant 0 : index
    %14 = vector.load %arg1[%c0_22, %c0_23, %c1_24, %c1_25, %c0_26] : memref<1x9x2x9x128xbf16, #tpu.memory_space<vmem>>, vector<1x8x1x8x64xbf16>
    %15 = vector.shape_cast %14 : vector<1x8x1x8x64xbf16> to vector<8x8x64xbf16>
    %16 = arith.maximumf %13, %15 : vector<8x8x64xbf16>
    %c0_27 = arith.constant 0 : index
    %c1_28 = arith.constant 1 : index
    %c0_29 = arith.constant 0 : index
    %c0_30 = arith.constant 0 : index
    %c0_31 = arith.constant 0 : index
    %17 = vector.load %arg1[%c0_27, %c1_28, %c0_29, %c0_30, %c0_31] : memref<1x9x2x9x128xbf16, #tpu.memory_space<vmem>>, vector<1x8x1x8x64xbf16>
    %18 = vector.shape_cast %17 : vector<1x8x1x8x64xbf16> to vector<8x8x64xbf16>
    %19 = arith.maximumf %16, %18 : vector<8x8x64xbf16>
    %c0_32 = arith.constant 0 : index
    %c1_33 = arith.constant 1 : index
    %c0_34 = arith.constant 0 : index
    %c0_35 = arith.constant 0 : index
    %c64_36 = arith.constant 64 : index
    %20 = vector.load %arg1[%c0_32, %c1_33, %c0_34, %c0_35, %c64_36] : memref<1x9x2x9x128xbf16, #tpu.memory_space<vmem>>, vector<1x8x1x8x64xbf16>
    %21 = vector.shape_cast %20 : vector<1x8x1x8x64xbf16> to vector<8x8x64xbf16>
    %22 = arith.maximumf %19, %21 : vector<8x8x64xbf16>
    %c0_37 = arith.constant 0 : index
    %c1_38 = arith.constant 1 : index
    %c0_39 = arith.constant 0 : index
    %c1_40 = arith.constant 1 : index
    %c0_41 = arith.constant 0 : index
    %23 = vector.load %arg1[%c0_37, %c1_38, %c0_39, %c1_40, %c0_41] : memref<1x9x2x9x128xbf16, #tpu.memory_space<vmem>>, vector<1x8x1x8x64xbf16>
    %24 = vector.shape_cast %23 : vector<1x8x1x8x64xbf16> to vector<8x8x64xbf16>
    %25 = arith.maximumf %22, %24 : vector<8x8x64xbf16>
    %c0_42 = arith.constant 0 : index
    %c0_43 = arith.constant 0 : index
    %c0_44 = arith.constant 0 : index
    %c0_45 = arith.constant 0 : index
    %26 = vector.load %arg2[%c0_42, %c0_43, %c0_44, %c0_45] : memref<1x8x8x64xbf16, #tpu.memory_space<vmem>>, vector<1x8x8x64xbf16>
    %27 = vector.shape_cast %26 : vector<1x8x8x64xbf16> to vector<8x8x64xbf16>
    %28 = vector.shape_cast %25 : vector<8x8x64xbf16> to vector<1x8x8x64xbf16>
    tpu.vector_store %arg2[%c0_42, %c0_43, %c0_44, %c0_45], %28 {strides = array<i32>} : memref<1x8x8x64xbf16, #tpu.memory_space<vmem>>, vector<1x8x8x64xbf16>,
    return
  }
  func.func @transform_0(%arg0: i32) -> (i32, i32, i32, i32, i32) {
    %c0_i32 = arith.constant 0 : i32
    %c0_i32_0 = arith.constant 0 : i32
    %c0_i32_1 = arith.constant 0 : i32
    %c0_i32_2 = arith.constant 0 : i32
    %c0_i32_3 = arith.constant 0 : i32
    return %arg0, %c0_i32, %c0_i32_0, %c0_i32_1, %c0_i32_2 : i32, i32, i32, i32, i32
  }
  func.func @transform_1(%arg0: i32) -> (i32, i32, i32, i32) {
    %c0_i32 = arith.constant 0 : i32
    %c0_i32_0 = arith.constant 0 : i32
    %c0_i32_1 = arith.constant 0 : i32
    %c0_i32_2 = arith.constant 0 : i32
    return %arg0, %c0_i32, %c0_i32_0, %c0_i32_1 : i32, i32, i32, i32
  }
}

module attributes {stable_mosaic.version = 11 : i64} {
  func.func @_mm_kernel(%arg0: i32, %arg1: i32, %arg2: memref<128x64xbf16, #tpu.memory_space<vmem>>, %arg3: memref<64x64xbf16, #tpu.memory_space<vmem>>, %arg4: memref<1x64xf32, #tpu.memory_space<vmem>>, %arg5: memref<128x64xbf16, #tpu.memory_space<vmem>>) attributes {dimension_semantics = [#tpu.dimension_semantics<parallel>, #tpu.dimension_semantics<parallel>], iteration_bounds = array<i64: 1, 1>, scalar_prefetch = 0 : i64, scratch_operands = 0 : i64, tpu.core_type = #tpu.core_type<tc>, window_params = [{transform_indices = @transform_0, window_bounds = array<i64: 128, 64>}, {transform_indices = @transform_1, window_bounds = array<i64: 64, 64>}, {transform_indices = @transform_2, window_bounds = array<i64: 1, 64>}, {transform_indices = @transform_3, window_bounds = array<i64: 128, 64>}]} {
    %c0 = arith.constant 0 : index
    %c0_0 = arith.constant 0 : index
    %0 = vector.load %arg2[%c0, %c0_0] : memref<128x64xbf16, #tpu.memory_space<vmem>>, vector<128x64xbf16>
    %c0_1 = arith.constant 0 : index
    %c0_2 = arith.constant 0 : index
    %1 = vector.load %arg3[%c0_1, %c0_2] : memref<64x64xbf16, #tpu.memory_space<vmem>>, vector<64x64xbf16>
    %cst = arith.constant dense<0.000000e+00> : vector<128x64xf32>
    %2 = tpu.matmul %0, %1, %cst {dimension_numbers = #tpu.dot_dimension_numbers<[1], [0], [0], [1], [0, 0, 1, 1], [], []>} : vector<128x64xbf16>, vector<64x64xbf16>, vector<128x64xf32> -> vector<128x64xf32>
    %c0_3 = arith.constant 0 : index
    %c0_4 = arith.constant 0 : index
    %3 = vector.load %arg4[%c0_3, %c0_4] : memref<1x64xf32, #tpu.memory_space<vmem>>, vector<1x64xf32>
    %4 = vector.broadcast %3 : vector<1x64xf32> to vector<128x64xf32>
    %5 = arith.addf %2, %4 : vector<128x64xf32>
    %cst_5 = arith.constant 0.000000e+00 : f32
    %6 = vector.broadcast %cst_5 : f32 to vector<128x64xf32>
    %7 = arith.maximumf %5, %6 : vector<128x64xf32>
    %8 = arith.truncf %7 : vector<128x64xf32> to vector<128x64xbf16>
    %c0_6 = arith.constant 0 : index
    %c0_7 = arith.constant 0 : index
    %9 = vector.load %arg5[%c0_6, %c0_7] : memref<128x64xbf16, #tpu.memory_space<vmem>>, vector<128x64xbf16>
    tpu.vector_store %arg5[%c0_6, %c0_7], %8 {strides = array<i32>} : memref<128x64xbf16, #tpu.memory_space<vmem>>, vector<128x64xbf16>,
    return
  }
  func.func @transform_0(%arg0: i32, %arg1: i32) -> (i32, i32) {
    %c0_i32 = arith.constant 0 : i32
    %c0_i32_0 = arith.constant 0 : i32
    return %arg0, %c0_i32 : i32, i32
  }
  func.func @transform_1(%arg0: i32, %arg1: i32) -> (i32, i32) {
    %c0_i32 = arith.constant 0 : i32
    %c0_i32_0 = arith.constant 0 : i32
    return %c0_i32, %arg1 : i32, i32
  }
  func.func @transform_2(%arg0: i32, %arg1: i32) -> (i32, i32) {
    %c0_i32 = arith.constant 0 : i32
    %c0_i32_0 = arith.constant 0 : i32
    return %c0_i32, %arg1 : i32, i32
  }
  func.func @transform_3(%arg0: i32, %arg1: i32) -> (i32, i32) {
    %c0_i32 = arith.constant 0 : i32
    return %arg0, %arg1 : i32, i32
  }
}

module attributes {stable_mosaic.version = 11 : i64} {
  func.func @_conv3x3_kernel(%arg0: i32, %arg1: memref<1x10x10x64xbf16, #tpu.memory_space<vmem>>, %arg2: memref<9x64x64xbf16, #tpu.memory_space<vmem>>, %arg3: memref<1x64xf32, #tpu.memory_space<vmem>>, %arg4: memref<1x8x8x64xbf16, #tpu.memory_space<vmem>>) attributes {dimension_semantics = [#tpu.dimension_semantics<parallel>], iteration_bounds = array<i64: 2>, scalar_prefetch = 0 : i64, scratch_operands = 0 : i64, tpu.core_type = #tpu.core_type<tc>, window_params = [{transform_indices = @transform_0, window_bounds = array<i64: 1, 10, 10, 64>}, {pipeline_mode = #tpu.pipeline_mode<synchronous>, transform_indices = @transform_1, window_bounds = array<i64: 9, 64, 64>}, {pipeline_mode = #tpu.pipeline_mode<synchronous>, transform_indices = @transform_2, window_bounds = array<i64: 1, 64>}, {transform_indices = @transform_3, window_bounds = array<i64: 1, 8, 8, 64>}]} {
    %c0 = arith.constant 0 : index
    %c0_0 = arith.constant 0 : index
    %c0_1 = arith.constant 0 : index
    %c0_2 = arith.constant 0 : index
    %0 = vector.load %arg1[%c0, %c0_0, %c0_1, %c0_2] : memref<1x10x10x64xbf16, #tpu.memory_space<vmem>>, vector<1x8x8x64xbf16>
    %1 = vector.shape_cast %0 : vector<1x8x8x64xbf16> to vector<8x8x64xbf16>
    %2 = vector.shape_cast %1 : vector<8x8x64xbf16> to vector<64x64xbf16>
    %c0_3 = arith.constant 0 : index
    %c0_4 = arith.constant 0 : index
    %c0_5 = arith.constant 0 : index
    %3 = vector.load %arg2[%c0_3, %c0_4, %c0_5] : memref<9x64x64xbf16, #tpu.memory_space<vmem>>, vector<1x64x64xbf16>
    %4 = vector.shape_cast %3 : vector<1x64x64xbf16> to vector<64x64xbf16>
    %cst = arith.constant dense<0.000000e+00> : vector<64x64xf32>
    %5 = tpu.matmul %2, %4, %cst {dimension_numbers = #tpu.dot_dimension_numbers<[1], [0], [0], [1], [0, 0, 1, 1], [], []>} : vector<64x64xbf16>, vector<64x64xbf16>, vector<64x64xf32> -> vector<64x64xf32>
    %c0_6 = arith.constant 0 : index
    %c0_7 = arith.constant 0 : index
    %c1 = arith.constant 1 : index
    %c0_8 = arith.constant 0 : index
    %6 = vector.load %arg1[%c0_6, %c0_7, %c1, %c0_8] : memref<1x10x10x64xbf16, #tpu.memory_space<vmem>>, vector<1x8x8x64xbf16>
    %7 = vector.shape_cast %6 : vector<1x8x8x64xbf16> to vector<8x8x64xbf16>
    %8 = vector.shape_cast %7 : vector<8x8x64xbf16> to vector<64x64xbf16>
    %c1_9 = arith.constant 1 : index
    %c0_10 = arith.constant 0 : index
    %c0_11 = arith.constant 0 : index
    %9 = vector.load %arg2[%c1_9, %c0_10, %c0_11] : memref<9x64x64xbf16, #tpu.memory_space<vmem>>, vector<1x64x64xbf16>
    %10 = vector.shape_cast %9 : vector<1x64x64xbf16> to vector<64x64xbf16>
    %cst_12 = arith.constant dense<0.000000e+00> : vector<64x64xf32>
    %11 = tpu.matmul %8, %10, %cst_12 {dimension_numbers = #tpu.dot_dimension_numbers<[1], [0], [0], [1], [0, 0, 1, 1], [], []>} : vector<64x64xbf16>, vector<64x64xbf16>, vector<64x64xf32> -> vector<64x64xf32>
    %12 = arith.addf %5, %11 : vector<64x64xf32>
    %c0_13 = arith.constant 0 : index
    %c0_14 = arith.constant 0 : index
    %c2 = arith.constant 2 : index
    %c0_15 = arith.constant 0 : index
    %13 = vector.load %arg1[%c0_13, %c0_14, %c2, %c0_15] : memref<1x10x10x64xbf16, #tpu.memory_space<vmem>>, vector<1x8x8x64xbf16>
    %14 = vector.shape_cast %13 : vector<1x8x8x64xbf16> to vector<8x8x64xbf16>
    %15 = vector.shape_cast %14 : vector<8x8x64xbf16> to vector<64x64xbf16>
    %c2_16 = arith.constant 2 : index
    %c0_17 = arith.constant 0 : index
    %c0_18 = arith.constant 0 : index
    %16 = vector.load %arg2[%c2_16, %c0_17, %c0_18] : memref<9x64x64xbf16, #tpu.memory_space<vmem>>, vector<1x64x64xbf16>
    %17 = vector.shape_cast %16 : vector<1x64x64xbf16> to vector<64x64xbf16>
    %cst_19 = arith.constant dense<0.000000e+00> : vector<64x64xf32>
    %18 = tpu.matmul %15, %17, %cst_19 {dimension_numbers = #tpu.dot_dimension_numbers<[1], [0], [0], [1], [0, 0, 1, 1], [], []>} : vector<64x64xbf16>, vector<64x64xbf16>, vector<64x64xf32> -> vector<64x64xf32>
    %19 = arith.addf %12, %18 : vector<64x64xf32>
    %c0_20 = arith.constant 0 : index
    %c1_21 = arith.constant 1 : index
    %c0_22 = arith.constant 0 : index
    %c0_23 = arith.constant 0 : index
    %20 = vector.load %arg1[%c0_20, %c1_21, %c0_22, %c0_23] : memref<1x10x10x64xbf16, #tpu.memory_space<vmem>>, vector<1x8x8x64xbf16>
    %21 = vector.shape_cast %20 : vector<1x8x8x64xbf16> to vector<8x8x64xbf16>
    %22 = vector.shape_cast %21 : vector<8x8x64xbf16> to vector<64x64xbf16>
    %c3 = arith.constant 3 : index
    %c0_24 = arith.constant 0 : index
    %c0_25 = arith.constant 0 : index
    %23 = vector.load %arg2[%c3, %c0_24, %c0_25] : memref<9x64x64xbf16, #tpu.memory_space<vmem>>, vector<1x64x64xbf16>
    %24 = vector.shape_cast %23 : vector<1x64x64xbf16> to vector<64x64xbf16>
    %cst_26 = arith.constant dense<0.000000e+00> : vector<64x64xf32>
    %25 = tpu.matmul %22, %24, %cst_26 {dimension_numbers = #tpu.dot_dimension_numbers<[1], [0], [0], [1], [0, 0, 1, 1], [], []>} : vector<64x64xbf16>, vector<64x64xbf16>, vector<64x64xf32> -> vector<64x64xf32>
    %26 = arith.addf %19, %25 : vector<64x64xf32>
    %c0_27 = arith.constant 0 : index
    %c1_28 = arith.constant 1 : index
    %c1_29 = arith.constant 1 : index
    %c0_30 = arith.constant 0 : index
    %27 = vector.load %arg1[%c0_27, %c1_28, %c1_29, %c0_30] : memref<1x10x10x64xbf16, #tpu.memory_space<vmem>>, vector<1x8x8x64xbf16>
    %28 = vector.shape_cast %27 : vector<1x8x8x64xbf16> to vector<8x8x64xbf16>
    %29 = vector.shape_cast %28 : vector<8x8x64xbf16> to vector<64x64xbf16>
    %c4 = arith.constant 4 : index
    %c0_31 = arith.constant 0 : index
    %c0_32 = arith.constant 0 : index
    %30 = vector.load %arg2[%c4, %c0_31, %c0_32] : memref<9x64x64xbf16, #tpu.memory_space<vmem>>, vector<1x64x64xbf16>
    %31 = vector.shape_cast %30 : vector<1x64x64xbf16> to vector<64x64xbf16>
    %cst_33 = arith.constant dense<0.000000e+00> : vector<64x64xf32>
    %32 = tpu.matmul %29, %31, %cst_33 {dimension_numbers = #tpu.dot_dimension_numbers<[1], [0], [0], [1], [0, 0, 1, 1], [], []>} : vector<64x64xbf16>, vector<64x64xbf16>, vector<64x64xf32> -> vector<64x64xf32>
    %33 = arith.addf %26, %32 : vector<64x64xf32>
    %c0_34 = arith.constant 0 : index
    %c1_35 = arith.constant 1 : index
    %c2_36 = arith.constant 2 : index
    %c0_37 = arith.constant 0 : index
    %34 = vector.load %arg1[%c0_34, %c1_35, %c2_36, %c0_37] : memref<1x10x10x64xbf16, #tpu.memory_space<vmem>>, vector<1x8x8x64xbf16>
    %35 = vector.shape_cast %34 : vector<1x8x8x64xbf16> to vector<8x8x64xbf16>
    %36 = vector.shape_cast %35 : vector<8x8x64xbf16> to vector<64x64xbf16>
    %c5 = arith.constant 5 : index
    %c0_38 = arith.constant 0 : index
    %c0_39 = arith.constant 0 : index
    %37 = vector.load %arg2[%c5, %c0_38, %c0_39] : memref<9x64x64xbf16, #tpu.memory_space<vmem>>, vector<1x64x64xbf16>
    %38 = vector.shape_cast %37 : vector<1x64x64xbf16> to vector<64x64xbf16>
    %cst_40 = arith.constant dense<0.000000e+00> : vector<64x64xf32>
    %39 = tpu.matmul %36, %38, %cst_40 {dimension_numbers = #tpu.dot_dimension_numbers<[1], [0], [0], [1], [0, 0, 1, 1], [], []>} : vector<64x64xbf16>, vector<64x64xbf16>, vector<64x64xf32> -> vector<64x64xf32>
    %40 = arith.addf %33, %39 : vector<64x64xf32>
    %c0_41 = arith.constant 0 : index
    %c2_42 = arith.constant 2 : index
    %c0_43 = arith.constant 0 : index
    %c0_44 = arith.constant 0 : index
    %41 = vector.load %arg1[%c0_41, %c2_42, %c0_43, %c0_44] : memref<1x10x10x64xbf16, #tpu.memory_space<vmem>>, vector<1x8x8x64xbf16>
    %42 = vector.shape_cast %41 : vector<1x8x8x64xbf16> to vector<8x8x64xbf16>
    %43 = vector.shape_cast %42 : vector<8x8x64xbf16> to vector<64x64xbf16>
    %c6 = arith.constant 6 : index
    %c0_45 = arith.constant 0 : index
    %c0_46 = arith.constant 0 : index
    %44 = vector.load %arg2[%c6, %c0_45, %c0_46] : memref<9x64x64xbf16, #tpu.memory_space<vmem>>, vector<1x64x64xbf16>
    %45 = vector.shape_cast %44 : vector<1x64x64xbf16> to vector<64x64xbf16>
    %cst_47 = arith.constant dense<0.000000e+00> : vector<64x64xf32>
    %46 = tpu.matmul %43, %45, %cst_47 {dimension_numbers = #tpu.dot_dimension_numbers<[1], [0], [0], [1], [0, 0, 1, 1], [], []>} : vector<64x64xbf16>, vector<64x64xbf16>, vector<64x64xf32> -> vector<64x64xf32>
    %47 = arith.addf %40, %46 : vector<64x64xf32>
    %c0_48 = arith.constant 0 : index
    %c2_49 = arith.constant 2 : index
    %c1_50 = arith.constant 1 : index
    %c0_51 = arith.constant 0 : index
    %48 = vector.load %arg1[%c0_48, %c2_49, %c1_50, %c0_51] : memref<1x10x10x64xbf16, #tpu.memory_space<vmem>>, vector<1x8x8x64xbf16>
    %49 = vector.shape_cast %48 : vector<1x8x8x64xbf16> to vector<8x8x64xbf16>
    %50 = vector.shape_cast %49 : vector<8x8x64xbf16> to vector<64x64xbf16>
    %c7 = arith.constant 7 : index
    %c0_52 = arith.constant 0 : index
    %c0_53 = arith.constant 0 : index
    %51 = vector.load %arg2[%c7, %c0_52, %c0_53] : memref<9x64x64xbf16, #tpu.memory_space<vmem>>, vector<1x64x64xbf16>
    %52 = vector.shape_cast %51 : vector<1x64x64xbf16> to vector<64x64xbf16>
    %cst_54 = arith.constant dense<0.000000e+00> : vector<64x64xf32>
    %53 = tpu.matmul %50, %52, %cst_54 {dimension_numbers = #tpu.dot_dimension_numbers<[1], [0], [0], [1], [0, 0, 1, 1], [], []>} : vector<64x64xbf16>, vector<64x64xbf16>, vector<64x64xf32> -> vector<64x64xf32>
    %54 = arith.addf %47, %53 : vector<64x64xf32>
    %c0_55 = arith.constant 0 : index
    %c2_56 = arith.constant 2 : index
    %c2_57 = arith.constant 2 : index
    %c0_58 = arith.constant 0 : index
    %55 = vector.load %arg1[%c0_55, %c2_56, %c2_57, %c0_58] : memref<1x10x10x64xbf16, #tpu.memory_space<vmem>>, vector<1x8x8x64xbf16>
    %56 = vector.shape_cast %55 : vector<1x8x8x64xbf16> to vector<8x8x64xbf16>
    %57 = vector.shape_cast %56 : vector<8x8x64xbf16> to vector<64x64xbf16>
    %c8 = arith.constant 8 : index
    %c0_59 = arith.constant 0 : index
    %c0_60 = arith.constant 0 : index
    %58 = vector.load %arg2[%c8, %c0_59, %c0_60] : memref<9x64x64xbf16, #tpu.memory_space<vmem>>, vector<1x64x64xbf16>
    %59 = vector.shape_cast %58 : vector<1x64x64xbf16> to vector<64x64xbf16>
    %cst_61 = arith.constant dense<0.000000e+00> : vector<64x64xf32>
    %60 = tpu.matmul %57, %59, %cst_61 {dimension_numbers = #tpu.dot_dimension_numbers<[1], [0], [0], [1], [0, 0, 1, 1], [], []>} : vector<64x64xbf16>, vector<64x64xbf16>, vector<64x64xf32> -> vector<64x64xf32>
    %61 = arith.addf %54, %60 : vector<64x64xf32>
    %c0_62 = arith.constant 0 : index
    %c0_63 = arith.constant 0 : index
    %62 = vector.load %arg3[%c0_62, %c0_63] : memref<1x64xf32, #tpu.memory_space<vmem>>, vector<1x64xf32>
    %63 = vector.broadcast %62 : vector<1x64xf32> to vector<64x64xf32>
    %64 = arith.addf %61, %63 : vector<64x64xf32>
    %cst_64 = arith.constant 0.000000e+00 : f32
    %65 = vector.broadcast %cst_64 : f32 to vector<64x64xf32>
    %66 = arith.maximumf %64, %65 : vector<64x64xf32>
    %67 = vector.shape_cast %66 : vector<64x64xf32> to vector<1x8x8x64xf32>
    %68 = arith.truncf %67 : vector<1x8x8x64xf32> to vector<1x8x8x64xbf16>
    %c0_65 = arith.constant 0 : index
    %c0_66 = arith.constant 0 : index
    %c0_67 = arith.constant 0 : index
    %c0_68 = arith.constant 0 : index
    %69 = vector.load %arg4[%c0_65, %c0_66, %c0_67, %c0_68] : memref<1x8x8x64xbf16, #tpu.memory_space<vmem>>, vector<1x8x8x64xbf16>
    tpu.vector_store %arg4[%c0_65, %c0_66, %c0_67, %c0_68], %68 {strides = array<i32>} : memref<1x8x8x64xbf16, #tpu.memory_space<vmem>>, vector<1x8x8x64xbf16>,
    return
  }
  func.func @transform_0(%arg0: i32) -> (i32, i32, i32, i32) {
    %c0_i32 = arith.constant 0 : i32
    %c0_i32_0 = arith.constant 0 : i32
    %c0_i32_1 = arith.constant 0 : i32
    %c0_i32_2 = arith.constant 0 : i32
    return %arg0, %c0_i32, %c0_i32_0, %c0_i32_1 : i32, i32, i32, i32
  }
  func.func @transform_1(%arg0: i32) -> (i32, i32, i32) {
    %c0_i32 = arith.constant 0 : i32
    %c0_i32_0 = arith.constant 0 : i32
    %c0_i32_1 = arith.constant 0 : i32
    %c0_i32_2 = arith.constant 0 : i32
    return %c0_i32, %c0_i32_0, %c0_i32_1 : i32, i32, i32
  }
  func.func @transform_2(%arg0: i32) -> (i32, i32) {
    %c0_i32 = arith.constant 0 : i32
    %c0_i32_0 = arith.constant 0 : i32
    %c0_i32_1 = arith.constant 0 : i32
    return %c0_i32, %c0_i32_0 : i32, i32
  }
  func.func @transform_3(%arg0: i32) -> (i32, i32, i32, i32) {
    %c0_i32 = arith.constant 0 : i32
    %c0_i32_0 = arith.constant 0 : i32
    %c0_i32_1 = arith.constant 0 : i32
    %c0_i32_2 = arith.constant 0 : i32
    return %arg0, %c0_i32, %c0_i32_0, %c0_i32_1 : i32, i32, i32, i32
  }
}

module attributes {stable_mosaic.version = 11 : i64} {
  func.func @_mm_kernel(%arg0: i32, %arg1: i32, %arg2: memref<128x64xbf16, #tpu.memory_space<vmem>>, %arg3: memref<64x256xbf16, #tpu.memory_space<vmem>>, %arg4: memref<1x256xf32, #tpu.memory_space<vmem>>, %arg5: memref<128x256xbf16, #tpu.memory_space<vmem>>) attributes {dimension_semantics = [#tpu.dimension_semantics<parallel>, #tpu.dimension_semantics<parallel>], iteration_bounds = array<i64: 1, 1>, scalar_prefetch = 0 : i64, scratch_operands = 0 : i64, tpu.core_type = #tpu.core_type<tc>, window_params = [{transform_indices = @transform_0, window_bounds = array<i64: 128, 64>}, {transform_indices = @transform_1, window_bounds = array<i64: 64, 256>}, {transform_indices = @transform_2, window_bounds = array<i64: 1, 256>}, {transform_indices = @transform_3, window_bounds = array<i64: 128, 256>}]} {
    %c0 = arith.constant 0 : index
    %c0_0 = arith.constant 0 : index
    %0 = vector.load %arg2[%c0, %c0_0] : memref<128x64xbf16, #tpu.memory_space<vmem>>, vector<128x64xbf16>
    %c0_1 = arith.constant 0 : index
    %c0_2 = arith.constant 0 : index
    %1 = vector.load %arg3[%c0_1, %c0_2] : memref<64x256xbf16, #tpu.memory_space<vmem>>, vector<64x256xbf16>
    %cst = arith.constant dense<0.000000e+00> : vector<128x256xf32>
    %2 = tpu.matmul %0, %1, %cst {dimension_numbers = #tpu.dot_dimension_numbers<[1], [0], [0], [1], [0, 0, 1, 1], [], []>} : vector<128x64xbf16>, vector<64x256xbf16>, vector<128x256xf32> -> vector<128x256xf32>
    %c0_3 = arith.constant 0 : index
    %c0_4 = arith.constant 0 : index
    %3 = vector.load %arg4[%c0_3, %c0_4] : memref<1x256xf32, #tpu.memory_space<vmem>>, vector<1x256xf32>
    %4 = vector.broadcast %3 : vector<1x256xf32> to vector<128x256xf32>
    %5 = arith.addf %2, %4 : vector<128x256xf32>
    %6 = arith.truncf %5 : vector<128x256xf32> to vector<128x256xbf16>
    %c0_5 = arith.constant 0 : index
    %c0_6 = arith.constant 0 : index
    %7 = vector.load %arg5[%c0_5, %c0_6] : memref<128x256xbf16, #tpu.memory_space<vmem>>, vector<128x256xbf16>
    tpu.vector_store %arg5[%c0_5, %c0_6], %6 {strides = array<i32>} : memref<128x256xbf16, #tpu.memory_space<vmem>>, vector<128x256xbf16>,
    return
  }
  func.func @transform_0(%arg0: i32, %arg1: i32) -> (i32, i32) {
    %c0_i32 = arith.constant 0 : i32
    %c0_i32_0 = arith.constant 0 : i32
    return %arg0, %c0_i32 : i32, i32
  }
  func.func @transform_1(%arg0: i32, %arg1: i32) -> (i32, i32) {
    %c0_i32 = arith.constant 0 : i32
    %c0_i32_0 = arith.constant 0 : i32
    return %c0_i32, %arg1 : i32, i32
  }
  func.func @transform_2(%arg0: i32, %arg1: i32) -> (i32, i32) {
    %c0_i32 = arith.constant 0 : i32
    %c0_i32_0 = arith.constant 0 : i32
    return %c0_i32, %arg1 : i32, i32
  }
  func.func @transform_3(%arg0: i32, %arg1: i32) -> (i32, i32) {
    %c0_i32 = arith.constant 0 : i32
    return %arg0, %arg1 : i32, i32
  }
}

module attributes {stable_mosaic.version = 11 : i64} {
  func.func @_mm_kernel(%arg0: i32, %arg1: i32, %arg2: memref<128x256xbf16, #tpu.memory_space<vmem>>, %arg3: memref<256x64xbf16, #tpu.memory_space<vmem>>, %arg4: memref<1x64xf32, #tpu.memory_space<vmem>>, %arg5: memref<128x64xbf16, #tpu.memory_space<vmem>>) attributes {dimension_semantics = [#tpu.dimension_semantics<parallel>, #tpu.dimension_semantics<parallel>], iteration_bounds = array<i64: 1, 1>, scalar_prefetch = 0 : i64, scratch_operands = 0 : i64, tpu.core_type = #tpu.core_type<tc>, window_params = [{transform_indices = @transform_0, window_bounds = array<i64: 128, 256>}, {transform_indices = @transform_1, window_bounds = array<i64: 256, 64>}, {transform_indices = @transform_2, window_bounds = array<i64: 1, 64>}, {transform_indices = @transform_3, window_bounds = array<i64: 128, 64>}]} {
    %c0 = arith.constant 0 : index
    %c0_0 = arith.constant 0 : index
    %0 = vector.load %arg2[%c0, %c0_0] : memref<128x256xbf16, #tpu.memory_space<vmem>>, vector<128x256xbf16>
    %c0_1 = arith.constant 0 : index
    %c0_2 = arith.constant 0 : index
    %1 = vector.load %arg3[%c0_1, %c0_2] : memref<256x64xbf16, #tpu.memory_space<vmem>>, vector<256x64xbf16>
    %cst = arith.constant dense<0.000000e+00> : vector<128x64xf32>
    %2 = tpu.matmul %0, %1, %cst {dimension_numbers = #tpu.dot_dimension_numbers<[1], [0], [0], [1], [0, 0, 1, 1], [], []>} : vector<128x256xbf16>, vector<256x64xbf16>, vector<128x64xf32> -> vector<128x64xf32>
    %c0_3 = arith.constant 0 : index
    %c0_4 = arith.constant 0 : index
    %3 = vector.load %arg4[%c0_3, %c0_4] : memref<1x64xf32, #tpu.memory_space<vmem>>, vector<1x64xf32>
    %4 = vector.broadcast %3 : vector<1x64xf32> to vector<128x64xf32>
    %5 = arith.addf %2, %4 : vector<128x64xf32>
    %cst_5 = arith.constant 0.000000e+00 : f32
    %6 = vector.broadcast %cst_5 : f32 to vector<128x64xf32>
    %7 = arith.maximumf %5, %6 : vector<128x64xf32>
    %8 = arith.truncf %7 : vector<128x64xf32> to vector<128x64xbf16>
    %c0_6 = arith.constant 0 : index
    %c0_7 = arith.constant 0 : index
    %9 = vector.load %arg5[%c0_6, %c0_7] : memref<128x64xbf16, #tpu.memory_space<vmem>>, vector<128x64xbf16>
    tpu.vector_store %arg5[%c0_6, %c0_7], %8 {strides = array<i32>} : memref<128x64xbf16, #tpu.memory_space<vmem>>, vector<128x64xbf16>,
    return
  }
  func.func @transform_0(%arg0: i32, %arg1: i32) -> (i32, i32) {
    %c0_i32 = arith.constant 0 : i32
    %c0_i32_0 = arith.constant 0 : i32
    return %arg0, %c0_i32 : i32, i32
  }
  func.func @transform_1(%arg0: i32, %arg1: i32) -> (i32, i32) {
    %c0_i32 = arith.constant 0 : i32
    %c0_i32_0 = arith.constant 0 : i32
    return %c0_i32, %arg1 : i32, i32
  }
  func.func @transform_2(%arg0: i32, %arg1: i32) -> (i32, i32) {
    %c0_i32 = arith.constant 0 : i32
    %c0_i32_0 = arith.constant 0 : i32
    return %c0_i32, %arg1 : i32, i32
  }
  func.func @transform_3(%arg0: i32, %arg1: i32) -> (i32, i32) {
    %c0_i32 = arith.constant 0 : i32
    return %arg0, %arg1 : i32, i32
  }
}

module attributes {stable_mosaic.version = 11 : i64} {
  func.func @_mm_kernel(%arg0: i32, %arg1: i32, %arg2: memref<128x64xbf16, #tpu.memory_space<vmem>>, %arg3: memref<64x256xbf16, #tpu.memory_space<vmem>>, %arg4: memref<1x256xf32, #tpu.memory_space<vmem>>, %arg5: memref<128x256xbf16, #tpu.memory_space<vmem>>, %arg6: memref<128x256xbf16, #tpu.memory_space<vmem>>) attributes {dimension_semantics = [#tpu.dimension_semantics<parallel>, #tpu.dimension_semantics<parallel>], iteration_bounds = array<i64: 1, 1>, scalar_prefetch = 0 : i64, scratch_operands = 0 : i64, tpu.core_type = #tpu.core_type<tc>, window_params = [{transform_indices = @transform_0, window_bounds = array<i64: 128, 64>}, {transform_indices = @transform_1, window_bounds = array<i64: 64, 256>}, {transform_indices = @transform_2, window_bounds = array<i64: 1, 256>}, {transform_indices = @transform_3, window_bounds = array<i64: 128, 256>}, {transform_indices = @transform_4, window_bounds = array<i64: 128, 256>}]} {
    %c0 = arith.constant 0 : index
    %c0_0 = arith.constant 0 : index
    %0 = vector.load %arg2[%c0, %c0_0] : memref<128x64xbf16, #tpu.memory_space<vmem>>, vector<128x64xbf16>
    %c0_1 = arith.constant 0 : index
    %c0_2 = arith.constant 0 : index
    %1 = vector.load %arg3[%c0_1, %c0_2] : memref<64x256xbf16, #tpu.memory_space<vmem>>, vector<64x256xbf16>
    %cst = arith.constant dense<0.000000e+00> : vector<128x256xf32>
    %2 = tpu.matmul %0, %1, %cst {dimension_numbers = #tpu.dot_dimension_numbers<[1], [0], [0], [1], [0, 0, 1, 1], [], []>} : vector<128x64xbf16>, vector<64x256xbf16>, vector<128x256xf32> -> vector<128x256xf32>
    %c0_3 = arith.constant 0 : index
    %c0_4 = arith.constant 0 : index
    %3 = vector.load %arg4[%c0_3, %c0_4] : memref<1x256xf32, #tpu.memory_space<vmem>>, vector<1x256xf32>
    %4 = vector.broadcast %3 : vector<1x256xf32> to vector<128x256xf32>
    %5 = arith.addf %2, %4 : vector<128x256xf32>
    %c0_5 = arith.constant 0 : index
    %c0_6 = arith.constant 0 : index
    %6 = vector.load %arg5[%c0_5, %c0_6] : memref<128x256xbf16, #tpu.memory_space<vmem>>, vector<128x256xbf16>
    %7 = arith.extf %6 : vector<128x256xbf16> to vector<128x256xf32>
    %8 = arith.addf %5, %7 : vector<128x256xf32>
    %cst_7 = arith.constant 0.000000e+00 : f32
    %9 = vector.broadcast %cst_7 : f32 to vector<128x256xf32>
    %10 = arith.maximumf %8, %9 : vector<128x256xf32>
    %11 = arith.truncf %10 : vector<128x256xf32> to vector<128x256xbf16>
    %c0_8 = arith.constant 0 : index
    %c0_9 = arith.constant 0 : index
    %12 = vector.load %arg6[%c0_8, %c0_9] : memref<128x256xbf16, #tpu.memory_space<vmem>>, vector<128x256xbf16>
    tpu.vector_store %arg6[%c0_8, %c0_9], %11 {strides = array<i32>} : memref<128x256xbf16, #tpu.memory_space<vmem>>, vector<128x256xbf16>,
    return
  }
  func.func @transform_0(%arg0: i32, %arg1: i32) -> (i32, i32) {
    %c0_i32 = arith.constant 0 : i32
    %c0_i32_0 = arith.constant 0 : i32
    return %arg0, %c0_i32 : i32, i32
  }
  func.func @transform_1(%arg0: i32, %arg1: i32) -> (i32, i32) {
    %c0_i32 = arith.constant 0 : i32
    %c0_i32_0 = arith.constant 0 : i32
    return %c0_i32, %arg1 : i32, i32
  }
  func.func @transform_2(%arg0: i32, %arg1: i32) -> (i32, i32) {
    %c0_i32 = arith.constant 0 : i32
    %c0_i32_0 = arith.constant 0 : i32
    return %c0_i32, %arg1 : i32, i32
  }
  func.func @transform_3(%arg0: i32, %arg1: i32) -> (i32, i32) {
    %c0_i32 = arith.constant 0 : i32
    return %arg0, %arg1 : i32, i32
  }
  func.func @transform_4(%arg0: i32, %arg1: i32) -> (i32, i32) {
    %c0_i32 = arith.constant 0 : i32
    return %arg0, %arg1 : i32, i32
  }
}

</mosaic_0001>

<llo_original>
// kernel: resnet101_encoder_share.13
$region0: #{resnet101_encoder_share.13}
  #allocation0 [shape = 'u32[]', space=smem, size = 0x4, offset = 0x4, fixed_abs, tag = 'smem constant byte address 0x4 - core index']
  #allocation1 [shape = 'u32[72,128]{1,0:T(1,128)}', space=vmem, size = 0x9000, scoped, tag = 'internal scratch']
  %s0 = inlined_call_operand.vmem [shape: bf16[2,9,2,9,128], index: 0, kind: input, shape index: {}]
  %s1 = inlined_call_operand.vmem [shape: bf16[2,8,8,64], index: 1, kind: output, shape index: {}]
  %s2 = sld [smem:[#allocation0]]
  $region37: #{resnet101_encoder_share.13} parent=0
    _
  %s4 = ssub.s32 1, %s2
  %s5 = scalar_select 0, %s4, %s2
  loop: start=0, step=1, limit=4
  $region2: #{resnet101_encoder_share.13} parent=0 // loop_pre_header
    _
  $region3: #{resnet101_encoder_share.13} parent=0 // loop_header
    %s7 = sphi 0, %s11
    %p8 = scmp.ge.s32.totalorder %s7, 4
    %s17 = sphi 0, %s19
    %s20 = sphi 0, %s17
    %s21 = sphi 0, %s20
    %s37 = sphi 0, %s21
    %s43 = sphi 0, %s45
    %s46 = sphi 0, %s43
    %s47 = sphi 0, %s46
    %s63 = sphi 0, %s47
  $region4: #{resnet101_encoder_share.13} parent=0 // loop_header_branch
    %10 = sbr.rel (%p8) target = $region8
  $region5: #{resnet101_encoder_share.13} parent=0 // loop_body
    %s12 = ssub.s32 %s7, 1
    %s13 = ssub.s32 %s7, 2
    %s14 = sadd.s32 %s7, 1
    %s15 = ssub.s32 %s7, %s14
    %p16 = scmp.eq.s32.totalorder %s15, 0
    %s18 = sadd.s32 %s17, 1
    %s19 = scalar_select %p16, %s17, %s18
    %p22 = pneg %p16
    %p23 = scmp.eq.s32.totalorder %s7, 1
    %p24 = por %p22, %p23
    %p25 = scmp.ne.s32.totalorder %s17, %s20
    %p26 = scmp.eq.s32.totalorder %s7, 0
    %p27 = por %p25, %p26
    %p28 = scmp.ne.s32.totalorder %s17, %s20
    %p29 = scmp.eq.s32.totalorder %s12, 1
    %p30 = por %p28, %p29
    %p31 = scmp.ne.s32.totalorder %s20, %s21
    %p32 = scmp.eq.s32.totalorder %s12, 0
    %p33 = por %p31, %p32
    %p34 = scmp.ne.s32.totalorder %s20, %s21
    %p35 = scmp.eq.s32.totalorder %s13, 1
    %p36 = por %p34, %p35
    %p38 = scmp.ne.s32.totalorder %s21, %s37
    %p39 = scmp.eq.s32.totalorder %s13, 0
    %p40 = por %p38, %p39
    %s41 = ssub.s32 %s7, %s14
    %p42 = scmp.eq.s32.totalorder %s41, 0
    %s44 = sadd.s32 %s43, 1
    %s45 = scalar_select %p42, %s43, %s44
    %p48 = pneg %p42
    %p49 = scmp.eq.s32.totalorder %s7, 1
    %p50 = por %p48, %p49
    %p51 = scmp.ne.s32.totalorder %s43, %s46
    %p52 = scmp.eq.s32.totalorder %s7, 0
    %p53 = por %p51, %p52
    %p54 = scmp.ne.s32.totalorder %s43, %s46
    %p55 = scmp.eq.s32.totalorder %s12, 1
    %p56 = por %p54, %p55
    %p57 = scmp.ne.s32.totalorder %s46, %s47
    %p58 = scmp.eq.s32.totalorder %s12, 0
    %p59 = por %p57, %p58
    %p60 = scmp.ne.s32.totalorder %s46, %s47
    %p61 = scmp.eq.s32.totalorder %s13, 1
    %p62 = por %p60, %p61
    %p64 = scmp.ne.s32.totalorder %s47, %s63
    %p65 = scmp.eq.s32.totalorder %s13, 0
    %p66 = por %p64, %p65
    %p67 = scmp.le.s32.totalorder 1, %s7
    %p68 = scmp.lt.s32.totalorder %s7, 3
    %p69 = pnand %p67, %p68
    %p70 = pneg %p69
    // Predicated region
    $region9: #{resnet101_encoder_share.13} parent=5 // pred_check
      _
    $region10: #{resnet101_encoder_share.13} parent=5 // pred_check_branch
      %72 = sbr.rel (%p69) target = $region12
    $region11: #{resnet101_encoder_share.13} parent=5 // pred_region
      %s73 = ssub.s32 %s7, 1
    $region12: #{resnet101_encoder_share.13} parent=5 // pred_fallthru
      _
    %p74 = scmp.lt.s32.totalorder %s7, 2
    // Predicated region
    $region13: #{resnet101_encoder_share.13} parent=5 // pred_check
      %p75 = pneg %p74
    $region14: #{resnet101_encoder_share.13} parent=5 // pred_check_branch
      %77 = sbr.rel (%p75) target = $region16
    $region15: #{resnet101_encoder_share.13} parent=5 // pred_region
      // Predicated region
      $region17: #{resnet101_encoder_share.13} parent=15 // pred_check
        %p78 = pneg %p27
      $region18: #{resnet101_encoder_share.13} parent=15 // pred_check_branch
        %80 = sbr.rel (%p78) target = $region20
      $region19: #{resnet101_encoder_share.13} parent=15 // pred_region
        %p81 = scmp.lt.s32.totalorder %s7, 1
        %s82 = scalar_select %p81, %s7, 1
        %s83 = smul.addr %s82, 36
        %s84 = smul.addr %s83, 4
        %s85 = scalar_lea.vmem %s0, %s84
      $region20: #{resnet101_encoder_share.13} parent=15 // pred_fallthru
        _
    $region16: #{resnet101_encoder_share.13} parent=5 // pred_fallthru
      _
    %p86 = scmp.le.s32.totalorder 1, %s7
    %p87 = scmp.lt.s32.totalorder %s7, 3
    %p88 = pnand %p86, %p87
    %p89 = pneg %p88
    // Predicated region
    $region21: #{resnet101_encoder_share.13} parent=5 // pred_check
      _
    $region22: #{resnet101_encoder_share.13} parent=5 // pred_check_branch
      %91 = sbr.rel (%p88) target = $region24
    $region23: #{resnet101_encoder_share.13} parent=5 // pred_region
      %s92 = ssub.s32 %s7, 1
      %p93 = scmp.lt.s32.totalorder %s12, 1
      %s94 = scalar_select %p93, %s12, 1
      %s95 = smul.addr %s94, 36
      %s96 = smul.addr %s95, 4
      %s97 = scalar_lea.vmem %s0, %s96
      %p98 = pneg %p33
      %p99 = pneg %p30
      %p100 = pneg %p59
      %p101 = pneg %p56
      %p102 = scmp.lt.s32.totalorder %s12, 1
      %s103 = scalar_select %p102, %s12, 1
      %s104 = smul.addr %s103, 8
      %s105 = smul.addr %s104, 4
      %s106 = scalar_lea.vmem %s1, %s105
      %p107 = scmp.lt.s32.totalorder %s12, 1
      %s108 = scalar_select %p107, %s12, 1
      %s109 = smul.addr %s108, 36
      %s110 = smul.addr %s109, 4
      %s111 = scalar_lea.vmem %s0, %s110
      %p112 = scmp.lt.s32.totalorder %s12, 1
      %s113 = scalar_select %p112, %s12, 1
      %s114 = smul.addr %s113, 8
      %s115 = smul.addr %s114, 4
      %s116 = scalar_lea.vmem %s1, %s115
      %v117 = vld [vmem:[%s111] sm:$0xf]
      %v118 = vld [vmem:[%s111 + $0x10] sm:$0xf]
      %v119 = vld [vmem:[%s111 + $0x20] sm:$0xf]
      %v120 = vld [vmem:[%s111 + $0x30] sm:$0xf]
      %v121 = vld [vmem:[%s111 + $0x40] sm:$0xf]
      %v122 = vld [vmem:[%s111 + $0x50] sm:$0xf]
      %v123 = vld [vmem:[%s111 + $0x60] sm:$0xf]
      %v124 = vld [vmem:[%s111 + $0x70] sm:$0xf]
      %v125 = vunpack.c.l.bf16 %v117
      %v126 = vunpack.c.l.bf16 %v118
      %v127 = vunpack.c.l.bf16 %v119
      %v128 = vunpack.c.l.bf16 %v120
      %v129 = vunpack.c.l.bf16 %v121
      %v130 = vunpack.c.l.bf16 %v122
      %v131 = vunpack.c.l.bf16 %v123
      %v132 = vunpack.c.l.bf16 %v124
      %141 = vrot.lane.b32.xlu0 %v125, 64
      %v142 = vpop.permute.xlu0 %141
      %143 = vrot.lane.b32.xlu0 %v126, 64
      %v144 = vpop.permute.xlu0 %143
      %145 = vrot.lane.b32.xlu0 %v127, 64
      %v146 = vpop.permute.xlu0 %145
      %147 = vrot.lane.b32.xlu0 %v128, 64
      %v148 = vpop.permute.xlu0 %147
      %149 = vrot.lane.b32.xlu0 %v129, 64
      %v150 = vpop.permute.xlu0 %149
      %151 = vrot.lane.b32.xlu0 %v130, 64
      %v152 = vpop.permute.xlu0 %151
      %153 = vrot.lane.b32.xlu0 %v131, 64
      %v154 = vpop.permute.xlu0 %153
      %155 = vrot.lane.b32.xlu0 %v132, 64
      %v156 = vpop.permute.xlu0 %155
      %v165 = vmax.f32 %v125, %v142
      %v166 = vmax.f32 %v126, %v144
      %v167 = vmax.f32 %v127, %v146
      %v168 = vmax.f32 %v128, %v148
      %v169 = vmax.f32 %v129, %v150
      %v170 = vmax.f32 %v130, %v152
      %v171 = vmax.f32 %v131, %v154
      %v172 = vmax.f32 %v132, %v156
      %v173 = vpack.c.bf16 %v165, %v165
      %v174 = vpack.c.bf16 %v166, %v166
      %v175 = vpack.c.bf16 %v167, %v167
      %v176 = vpack.c.bf16 %v168, %v168
      %v177 = vpack.c.bf16 %v169, %v169
      %v178 = vpack.c.bf16 %v170, %v170
      %v179 = vpack.c.bf16 %v171, %v171
      %v180 = vpack.c.bf16 %v172, %v172
      %v181 = vld [vmem:[%s111 + $0x4] sm:$0x1]
      %v182 = vld [vmem:[%s111 + $0x14] sm:$0x1]
      %v183 = vld [vmem:[%s111 + $0x24] sm:$0x1]
      %v184 = vld [vmem:[%s111 + $0x34] sm:$0x1]
      %v185 = vld [vmem:[%s111 + $0x44] sm:$0x1]
      %v186 = vld [vmem:[%s111 + $0x54] sm:$0x1]
      %v187 = vld [vmem:[%s111 + $0x64] sm:$0x1]
      %v188 = vld [vmem:[%s111 + $0x74] sm:$0x1]
      %v189 = vunpack.c.l.bf16 %v173
      %v190 = vunpack.c.l.bf16 %v174
      %v191 = vunpack.c.l.bf16 %v175
      %v192 = vunpack.c.l.bf16 %v176
      %v193 = vunpack.c.l.bf16 %v177
      %v194 = vunpack.c.l.bf16 %v178
      %v195 = vunpack.c.l.bf16 %v179
      %v196 = vunpack.c.l.bf16 %v180
      %v197 = vunpack.c.l.bf16 %v181
      %v198 = vunpack.c.l.bf16 %v182
      %v199 = vunpack.c.l.bf16 %v183
      %v200 = vunpack.c.l.bf16 %v184
      %v201 = vunpack.c.l.bf16 %v185
      %v202 = vunpack.c.l.bf16 %v186
      %v203 = vunpack.c.l.bf16 %v187
      %v204 = vunpack.c.l.bf16 %v188
      %vm213 = vcmask 1046528
      %v214 = vrot.slane %v125, 1
      %v215 = vrot.slane %v197, 1
      %v216 = vsel %vm213, %v214, %v215
      %v217 = vrot.slane %v126, 1
      %v218 = vrot.slane %v198, 1
      %v219 = vsel %vm213, %v217, %v218
      %v220 = vrot.slane %v127, 1
      %v221 = vrot.slane %v199, 1
      %v222 = vsel %vm213, %v220, %v221
      %v223 = vrot.slane %v128, 1
      %v224 = vrot.slane %v200, 1
      %v225 = vsel %vm213, %v223, %v224
      %v226 = vrot.slane %v129, 1
      %v227 = vrot.slane %v201, 1
      %v228 = vsel %vm213, %v226, %v227
      %v229 = vrot.slane %v130, 1
      %v230 = vrot.slane %v202, 1
      %v231 = vsel %vm213, %v229, %v230
      %v232 = vrot.slane %v131, 1
      %v233 = vrot.slane %v203, 1
      %v234 = vsel %vm213, %v232, %v233
      %v235 = vrot.slane %v132, 1
      %v236 = vrot.slane %v204, 1
      %v237 = vsel %vm213, %v235, %v236
      %v246 = vmax.f32 %v189, %v216
      %v247 = vmax.f32 %v190, %v219
      %v248 = vmax.f32 %v191, %v222
      %v249 = vmax.f32 %v192, %v225
      %v250 = vmax.f32 %v193, %v228
      %v251 = vmax.f32 %v194, %v231
      %v252 = vmax.f32 %v195, %v234
      %v253 = vmax.f32 %v196, %v237
      %v254 = vpack.c.bf16 %v246, %v246
      %v255 = vpack.c.bf16 %v247, %v247
      %v256 = vpack.c.bf16 %v248, %v248
      %v257 = vpack.c.bf16 %v249, %v249
      %v258 = vpack.c.bf16 %v250, %v250
      %v259 = vpack.c.bf16 %v251, %v251
      %v260 = vpack.c.bf16 %v252, %v252
      %v261 = vpack.c.bf16 %v253, %v253
      %s262 = scalar_lea.vmem %s111, 8
      %v263 = vld [vmem:[%s262] sm:$0xf]
      %v264 = vld [vmem:[%s262 + $0x10] sm:$0xf]
      %v265 = vld [vmem:[%s262 + $0x20] sm:$0xf]
      %v266 = vld [vmem:[%s262 + $0x30] sm:$0xf]
      %v267 = vld [vmem:[%s262 + $0x40] sm:$0xf]
      %v268 = vld [vmem:[%s262 + $0x50] sm:$0xf]
      %v269 = vld [vmem:[%s262 + $0x60] sm:$0xf]
      %v270 = vld [vmem:[%s262 + $0x70] sm:$0xf]
      %v271 = vunpack.c.l.bf16 %v254
      %v272 = vunpack.c.l.bf16 %v255
      %v273 = vunpack.c.l.bf16 %v256
      %v274 = vunpack.c.l.bf16 %v257
      %v275 = vunpack.c.l.bf16 %v258
      %v276 = vunpack.c.l.bf16 %v259
      %v277 = vunpack.c.l.bf16 %v260
      %v278 = vunpack.c.l.bf16 %v261
      %v279 = vunpack.c.l.bf16 %v263
      %v280 = vunpack.c.l.bf16 %v264
      %v281 = vunpack.c.l.bf16 %v265
      %v282 = vunpack.c.l.bf16 %v266
      %v283 = vunpack.c.l.bf16 %v267
      %v284 = vunpack.c.l.bf16 %v268
      %v285 = vunpack.c.l.bf16 %v269
      %v286 = vunpack.c.l.bf16 %v270
      %v287 = vmax.f32 %v271, %v279
      %v288 = vmax.f32 %v272, %v280
      %v289 = vmax.f32 %v273, %v281
      %v290 = vmax.f32 %v274, %v282
      %v291 = vmax.f32 %v275, %v283
      %v292 = vmax.f32 %v276, %v284
      %v293 = vmax.f32 %v277, %v285
      %v294 = vmax.f32 %v278, %v286
      %v295 = vpack.c.bf16 %v287, %v287
      %v296 = vpack.c.bf16 %v288, %v288
      %v297 = vpack.c.bf16 %v289, %v289
      %v298 = vpack.c.bf16 %v290, %v290
      %v299 = vpack.c.bf16 %v291, %v291
      %v300 = vpack.c.bf16 %v292, %v292
      %v301 = vpack.c.bf16 %v293, %v293
      %v302 = vpack.c.bf16 %v294, %v294
      %v303 = vunpack.c.l.bf16 %v295
      %v304 = vunpack.c.l.bf16 %v296
      %v305 = vunpack.c.l.bf16 %v297
      %v306 = vunpack.c.l.bf16 %v298
      %v307 = vunpack.c.l.bf16 %v299
      %v308 = vunpack.c.l.bf16 %v300
      %v309 = vunpack.c.l.bf16 %v301
      %v310 = vunpack.c.l.bf16 %v302
      %319 = vrot.lane.b32.xlu0 %v279, 64
      %v320 = vpop.permute.xlu0 %319
      %321 = vrot.lane.b32.xlu0 %v280, 64
      %v322 = vpop.permute.xlu0 %321
      %323 = vrot.lane.b32.xlu0 %v281, 64
      %v324 = vpop.permute.xlu0 %323
      %325 = vrot.lane.b32.xlu0 %v282, 64
      %v326 = vpop.permute.xlu0 %325
      %327 = vrot.lane.b32.xlu0 %v283, 64
      %v328 = vpop.permute.xlu0 %327
      %329 = vrot.lane.b32.xlu0 %v284, 64
      %v330 = vpop.permute.xlu0 %329
      %331 = vrot.lane.b32.xlu0 %v285, 64
      %v332 = vpop.permute.xlu0 %331
      %333 = vrot.lane.b32.xlu0 %v286, 64
      %v334 = vpop.permute.xlu0 %333
      %v343 = vmax.f32 %v303, %v320
      %v344 = vmax.f32 %v304, %v322
      %v345 = vmax.f32 %v305, %v324
      %v346 = vmax.f32 %v306, %v326
      %v347 = vmax.f32 %v307, %v328
      %v348 = vmax.f32 %v308, %v330
      %v349 = vmax.f32 %v309, %v332
      %v350 = vmax.f32 %v310, %v334
      %v351 = vpack.c.bf16 %v343, %v343
      %v352 = vpack.c.bf16 %v344, %v344
      %v353 = vpack.c.bf16 %v345, %v345
      %v354 = vpack.c.bf16 %v346, %v346
      %v355 = vpack.c.bf16 %v347, %v347
      %v356 = vpack.c.bf16 %v348, %v348
      %v357 = vpack.c.bf16 %v349, %v349
      %v358 = vpack.c.bf16 %v350, %v350
      %v359 = vld [vmem:[%s262 + $0x4] sm:$0x1]
      %v360 = vld [vmem:[%s262 + $0x14] sm:$0x1]
      %v361 = vld [vmem:[%s262 + $0x24] sm:$0x1]
      %v362 = vld [vmem:[%s262 + $0x34] sm:$0x1]
      %v363 = vld [vmem:[%s262 + $0x44] sm:$0x1]
      %v364 = vld [vmem:[%s262 + $0x54] sm:$0x1]
      %v365 = vld [vmem:[%s262 + $0x64] sm:$0x1]
      %v366 = vld [vmem:[%s262 + $0x74] sm:$0x1]
      %v367 = vunpack.c.l.bf16 %v351
      %v368 = vunpack.c.l.bf16 %v352
      %v369 = vunpack.c.l.bf16 %v353
      %v370 = vunpack.c.l.bf16 %v354
      %v371 = vunpack.c.l.bf16 %v355
      %v372 = vunpack.c.l.bf16 %v356
      %v373 = vunpack.c.l.bf16 %v357
      %v374 = vunpack.c.l.bf16 %v358
      %v375 = vunpack.c.l.bf16 %v359
      %v376 = vunpack.c.l.bf16 %v360
      %v377 = vunpack.c.l.bf16 %v361
      %v378 = vunpack.c.l.bf16 %v362
      %v379 = vunpack.c.l.bf16 %v363
      %v380 = vunpack.c.l.bf16 %v364
      %v381 = vunpack.c.l.bf16 %v365
      %v382 = vunpack.c.l.bf16 %v366
      %v391 = vrot.slane %v279, 1
      %v392 = vrot.slane %v375, 1
      %v393 = vsel %vm213, %v391, %v392
      %v394 = vrot.slane %v280, 1
      %v395 = vrot.slane %v376, 1
      %v396 = vsel %vm213, %v394, %v395
      %v397 = vrot.slane %v281, 1
      %v398 = vrot.slane %v377, 1
      %v399 = vsel %vm213, %v397, %v398
      %v400 = vrot.slane %v282, 1
      %v401 = vrot.slane %v378, 1
      %v402 = vsel %vm213, %v400, %v401
      %v403 = vrot.slane %v283, 1
      %v404 = vrot.slane %v379, 1
      %v405 = vsel %vm213, %v403, %v404
      %v406 = vrot.slane %v284, 1
      %v407 = vrot.slane %v380, 1
      %v408 = vsel %vm213, %v406, %v407
      %v409 = vrot.slane %v285, 1
      %v410 = vrot.slane %v381, 1
      %v411 = vsel %vm213, %v409, %v410
      %v412 = vrot.slane %v286, 1
      %v413 = vrot.slane %v382, 1
      %v414 = vsel %vm213, %v412, %v413
      %v423 = vmax.f32 %v367, %v393
      %v424 = vmax.f32 %v368, %v396
      %v425 = vmax.f32 %v369, %v399
      %v426 = vmax.f32 %v370, %v402
      %v427 = vmax.f32 %v371, %v405
      %v428 = vmax.f32 %v372, %v408
      %v429 = vmax.f32 %v373, %v411
      %v430 = vmax.f32 %v374, %v414
      %v431 = vpack.c.bf16 %v423, %v423
      %v432 = vpack.c.bf16 %v424, %v424
      %v433 = vpack.c.bf16 %v425, %v425
      %v434 = vpack.c.bf16 %v426, %v426
      %v435 = vpack.c.bf16 %v427, %v427
      %v436 = vpack.c.bf16 %v428, %v428
      %v437 = vpack.c.bf16 %v429, %v429
      %v438 = vpack.c.bf16 %v430, %v430
      %s439 = scalar_lea.vmem %s111, 16
      %v440 = vld [vmem:[%s439] sm:$0xf]
      %v441 = vld [vmem:[%s439 + $0x10] sm:$0xf]
      %v442 = vld [vmem:[%s439 + $0x20] sm:$0xf]
      %v443 = vld [vmem:[%s439 + $0x30] sm:$0xf]
      %v444 = vld [vmem:[%s439 + $0x40] sm:$0xf]
      %v445 = vld [vmem:[%s439 + $0x50] sm:$0xf]
      %v446 = vld [vmem:[%s439 + $0x60] sm:$0xf]
      %v447 = vld [vmem:[%s439 + $0x70] sm:$0xf]
      %v448 = vunpack.c.l.bf16 %v431
      %v449 = vunpack.c.l.bf16 %v432
      %v450 = vunpack.c.l.bf16 %v433
      %v451 = vunpack.c.l.bf16 %v434
      %v452 = vunpack.c.l.bf16 %v435
      %v453 = vunpack.c.l.bf16 %v436
      %v454 = vunpack.c.l.bf16 %v437
      %v455 = vunpack.c.l.bf16 %v438
      %v456 = vunpack.c.l.bf16 %v440
      %v457 = vunpack.c.l.bf16 %v441
      %v458 = vunpack.c.l.bf16 %v442
      %v459 = vunpack.c.l.bf16 %v443
      %v460 = vunpack.c.l.bf16 %v444
      %v461 = vunpack.c.l.bf16 %v445
      %v462 = vunpack.c.l.bf16 %v446
      %v463 = vunpack.c.l.bf16 %v447
      %v464 = vmax.f32 %v448, %v456
      %v465 = vmax.f32 %v449, %v457
      %v466 = vmax.f32 %v450, %v458
      %v467 = vmax.f32 %v451, %v459
      %v468 = vmax.f32 %v452, %v460
      %v469 = vmax.f32 %v453, %v461
      %v470 = vmax.f32 %v454, %v462
      %v471 = vmax.f32 %v455, %v463
      %v472 = vpack.c.bf16 %v464, %v464
      %v473 = vpack.c.bf16 %v465, %v465
      %v474 = vpack.c.bf16 %v466, %v466
      %v475 = vpack.c.bf16 %v467, %v467
      %v476 = vpack.c.bf16 %v468, %v468
      %v477 = vpack.c.bf16 %v469, %v469
      %v478 = vpack.c.bf16 %v470, %v470
      %v479 = vpack.c.bf16 %v471, %v471
      %v480 = vunpack.c.l.bf16 %v472
      %v481 = vunpack.c.l.bf16 %v473
      %v482 = vunpack.c.l.bf16 %v474
      %v483 = vunpack.c.l.bf16 %v475
      %v484 = vunpack.c.l.bf16 %v476
      %v485 = vunpack.c.l.bf16 %v477
      %v486 = vunpack.c.l.bf16 %v478
      %v487 = vunpack.c.l.bf16 %v479
      %496 = vrot.lane.b32.xlu0 %v456, 64
      %v497 = vpop.permute.xlu0 %496
      %498 = vrot.lane.b32.xlu0 %v457, 64
      %v499 = vpop.permute.xlu0 %498
      %500 = vrot.lane.b32.xlu0 %v458, 64
      %v501 = vpop.permute.xlu0 %500
      %502 = vrot.lane.b32.xlu0 %v459, 64
      %v503 = vpop.permute.xlu0 %502
      %504 = vrot.lane.b32.xlu0 %v460, 64
      %v505 = vpop.permute.xlu0 %504
      %506 = vrot.lane.b32.xlu0 %v461, 64
      %v507 = vpop.permute.xlu0 %506
      %508 = vrot.lane.b32.xlu0 %v462, 64
      %v509 = vpop.permute.xlu0 %508
      %510 = vrot.lane.b32.xlu0 %v463, 64
      %v511 = vpop.permute.xlu0 %510
      %v520 = vmax.f32 %v480, %v497
      %v521 = vmax.f32 %v481, %v499
      %v522 = vmax.f32 %v482, %v501
      %v523 = vmax.f32 %v483, %v503
      %v524 = vmax.f32 %v484, %v505
      %v525 = vmax.f32 %v485, %v507
      %v526 = vmax.f32 %v486, %v509
      %v527 = vmax.f32 %v487, %v511
      %v528 = vpack.c.bf16 %v520, %v520
      %v529 = vpack.c.bf16 %v521, %v521
      %v530 = vpack.c.bf16 %v522, %v522
      %v531 = vpack.c.bf16 %v523, %v523
      %v532 = vpack.c.bf16 %v524, %v524
      %v533 = vpack.c.bf16 %v525, %v525
      %v534 = vpack.c.bf16 %v526, %v526
      %v535 = vpack.c.bf16 %v527, %v527
      %v536 = vld [vmem:[%s439 + $0x4] sm:$0x1]
      %v537 = vld [vmem:[%s439 + $0x14] sm:$0x1]
      %v538 = vld [vmem:[%s439 + $0x24] sm:$0x1]
      %v539 = vld [vmem:[%s439 + $0x34] sm:$0x1]
      %v540 = vld [vmem:[%s439 + $0x44] sm:$0x1]
      %v541 = vld [vmem:[%s439 + $0x54] sm:$0x1]
      %v542 = vld [vmem:[%s439 + $0x64] sm:$0x1]
      %v543 = vld [vmem:[%s439 + $0x74] sm:$0x1]
      %v544 = vunpack.c.l.bf16 %v528
      %v545 = vunpack.c.l.bf16 %v529
      %v546 = vunpack.c.l.bf16 %v530
      %v547 = vunpack.c.l.bf16 %v531
      %v548 = vunpack.c.l.bf16 %v532
      %v549 = vunpack.c.l.bf16 %v533
      %v550 = vunpack.c.l.bf16 %v534
      %v551 = vunpack.c.l.bf16 %v535
      %v552 = vunpack.c.l.bf16 %v536
      %v553 = vunpack.c.l.bf16 %v537
      %v554 = vunpack.c.l.bf16 %v538
      %v555 = vunpack.c.l.bf16 %v539
      %v556 = vunpack.c.l.bf16 %v540
      %v557 = vunpack.c.l.bf16 %v541
      %v558 = vunpack.c.l.bf16 %v542
      %v559 = vunpack.c.l.bf16 %v543
      %v568 = vrot.slane %v456, 1
      %v569 = vrot.slane %v552, 1
      %v570 = vsel %vm213, %v568, %v569
      %v571 = vrot.slane %v457, 1
      %v572 = vrot.slane %v553, 1
      %v573 = vsel %vm213, %v571, %v572
      %v574 = vrot.slane %v458, 1
      %v575 = vrot.slane %v554, 1
      %v576 = vsel %vm213, %v574, %v575
      %v577 = vrot.slane %v459, 1
      %v578 = vrot.slane %v555, 1
      %v579 = vsel %vm213, %v577, %v578
      %v580 = vrot.slane %v460, 1
      %v581 = vrot.slane %v556, 1
      %v582 = vsel %vm213, %v580, %v581
      %v583 = vrot.slane %v461, 1
      %v584 = vrot.slane %v557, 1
      %v585 = vsel %vm213, %v583, %v584
      %v586 = vrot.slane %v462, 1
      %v587 = vrot.slane %v558, 1
      %v588 = vsel %vm213, %v586, %v587
      %v589 = vrot.slane %v463, 1
      %v590 = vrot.slane %v559, 1
      %v591 = vsel %vm213, %v589, %v590
      %v600 = vmax.f32 %v544, %v570
      %v601 = vmax.f32 %v545, %v573
      %v602 = vmax.f32 %v546, %v576
      %v603 = vmax.f32 %v547, %v579
      %v604 = vmax.f32 %v548, %v582
      %v605 = vmax.f32 %v549, %v585
      %v606 = vmax.f32 %v550, %v588
      %v607 = vmax.f32 %v551, %v591
      %v608 = vpack.c.bf16 %v600, %v600
      %v609 = vpack.c.bf16 %v601, %v601
      %v610 = vpack.c.bf16 %v602, %v602
      %v611 = vpack.c.bf16 %v603, %v603
      %v612 = vpack.c.bf16 %v604, %v604
      %v613 = vpack.c.bf16 %v605, %v605
      %v614 = vpack.c.bf16 %v606, %v606
      %v615 = vpack.c.bf16 %v607, %v607
      %vm616 = vcmask 519168
      %617 = vst.msk [vmem:[%s116] sm:$0xf] %vm616, %v608
      %618 = vst.msk [vmem:[%s116 + $0x4] sm:$0xf] %vm616, %v609
      %619 = vst.msk [vmem:[%s116 + $0x8] sm:$0xf] %vm616, %v610
      %620 = vst.msk [vmem:[%s116 + $0xc] sm:$0xf] %vm616, %v611
      %621 = vst.msk [vmem:[%s116 + $0x10] sm:$0xf] %vm616, %v612
      %622 = vst.msk [vmem:[%s116 + $0x14] sm:$0xf] %vm616, %v613
      %623 = vst.msk [vmem:[%s116 + $0x18] sm:$0xf] %vm616, %v614
      %624 = vst.msk [vmem:[%s116 + $0x1c] sm:$0xf] %vm616, %v615
      %p625 = scmp.lt.s32.totalorder %s12, 1
      %s626 = scalar_select %p625, %s12, 1
      %s627 = smul.addr %s626, 8
      %s628 = smul.addr %s627, 4
      %s629 = scalar_lea.vmem %s1, %s628
      // Predicated region
      $region25: #{resnet101_encoder_share.13} parent=23 // pred_check
        %p630 = pneg %p56
      $region26: #{resnet101_encoder_share.13} parent=23 // pred_check_branch
        %632 = sbr.rel (%p630) target = $region28
      $region27: #{resnet101_encoder_share.13} parent=23 // pred_region
        _
      $region28: #{resnet101_encoder_share.13} parent=23 // pred_fallthru
        _
    $region24: #{resnet101_encoder_share.13} parent=5 // pred_fallthru
      _
    %p633 = scmp.le.s32.totalorder 2, %s7
    // Predicated region
    $region29: #{resnet101_encoder_share.13} parent=5 // pred_check
      %p634 = pneg %p633
    $region30: #{resnet101_encoder_share.13} parent=5 // pred_check_branch
      %636 = sbr.rel (%p634) target = $region32
    $region31: #{resnet101_encoder_share.13} parent=5 // pred_region
      %s637 = ssub.s32 %s7, 2
      // Predicated region
      $region33: #{resnet101_encoder_share.13} parent=31 // pred_check
        %p638 = pneg %p62
      $region34: #{resnet101_encoder_share.13} parent=31 // pred_check_branch
        %640 = sbr.rel (%p638) target = $region36
      $region35: #{resnet101_encoder_share.13} parent=31 // pred_region
        %p641 = scmp.lt.s32.totalorder %s13, 1
        %s642 = scalar_select %p641, %s13, 1
        %s643 = smul.addr %s642, 8
        %s644 = smul.addr %s643, 4
        %s645 = scalar_lea.vmem %s1, %s644
      $region36: #{resnet101_encoder_share.13} parent=31 // pred_fallthru
        _
    $region32: #{resnet101_encoder_share.13} parent=5 // pred_fallthru
      _
  $region6: #{resnet101_encoder_share.13} parent=0 // loop_footer
    %s11 = sadd.s32 1, %s7
  $region7: #{resnet101_encoder_share.13} parent=0 // loop_footer_branch
    %6 = sbr.rel target = $region3
  $region8: #{resnet101_encoder_share.13} parent=0 // loop_exit
    _

// kernel: resnet101_encoder_share.12
$region0: #{resnet101_encoder_share.12}
  #allocation0 [shape = 'u32[]', space=smem, size = 0x4, offset = 0x4, fixed_abs, tag = 'smem constant byte address 0x4 - core index']
  #allocation1 [shape = 'u32[72,128]{1,0:T(1,128)}', space=vmem, size = 0x9000, scoped, tag = 'internal scratch']
  %s0 = inlined_call_operand.vmem [shape: bf16[512,256], index: 0, kind: input, shape index: {}]
  %s1 = inlined_call_operand.vmem [shape: bf16[256,64], index: 1, kind: input, shape index: {}]
  %s2 = inlined_call_operand.vmem [shape: f32[1,64], index: 2, kind: input, shape index: {}]
  %s3 = inlined_call_operand.vmem [shape: bf16[512,64], index: 3, kind: output, shape index: {}]
  %s4 = sld [smem:[#allocation0]]
  $region22: #{resnet101_encoder_share.12} parent=0
    _
  %s6 = ssub.s32 1, %s4
  %s7 = scalar_select 0, %s6, %s4
  // Predicated region
  $region2: #{resnet101_encoder_share.12} parent=0 // pred_check
    _
  $region3: #{resnet101_encoder_share.12} parent=0 // pred_check_branch
    %9 = sbr.rel (0) target = $region5
  $region4: #{resnet101_encoder_share.12} parent=0 // pred_region
    _
  $region5: #{resnet101_encoder_share.12} parent=0 // pred_fallthru
    _
  // Predicated region
  $region6: #{resnet101_encoder_share.12} parent=0 // pred_check
    _
  $region7: #{resnet101_encoder_share.12} parent=0 // pred_check_branch
    %11 = sbr.rel (0) target = $region9
  $region8: #{resnet101_encoder_share.12} parent=0 // pred_region
    _
  $region9: #{resnet101_encoder_share.12} parent=0 // pred_fallthru
    _
  // Predicated region
  $region10: #{resnet101_encoder_share.12} parent=0 // pred_check
    _
  $region11: #{resnet101_encoder_share.12} parent=0 // pred_check_branch
    %13 = sbr.rel (0) target = $region13
  $region12: #{resnet101_encoder_share.12} parent=0 // pred_region
    _
  $region13: #{resnet101_encoder_share.12} parent=0 // pred_fallthru
    _
  %v14 = vld [vmem:[%s0] sm:$0xff]
  %v15 = vld [vmem:[%s0 + $0x8] sm:$0xff]
  %v16 = vld [vmem:[%s0 + $0x10] sm:$0xff]
  %v17 = vld [vmem:[%s0 + $0x18] sm:$0xff]
  %v18 = vld [vmem:[%s0 + $0x20] sm:$0xff]
  %v19 = vld [vmem:[%s0 + $0x28] sm:$0xff]
  %v20 = vld [vmem:[%s0 + $0x30] sm:$0xff]
  %v21 = vld [vmem:[%s0 + $0x38] sm:$0xff]
  %v22 = vld [vmem:[%s0 + $0x40] sm:$0xff]
  %v23 = vld [vmem:[%s0 + $0x48] sm:$0xff]
  %v24 = vld [vmem:[%s0 + $0x50] sm:$0xff]
  %v25 = vld [vmem:[%s0 + $0x58] sm:$0xff]
  %v26 = vld [vmem:[%s0 + $0x60] sm:$0xff]
  %v27 = vld [vmem:[%s0 + $0x68] sm:$0xff]
  %v28 = vld [vmem:[%s0 + $0x70] sm:$0xff]
  %v29 = vld [vmem:[%s0 + $0x78] sm:$0xff]
  %v30 = vld [vmem:[%s0 + $0x80] sm:$0xff]
  %v31 = vld [vmem:[%s0 + $0x88] sm:$0xff]
  %v32 = vld [vmem:[%s0 + $0x90] sm:$0xff]
  %v33 = vld [vmem:[%s0 + $0x98] sm:$0xff]
  %v34 = vld [vmem:[%s0 + $0xa0] sm:$0xff]
  %v35 = vld [vmem:[%s0 + $0xa8] sm:$0xff]
  %v36 = vld [vmem:[%s0 + $0xb0] sm:$0xff]
  %v37 = vld [vmem:[%s0 + $0xb8] sm:$0xff]
  %v38 = vld [vmem:[%s0 + $0xc0] sm:$0xff]
  %v39 = vld [vmem:[%s0 + $0xc8] sm:$0xff]
  %v40 = vld [vmem:[%s0 + $0xd0] sm:$0xff]
  %v41 = vld [vmem:[%s0 + $0xd8] sm:$0xff]
  %v42 = vld [vmem:[%s0 + $0xe0] sm:$0xff]
  %v43 = vld [vmem:[%s0 + $0xe8] sm:$0xff]
  %v44 = vld [vmem:[%s0 + $0xf0] sm:$0xff]
  %v45 = vld [vmem:[%s0 + $0xf8] sm:$0xff]
  %v46 = vld [vmem:[%s0 + $0x100] sm:$0xff]
  %v47 = vld [vmem:[%s0 + $0x108] sm:$0xff]
  %v48 = vld [vmem:[%s0 + $0x110] sm:$0xff]
  %v49 = vld [vmem:[%s0 + $0x118] sm:$0xff]
  %v50 = vld [vmem:[%s0 + $0x120] sm:$0xff]
  %v51 = vld [vmem:[%s0 + $0x128] sm:$0xff]
  %v52 = vld [vmem:[%s0 + $0x130] sm:$0xff]
  %v53 = vld [vmem:[%s0 + $0x138] sm:$0xff]
  %v54 = vld [vmem:[%s0 + $0x140] sm:$0xff]
  %v55 = vld [vmem:[%s0 + $0x148] sm:$0xff]
  %v56 = vld [vmem:[%s0 + $0x150] sm:$0xff]
  %v57 = vld [vmem:[%s0 + $0x158] sm:$0xff]
  %v58 = vld [vmem:[%s0 + $0x160] sm:$0xff]
  %v59 = vld [vmem:[%s0 + $0x168] sm:$0xff]
  %v60 = vld [vmem:[%s0 + $0x170] sm:$0xff]
  %v61 = vld [vmem:[%s0 + $0x178] sm:$0xff]
  %v62 = vld [vmem:[%s0 + $0x180] sm:$0xff]
  %v63 = vld [vmem:[%s0 + $0x188] sm:$0xff]
  %v64 = vld [vmem:[%s0 + $0x190] sm:$0xff]
  %v65 = vld [vmem:[%s0 + $0x198] sm:$0xff]
  %v66 = vld [vmem:[%s0 + $0x1a0] sm:$0xff]
  %v67 = vld [vmem:[%s0 + $0x1a8] sm:$0xff]
  %v68 = vld [vmem:[%s0 + $0x1b0] sm:$0xff]
  %v69 = vld [vmem:[%s0 + $0x1b8] sm:$0xff]
  %v70 = vld [vmem:[%s0 + $0x1c0] sm:$0xff]
  %v71 = vld [vmem:[%s0 + $0x1c8] sm:$0xff]
  %v72 = vld [vmem:[%s0 + $0x1d0] sm:$0xff]
  %v73 = vld [vmem:[%s0 + $0x1d8] sm:$0xff]
  %v74 = vld [vmem:[%s0 + $0x1e0] sm:$0xff]
  %v75 = vld [vmem:[%s0 + $0x1e8] sm:$0xff]
  %v76 = vld [vmem:[%s0 + $0x1f0] sm:$0xff]
  %v77 = vld [vmem:[%s0 + $0x1f8] sm:$0xff]
  %v78 = vld [vmem:[%s1] sm:$0xf]
  %v79 = vld [vmem:[%s1 + $0x4] sm:$0xf]
  %v80 = vld [vmem:[%s1 + $0x8] sm:$0xf]
  %v81 = vld [vmem:[%s1 + $0xc] sm:$0xf]
  %v82 = vld [vmem:[%s1 + $0x10] sm:$0xf]
  %v83 = vld [vmem:[%s1 + $0x14] sm:$0xf]
  %v84 = vld [vmem:[%s1 + $0x18] sm:$0xf]
  %v85 = vld [vmem:[%s1 + $0x1c] sm:$0xf]
  %v86 = vld [vmem:[%s1 + $0x20] sm:$0xf]
  %v87 = vld [vmem:[%s1 + $0x24] sm:$0xf]
  %v88 = vld [vmem:[%s1 + $0x28] sm:$0xf]
  %v89 = vld [vmem:[%s1 + $0x2c] sm:$0xf]
  %v90 = vld [vmem:[%s1 + $0x30] sm:$0xf]
  %v91 = vld [vmem:[%s1 + $0x34] sm:$0xf]
  %v92 = vld [vmem:[%s1 + $0x38] sm:$0xf]
  %v93 = vld [vmem:[%s1 + $0x3c] sm:$0xf]
  %v94 = vld [vmem:[%s1 + $0x40] sm:$0xf]
  %v95 = vld [vmem:[%s1 + $0x44] sm:$0xf]
  %v96 = vld [vmem:[%s1 + $0x48] sm:$0xf]
  %v97 = vld [vmem:[%s1 + $0x4c] sm:$0xf]
  %v98 = vld [vmem:[%s1 + $0x50] sm:$0xf]
  %v99 = vld [vmem:[%s1 + $0x54] sm:$0xf]
  %v100 = vld [vmem:[%s1 + $0x58] sm:$0xf]
  %v101 = vld [vmem:[%s1 + $0x5c] sm:$0xf]
  %v102 = vld [vmem:[%s1 + $0x60] sm:$0xf]
  %v103 = vld [vmem:[%s1 + $0x64] sm:$0xf]
  %v104 = vld [vmem:[%s1 + $0x68] sm:$0xf]
  %v105 = vld [vmem:[%s1 + $0x6c] sm:$0xf]
  %v106 = vld [vmem:[%s1 + $0x70] sm:$0xf]
  %v107 = vld [vmem:[%s1 + $0x74] sm:$0xf]
  %v108 = vld [vmem:[%s1 + $0x78] sm:$0xf]
  %v109 = vld [vmem:[%s1 + $0x7c] sm:$0xf]
  %v110 = vld [vmem:[%s2] sm:$0x1]
  %v112 = vperm.slane %v110, 0
  %v178 = vunpack.c.l.b16 %v14
  %v179 = vunpack.c.h.b16 %v14
  %v180 = vunpack.c.l.b16 %v15
  %v181 = vunpack.c.h.b16 %v15
  %v182 = vunpack.c.l.b16 %v16
  %v183 = vunpack.c.h.b16 %v16
  %v184 = vunpack.c.l.b16 %v17
  %v185 = vunpack.c.h.b16 %v17
  %v186 = vunpack.c.l.b16 %v18
  %v187 = vunpack.c.h.b16 %v18
  %v188 = vunpack.c.l.b16 %v19
  %v189 = vunpack.c.h.b16 %v19
  %v190 = vunpack.c.l.b16 %v20
  %v191 = vunpack.c.h.b16 %v20
  %v192 = vunpack.c.l.b16 %v21
  %v193 = vunpack.c.h.b16 %v21
  %v194 = vunpack.c.l.b16 %v22
  %v195 = vunpack.c.h.b16 %v22
  %v196 = vunpack.c.l.b16 %v23
  %v197 = vunpack.c.h.b16 %v23
  %v198 = vunpack.c.l.b16 %v24
  %v199 = vunpack.c.h.b16 %v24
  %v200 = vunpack.c.l.b16 %v25
  %v201 = vunpack.c.h.b16 %v25
  %v202 = vunpack.c.l.b16 %v26
  %v203 = vunpack.c.h.b16 %v26
  %v204 = vunpack.c.l.b16 %v27
  %v205 = vunpack.c.h.b16 %v27
  %v206 = vunpack.c.l.b16 %v28
  %v207 = vunpack.c.h.b16 %v28
  %v208 = vunpack.c.l.b16 %v29
  %v209 = vunpack.c.h.b16 %v29
  %v210 = vunpack.c.l.b16 %v30
  %v211 = vunpack.c.h.b16 %v30
  %v212 = vunpack.c.l.b16 %v31
  %v213 = vunpack.c.h.b16 %v31
  %v214 = vunpack.c.l.b16 %v32
  %v215 = vunpack.c.h.b16 %v32
  %v216 = vunpack.c.l.b16 %v33
  %v217 = vunpack.c.h.b16 %v33
  %v218 = vunpack.c.l.b16 %v34
  %v219 = vunpack.c.h.b16 %v34
  %v220 = vunpack.c.l.b16 %v35
  %v221 = vunpack.c.h.b16 %v35
  %v222 = vunpack.c.l.b16 %v36
  %v223 = vunpack.c.h.b16 %v36
  %v224 = vunpack.c.l.b16 %v37
  %v225 = vunpack.c.h.b16 %v37
  %v226 = vunpack.c.l.b16 %v38
  %v227 = vunpack.c.h.b16 %v38
  %v228 = vunpack.c.l.b16 %v39
  %v229 = vunpack.c.h.b16 %v39
  %v230 = vunpack.c.l.b16 %v40
  %v231 = vunpack.c.h.b16 %v40
  %v232 = vunpack.c.l.b16 %v41
  %v233 = vunpack.c.h.b16 %v41
  %v234 = vunpack.c.l.b16 %v42
  %v235 = vunpack.c.h.b16 %v42
  %v236 = vunpack.c.l.b16 %v43
  %v237 = vunpack.c.h.b16 %v43
  %v238 = vunpack.c.l.b16 %v44
  %v239 = vunpack.c.h.b16 %v44
  %v240 = vunpack.c.l.b16 %v45
  %v241 = vunpack.c.h.b16 %v45
  %v242 = vunpack.c.l.b16 %v46
  %v243 = vunpack.c.h.b16 %v46
  %v244 = vunpack.c.l.b16 %v47
  %v245 = vunpack.c.h.b16 %v47
  %v246 = vunpack.c.l.b16 %v48
  %v247 = vunpack.c.h.b16 %v48
  %v248 = vunpack.c.l.b16 %v49
  %v249 = vunpack.c.h.b16 %v49
  %v250 = vunpack.c.l.b16 %v50
  %v251 = vunpack.c.h.b16 %v50
  %v252 = vunpack.c.l.b16 %v51
  %v253 = vunpack.c.h.b16 %v51
  %v254 = vunpack.c.l.b16 %v52
  %v255 = vunpack.c.h.b16 %v52
  %v256 = vunpack.c.l.b16 %v53
  %v257 = vunpack.c.h.b16 %v53
  %v258 = vunpack.c.l.b16 %v54
  %v259 = vunpack.c.h.b16 %v54
  %v260 = vunpack.c.l.b16 %v55
  %v261 = vunpack.c.h.b16 %v55
  %v262 = vunpack.c.l.b16 %v56
  %v263 = vunpack.c.h.b16 %v56
  %v264 = vunpack.c.l.b16 %v57
  %v265 = vunpack.c.h.b16 %v57
  %v266 = vunpack.c.l.b16 %v58
  %v267 = vunpack.c.h.b16 %v58
  %v268 = vunpack.c.l.b16 %v59
  %v269 = vunpack.c.h.b16 %v59
  %v270 = vunpack.c.l.b16 %v60
  %v271 = vunpack.c.h.b16 %v60
  %v272 = vunpack.c.l.b16 %v61
  %v273 = vunpack.c.h.b16 %v61
  %v274 = vunpack.c.l.b16 %v62
  %v275 = vunpack.c.h.b16 %v62
  %v276 = vunpack.c.l.b16 %v63
  %v277 = vunpack.c.h.b16 %v63
  %v278 = vunpack.c.l.b16 %v64
  %v279 = vunpack.c.h.b16 %v64
  %v280 = vunpack.c.l.b16 %v65
  %v281 = vunpack.c.h.b16 %v65
  %v282 = vunpack.c.l.b16 %v66
  %v283 = vunpack.c.h.b16 %v66
  %v284 = vunpack.c.l.b16 %v67
  %v285 = vunpack.c.h.b16 %v67
  %v286 = vunpack.c.l.b16 %v68
  %v287 = vunpack.c.h.b16 %v68
  %v288 = vunpack.c.l.b16 %v69
  %v289 = vunpack.c.h.b16 %v69
  %v290 = vunpack.c.l.b16 %v70
  %v291 = vunpack.c.h.b16 %v70
  %v292 = vunpack.c.l.b16 %v71
  %v293 = vunpack.c.h.b16 %v71
  %v294 = vunpack.c.l.b16 %v72
  %v295 = vunpack.c.h.b16 %v72
  %v296 = vunpack.c.l.b16 %v73
  %v297 = vunpack.c.h.b16 %v73
  %v298 = vunpack.c.l.b16 %v74
  %v299 = vunpack.c.h.b16 %v74
  %v300 = vunpack.c.l.b16 %v75
  %v301 = vunpack.c.h.b16 %v75
  %v302 = vunpack.c.l.b16 %v76
  %v303 = vunpack.c.h.b16 %v76
  %v304 = vunpack.c.l.b16 %v77
  %v305 = vunpack.c.h.b16 %v77
  %v306 = vpack.c.b16 %v180, %v178
  %v307 = vpack.c.b16 %v181, %v179
  %v308 = vpack.c.b16 %v184, %v182
  %v309 = vpack.c.b16 %v185, %v183
  %v310 = vpack.c.b16 %v188, %v186
  %v311 = vpack.c.b16 %v189, %v187
  %v312 = vpack.c.b16 %v192, %v190
  %v313 = vpack.c.b16 %v193, %v191
  %v314 = vpack.c.b16 %v196, %v194
  %v315 = vpack.c.b16 %v197, %v195
  %v316 = vpack.c.b16 %v200, %v198
  %v317 = vpack.c.b16 %v201, %v199
  %v318 = vpack.c.b16 %v204, %v202
  %v319 = vpack.c.b16 %v205, %v203
  %v320 = vpack.c.b16 %v208, %v206
  %v321 = vpack.c.b16 %v209, %v207
  %v322 = vpack.c.b16 %v212, %v210
  %v323 = vpack.c.b16 %v213, %v211
  %v324 = vpack.c.b16 %v216, %v214
  %v325 = vpack.c.b16 %v217, %v215
  %v326 = vpack.c.b16 %v220, %v218
  %v327 = vpack.c.b16 %v221, %v219
  %v328 = vpack.c.b16 %v224, %v222
  %v329 = vpack.c.b16 %v225, %v223
  %v330 = vpack.c.b16 %v228, %v226
  %v331 = vpack.c.b16 %v229, %v227
  %v332 = vpack.c.b16 %v232, %v230
  %v333 = vpack.c.b16 %v233, %v231
  %v334 = vpack.c.b16 %v236, %v234
  %v335 = vpack.c.b16 %v237, %v235
  %v336 = vpack.c.b16 %v240, %v238
  %v337 = vpack.c.b16 %v241, %v239
  %v338 = vpack.c.b16 %v244, %v242
  %v339 = vpack.c.b16 %v245, %v243
  %v340 = vpack.c.b16 %v248, %v246
  %v341 = vpack.c.b16 %v249, %v247
  %v342 = vpack.c.b16 %v252, %v250
  %v343 = vpack.c.b16 %v253, %v251
  %v344 = vpack.c.b16 %v256, %v254
  %v345 = vpack.c.b16 %v257, %v255
  %v346 = vpack.c.b16 %v260, %v258
  %v347 = vpack.c.b16 %v261, %v259
  %v348 = vpack.c.b16 %v264, %v262
  %v349 = vpack.c.b16 %v265, %v263
  %v350 = vpack.c.b16 %v268, %v266
  %v351 = vpack.c.b16 %v269, %v267
  %v352 = vpack.c.b16 %v272, %v270
  %v353 = vpack.c.b16 %v273, %v271
  %v354 = vpack.c.b16 %v276, %v274
  %v355 = vpack.c.b16 %v277, %v275
  %v356 = vpack.c.b16 %v280, %v278
  %v357 = vpack.c.b16 %v281, %v279
  %v358 = vpack.c.b16 %v284, %v282
  %v359 = vpack.c.b16 %v285, %v283
  %v360 = vpack.c.b16 %v288, %v286
  %v361 = vpack.c.b16 %v289, %v287
  %v362 = vpack.c.b16 %v292, %v290
  %v363 = vpack.c.b16 %v293, %v291
  %v364 = vpack.c.b16 %v296, %v294
  %v365 = vpack.c.b16 %v297, %v295
  %v366 = vpack.c.b16 %v300, %v298
  %v367 = vpack.c.b16 %v301, %v299
  %v368 = vpack.c.b16 %v304, %v302
  %v369 = vpack.c.b16 %v305, %v303
  %v466 = vunpack.c.l.b16 %v78
  %v467 = vunpack.c.l.b16 %v79
  %v468 = vunpack.c.l.b16 %v80
  %v469 = vunpack.c.l.b16 %v81
  %v470 = vunpack.c.l.b16 %v82
  %v471 = vunpack.c.l.b16 %v83
  %v472 = vunpack.c.l.b16 %v84
  %v473 = vunpack.c.l.b16 %v85
  %v474 = vunpack.c.l.b16 %v86
  %v475 = vunpack.c.l.b16 %v87
  %v476 = vunpack.c.l.b16 %v88
  %v477 = vunpack.c.l.b16 %v89
  %v478 = vunpack.c.l.b16 %v90
  %v479 = vunpack.c.l.b16 %v91
  %v480 = vunpack.c.l.b16 %v92
  %v481 = vunpack.c.l.b16 %v93
  %v482 = vunpack.c.l.b16 %v94
  %v483 = vunpack.c.l.b16 %v95
  %v484 = vunpack.c.l.b16 %v96
  %v485 = vunpack.c.l.b16 %v97
  %v486 = vunpack.c.l.b16 %v98
  %v487 = vunpack.c.l.b16 %v99
  %v488 = vunpack.c.l.b16 %v100
  %v489 = vunpack.c.l.b16 %v101
  %v490 = vunpack.c.l.b16 %v102
  %v491 = vunpack.c.l.b16 %v103
  %v492 = vunpack.c.l.b16 %v104
  %v493 = vunpack.c.l.b16 %v105
  %v494 = vunpack.c.l.b16 %v106
  %v495 = vunpack.c.l.b16 %v107
  %v496 = vunpack.c.l.b16 %v108
  %v497 = vunpack.c.l.b16 %v109
  %v498 = vpack.c.b16 %v467, %v466
  %v499 = vpack.c.b16 %v469, %v468
  %v500 = vpack.c.b16 %v471, %v470
  %v501 = vpack.c.b16 %v473, %v472
  %v502 = vpack.c.b16 %v475, %v474
  %v503 = vpack.c.b16 %v477, %v476
  %v504 = vpack.c.b16 %v479, %v478
  %v505 = vpack.c.b16 %v481, %v480
  %v506 = vpack.c.b16 %v483, %v482
  %v507 = vpack.c.b16 %v485, %v484
  %v508 = vpack.c.b16 %v487, %v486
  %v509 = vpack.c.b16 %v489, %v488
  %v510 = vpack.c.b16 %v491, %v490
  %v511 = vpack.c.b16 %v493, %v492
  %v512 = vpack.c.b16 %v495, %v494
  %v513 = vpack.c.b16 %v497, %v496
  %530 = vmatpush.bf16.msra.mxu0 %v505
  %531 = vmatpush.bf16.msra.mxu0 %v504
  %532 = vmatpush.bf16.msra.mxu0 %v503
  %533 = vmatpush.bf16.msra.mxu0 %v502
  %534 = vmatpush.bf16.msra.mxu0 %v501
  %535 = vmatpush.bf16.msra.mxu0 %v500
  %536 = vmatpush.bf16.msra.mxu0 %v499
  %537 = vmatpush.bf16.msra.mxu0 %v498
  %538 = vmatmul.bf16.gmra.mxu0 %v306
  %v539 = vpop.f32.mrf.mxu0
  %v540 = vadd.f32 %v112, %v539
  %v541 = vpop.f32.mrf.mxu0
  %v542 = vadd.f32 %v112, %v541
  %543 = vmatmul.bf16.gmra.mxu0 %v308
  %v544 = vpop.f32.mrf.mxu0
  %v545 = vadd.f32 %v112, %v544
  %v546 = vpop.f32.mrf.mxu0
  %v547 = vadd.f32 %v112, %v546
  %548 = vmatmul.bf16.gmra.mxu0 %v310
  %v549 = vpop.f32.mrf.mxu0
  %v550 = vadd.f32 %v112, %v549
  %v551 = vpop.f32.mrf.mxu0
  %v552 = vadd.f32 %v112, %v551
  %553 = vmatmul.bf16.gmra.mxu0 %v312
  %v554 = vpop.f32.mrf.mxu0
  %v555 = vadd.f32 %v112, %v554
  %v556 = vpop.f32.mrf.mxu0
  %v557 = vadd.f32 %v112, %v556
  %558 = vmatmul.bf16.gmra.mxu0 %v314
  %v559 = vpop.f32.mrf.mxu0
  %v560 = vadd.f32 %v112, %v559
  %v561 = vpop.f32.mrf.mxu0
  %v562 = vadd.f32 %v112, %v561
  %563 = vmatmul.bf16.gmra.mxu0 %v316
  %v564 = vpop.f32.mrf.mxu0
  %v565 = vadd.f32 %v112, %v564
  %v566 = vpop.f32.mrf.mxu0
  %v567 = vadd.f32 %v112, %v566
  %568 = vmatmul.bf16.gmra.mxu0 %v318
  %v569 = vpop.f32.mrf.mxu0
  %v570 = vadd.f32 %v112, %v569
  %v571 = vpop.f32.mrf.mxu0
  %v572 = vadd.f32 %v112, %v571
  %573 = vmatmul.bf16.gmra.mxu0 %v320
  %v574 = vpop.f32.mrf.mxu0
  %v575 = vadd.f32 %v112, %v574
  %v576 = vpop.f32.mrf.mxu0
  %v577 = vadd.f32 %v112, %v576
  %578 = vmatmul.bf16.gmra.mxu0 %v322
  %v579 = vpop.f32.mrf.mxu0
  %v580 = vadd.f32 %v112, %v579
  %v581 = vpop.f32.mrf.mxu0
  %v582 = vadd.f32 %v112, %v581
  %583 = vmatmul.bf16.gmra.mxu0 %v324
  %v584 = vpop.f32.mrf.mxu0
  %v585 = vadd.f32 %v112, %v584
  %v586 = vpop.f32.mrf.mxu0
  %v587 = vadd.f32 %v112, %v586
  %588 = vmatmul.bf16.gmra.mxu0 %v326
  %v589 = vpop.f32.mrf.mxu0
  %v590 = vadd.f32 %v112, %v589
  %v591 = vpop.f32.mrf.mxu0
  %v592 = vadd.f32 %v112, %v591
  %593 = vmatmul.bf16.gmra.mxu0 %v328
  %v594 = vpop.f32.mrf.mxu0
  %v595 = vadd.f32 %v112, %v594
  %v596 = vpop.f32.mrf.mxu0
  %v597 = vadd.f32 %v112, %v596
  %598 = vmatmul.bf16.gmra.mxu0 %v330
  %v599 = vpop.f32.mrf.mxu0
  %v600 = vadd.f32 %v112, %v599
  %v601 = vpop.f32.mrf.mxu0
  %v602 = vadd.f32 %v112, %v601
  %603 = vmatmul.bf16.gmra.mxu0 %v332
  %v604 = vpop.f32.mrf.mxu0
  %v605 = vadd.f32 %v112, %v604
  %v606 = vpop.f32.mrf.mxu0
  %v607 = vadd.f32 %v112, %v606
  %608 = vmatmul.bf16.gmra.mxu0 %v334
  %v609 = vpop.f32.mrf.mxu0
  %v610 = vadd.f32 %v112, %v609
  %v611 = vpop.f32.mrf.mxu0
  %v612 = vadd.f32 %v112, %v611
  %613 = vmatmul.bf16.gmra.mxu0 %v336
  %v614 = vpop.f32.mrf.mxu0
  %v615 = vadd.f32 %v112, %v614
  %v616 = vpop.f32.mrf.mxu0
  %v617 = vadd.f32 %v112, %v616
  %618 = vmatmul.bf16.gmra.mxu0 %v338
  %v619 = vpop.f32.mrf.mxu0
  %v620 = vadd.f32 %v112, %v619
  %v621 = vpop.f32.mrf.mxu0
  %v622 = vadd.f32 %v112, %v621
  %623 = vmatmul.bf16.gmra.mxu0 %v340
  %v624 = vpop.f32.mrf.mxu0
  %v625 = vadd.f32 %v112, %v624
  %v626 = vpop.f32.mrf.mxu0
  %v627 = vadd.f32 %v112, %v626
  %628 = vmatmul.bf16.gmra.mxu0 %v342
  %v629 = vpop.f32.mrf.mxu0
  %v630 = vadd.f32 %v112, %v629
  %v631 = vpop.f32.mrf.mxu0
  %v632 = vadd.f32 %v112, %v631
  %633 = vmatmul.bf16.gmra.mxu0 %v344
  %v634 = vpop.f32.mrf.mxu0
  %v635 = vadd.f32 %v112, %v634
  %v636 = vpop.f32.mrf.mxu0
  %v637 = vadd.f32 %v112, %v636
  %638 = vmatmul.bf16.gmra.mxu0 %v346
  %v639 = vpop.f32.mrf.mxu0
  %v640 = vadd.f32 %v112, %v639
  %v641 = vpop.f32.mrf.mxu0
  %v642 = vadd.f32 %v112, %v641
  %643 = vmatmul.bf16.gmra.mxu0 %v348
  %v644 = vpop.f32.mrf.mxu0
  %v645 = vadd.f32 %v112, %v644
  %v646 = vpop.f32.mrf.mxu0
  %v647 = vadd.f32 %v112, %v646
  %648 = vmatmul.bf16.gmra.mxu0 %v350
  %v649 = vpop.f32.mrf.mxu0
  %v650 = vadd.f32 %v112, %v649
  %v651 = vpop.f32.mrf.mxu0
  %v652 = vadd.f32 %v112, %v651
  %653 = vmatmul.bf16.gmra.mxu0 %v352
  %v654 = vpop.f32.mrf.mxu0
  %v655 = vadd.f32 %v112, %v654
  %v656 = vpop.f32.mrf.mxu0
  %v657 = vadd.f32 %v112, %v656
  %658 = vmatmul.bf16.gmra.mxu0 %v354
  %v659 = vpop.f32.mrf.mxu0
  %v660 = vadd.f32 %v112, %v659
  %v661 = vpop.f32.mrf.mxu0
  %v662 = vadd.f32 %v112, %v661
  %663 = vmatmul.bf16.gmra.mxu0 %v356
  %v664 = vpop.f32.mrf.mxu0
  %v665 = vadd.f32 %v112, %v664
  %v666 = vpop.f32.mrf.mxu0
  %v667 = vadd.f32 %v112, %v666
  %668 = vmatmul.bf16.gmra.mxu0 %v358
  %v669 = vpop.f32.mrf.mxu0
  %v670 = vadd.f32 %v112, %v669
  %v671 = vpop.f32.mrf.mxu0
  %v672 = vadd.f32 %v112, %v671
  %673 = vmatmul.bf16.gmra.mxu0 %v360
  %v674 = vpop.f32.mrf.mxu0
  %v675 = vadd.f32 %v112, %v674
  %v676 = vpop.f32.mrf.mxu0
  %v677 = vadd.f32 %v112, %v676
  %678 = vmatmul.bf16.gmra.mxu0 %v362
  %v679 = vpop.f32.mrf.mxu0
  %v680 = vadd.f32 %v112, %v679
  %v681 = vpop.f32.mrf.mxu0
  %v682 = vadd.f32 %v112, %v681
  %683 = vmatmul.bf16.gmra.mxu0 %v364
  %v684 = vpop.f32.mrf.mxu0
  %v685 = vadd.f32 %v112, %v684
  %v686 = vpop.f32.mrf.mxu0
  %v687 = vadd.f32 %v112, %v686
  %688 = vmatmul.bf16.gmra.mxu0 %v366
  %v689 = vpop.f32.mrf.mxu0
  %v690 = vadd.f32 %v112, %v689
  %v691 = vpop.f32.mrf.mxu0
  %v692 = vadd.f32 %v112, %v691
  %693 = vmatmul.bf16.gmra.mxu0 %v368
  %v694 = vpop.f32.mrf.mxu0
  %v695 = vadd.f32 %v112, %v694
  %v696 = vpop.f32.mrf.mxu0
  %v697 = vadd.f32 %v112, %v696
  %698 = vdwg.mxu0
  %699 = vmatpush.bf16.msra.mxu0 %v513
  %700 = vmatpush.bf16.msra.mxu0 %v512
  %701 = vmatpush.bf16.msra.mxu0 %v511
  %702 = vmatpush.bf16.msra.mxu0 %v510
  %703 = vmatpush.bf16.msra.mxu0 %v509
  %704 = vmatpush.bf16.msra.mxu0 %v508
  %705 = vmatpush.bf16.msra.mxu0 %v507
  %706 = vmatpush.bf16.msra.mxu0 %v506
  %707 = vmatmul.bf16.gmra.mxu0 %v307
  %v708 = vpop.f32.mrf.mxu0
  %v709 = vadd.f32 %v540, %v708
  %v710 = vpop.f32.mrf.mxu0
  %v711 = vadd.f32 %v542, %v710
  %712 = vmatmul.bf16.gmra.mxu0 %v309
  %v713 = vpop.f32.mrf.mxu0
  %v714 = vadd.f32 %v545, %v713
  %v715 = vpop.f32.mrf.mxu0
  %v716 = vadd.f32 %v547, %v715
  %717 = vmatmul.bf16.gmra.mxu0 %v311
  %v718 = vpop.f32.mrf.mxu0
  %v719 = vadd.f32 %v550, %v718
  %v720 = vpop.f32.mrf.mxu0
  %v721 = vadd.f32 %v552, %v720
  %722 = vmatmul.bf16.gmra.mxu0 %v313
  %v723 = vpop.f32.mrf.mxu0
  %v724 = vadd.f32 %v555, %v723
  %v725 = vpop.f32.mrf.mxu0
  %v726 = vadd.f32 %v557, %v725
  %727 = vmatmul.bf16.gmra.mxu0 %v315
  %v728 = vpop.f32.mrf.mxu0
  %v729 = vadd.f32 %v560, %v728
  %v730 = vpop.f32.mrf.mxu0
  %v731 = vadd.f32 %v562, %v730
  %732 = vmatmul.bf16.gmra.mxu0 %v317
  %v733 = vpop.f32.mrf.mxu0
  %v734 = vadd.f32 %v565, %v733
  %v735 = vpop.f32.mrf.mxu0
  %v736 = vadd.f32 %v567, %v735
  %737 = vmatmul.bf16.gmra.mxu0 %v319
  %v738 = vpop.f32.mrf.mxu0
  %v739 = vadd.f32 %v570, %v738
  %v740 = vpop.f32.mrf.mxu0
  %v741 = vadd.f32 %v572, %v740
  %742 = vmatmul.bf16.gmra.mxu0 %v321
  %v743 = vpop.f32.mrf.mxu0
  %v744 = vadd.f32 %v575, %v743
  %v745 = vpop.f32.mrf.mxu0
  %v746 = vadd.f32 %v577, %v745
  %747 = vmatmul.bf16.gmra.mxu0 %v323
  %v748 = vpop.f32.mrf.mxu0
  %v749 = vadd.f32 %v580, %v748
  %v750 = vpop.f32.mrf.mxu0
  %v751 = vadd.f32 %v582, %v750
  %752 = vmatmul.bf16.gmra.mxu0 %v325
  %v753 = vpop.f32.mrf.mxu0
  %v754 = vadd.f32 %v585, %v753
  %v755 = vpop.f32.mrf.mxu0
  %v756 = vadd.f32 %v587, %v755
  %757 = vmatmul.bf16.gmra.mxu0 %v327
  %v758 = vpop.f32.mrf.mxu0
  %v759 = vadd.f32 %v590, %v758
  %v760 = vpop.f32.mrf.mxu0
  %v761 = vadd.f32 %v592, %v760
  %762 = vmatmul.bf16.gmra.mxu0 %v329
  %v763 = vpop.f32.mrf.mxu0
  %v764 = vadd.f32 %v595, %v763
  %v765 = vpop.f32.mrf.mxu0
  %v766 = vadd.f32 %v597, %v765
  %767 = vmatmul.bf16.gmra.mxu0 %v331
  %v768 = vpop.f32.mrf.mxu0
  %v769 = vadd.f32 %v600, %v768
  %v770 = vpop.f32.mrf.mxu0
  %v771 = vadd.f32 %v602, %v770
  %772 = vmatmul.bf16.gmra.mxu0 %v333
  %v773 = vpop.f32.mrf.mxu0
  %v774 = vadd.f32 %v605, %v773
  %v775 = vpop.f32.mrf.mxu0
  %v776 = vadd.f32 %v607, %v775
  %777 = vmatmul.bf16.gmra.mxu0 %v335
  %v778 = vpop.f32.mrf.mxu0
  %v779 = vadd.f32 %v610, %v778
  %v780 = vpop.f32.mrf.mxu0
  %v781 = vadd.f32 %v612, %v780
  %782 = vmatmul.bf16.gmra.mxu0 %v337
  %v783 = vpop.f32.mrf.mxu0
  %v784 = vadd.f32 %v615, %v783
  %v785 = vpop.f32.mrf.mxu0
  %v786 = vadd.f32 %v617, %v785
  %787 = vmatmul.bf16.gmra.mxu0 %v339
  %v788 = vpop.f32.mrf.mxu0
  %v789 = vadd.f32 %v620, %v788
  %v790 = vpop.f32.mrf.mxu0
  %v791 = vadd.f32 %v622, %v790
  %792 = vmatmul.bf16.gmra.mxu0 %v341
  %v793 = vpop.f32.mrf.mxu0
  %v794 = vadd.f32 %v625, %v793
  %v795 = vpop.f32.mrf.mxu0
  %v796 = vadd.f32 %v627, %v795
  %797 = vmatmul.bf16.gmra.mxu0 %v343
  %v798 = vpop.f32.mrf.mxu0
  %v799 = vadd.f32 %v630, %v798
  %v800 = vpop.f32.mrf.mxu0
  %v801 = vadd.f32 %v632, %v800
  %802 = vmatmul.bf16.gmra.mxu0 %v345
  %v803 = vpop.f32.mrf.mxu0
  %v804 = vadd.f32 %v635, %v803
  %v805 = vpop.f32.mrf.mxu0
  %v806 = vadd.f32 %v637, %v805
  %807 = vmatmul.bf16.gmra.mxu0 %v347
  %v808 = vpop.f32.mrf.mxu0
  %v809 = vadd.f32 %v640, %v808
  %v810 = vpop.f32.mrf.mxu0
  %v811 = vadd.f32 %v642, %v810
  %812 = vmatmul.bf16.gmra.mxu0 %v349
  %v813 = vpop.f32.mrf.mxu0
  %v814 = vadd.f32 %v645, %v813
  %v815 = vpop.f32.mrf.mxu0
  %v816 = vadd.f32 %v647, %v815
  %817 = vmatmul.bf16.gmra.mxu0 %v351
  %v818 = vpop.f32.mrf.mxu0
  %v819 = vadd.f32 %v650, %v818
  %v820 = vpop.f32.mrf.mxu0
  %v821 = vadd.f32 %v652, %v820
  %822 = vmatmul.bf16.gmra.mxu0 %v353
  %v823 = vpop.f32.mrf.mxu0
  %v824 = vadd.f32 %v655, %v823
  %v825 = vpop.f32.mrf.mxu0
  %v826 = vadd.f32 %v657, %v825
  %827 = vmatmul.bf16.gmra.mxu0 %v355
  %v828 = vpop.f32.mrf.mxu0
  %v829 = vadd.f32 %v660, %v828
  %v830 = vpop.f32.mrf.mxu0
  %v831 = vadd.f32 %v662, %v830
  %832 = vmatmul.bf16.gmra.mxu0 %v357
  %v833 = vpop.f32.mrf.mxu0
  %v834 = vadd.f32 %v665, %v833
  %v835 = vpop.f32.mrf.mxu0
  %v836 = vadd.f32 %v667, %v835
  %837 = vmatmul.bf16.gmra.mxu0 %v359
  %v838 = vpop.f32.mrf.mxu0
  %v839 = vadd.f32 %v670, %v838
  %v840 = vpop.f32.mrf.mxu0
  %v841 = vadd.f32 %v672, %v840
  %842 = vmatmul.bf16.gmra.mxu0 %v361
  %v843 = vpop.f32.mrf.mxu0
  %v844 = vadd.f32 %v675, %v843
  %v845 = vpop.f32.mrf.mxu0
  %v846 = vadd.f32 %v677, %v845
  %847 = vmatmul.bf16.gmra.mxu0 %v363
  %v848 = vpop.f32.mrf.mxu0
  %v849 = vadd.f32 %v680, %v848
  %v850 = vpop.f32.mrf.mxu0
  %v851 = vadd.f32 %v682, %v850
  %852 = vmatmul.bf16.gmra.mxu0 %v365
  %v853 = vpop.f32.mrf.mxu0
  %v854 = vadd.f32 %v685, %v853
  %v855 = vpop.f32.mrf.mxu0
  %v856 = vadd.f32 %v687, %v855
  %857 = vmatmul.bf16.gmra.mxu0 %v367
  %v858 = vpop.f32.mrf.mxu0
  %v859 = vadd.f32 %v690, %v858
  %v860 = vpop.f32.mrf.mxu0
  %v861 = vadd.f32 %v692, %v860
  %862 = vmatmul.bf16.gmra.mxu0 %v369
  %v863 = vpop.f32.mrf.mxu0
  %v864 = vadd.f32 %v695, %v863
  %v865 = vpop.f32.mrf.mxu0
  %v866 = vadd.f32 %v697, %v865
  %867 = vdwg.mxu0
  %v868 = vmax.f32 %v709, 0.0
  %v869 = vmax.f32 %v711, 0.0
  %v870 = vmax.f32 %v714, 0.0
  %v871 = vmax.f32 %v716, 0.0
  %v872 = vmax.f32 %v719, 0.0
  %v873 = vmax.f32 %v721, 0.0
  %v874 = vmax.f32 %v724, 0.0
  %v875 = vmax.f32 %v726, 0.0
  %v876 = vmax.f32 %v729, 0.0
  %v877 = vmax.f32 %v731, 0.0
  %v878 = vmax.f32 %v734, 0.0
  %v879 = vmax.f32 %v736, 0.0
  %v880 = vmax.f32 %v739, 0.0
  %v881 = vmax.f32 %v741, 0.0
  %v882 = vmax.f32 %v744, 0.0
  %v883 = vmax.f32 %v746, 0.0
  %v884 = vmax.f32 %v749, 0.0
  %v885 = vmax.f32 %v751, 0.0
  %v886 = vmax.f32 %v754, 0.0
  %v887 = vmax.f32 %v756, 0.0
  %v888 = vmax.f32 %v759, 0.0
  %v889 = vmax.f32 %v761, 0.0
  %v890 = vmax.f32 %v764, 0.0
  %v891 = vmax.f32 %v766, 0.0
  %v892 = vmax.f32 %v769, 0.0
  %v893 = vmax.f32 %v771, 0.0
  %v894 = vmax.f32 %v774, 0.0
  %v895 = vmax.f32 %v776, 0.0
  %v896 = vmax.f32 %v779, 0.0
  %v897 = vmax.f32 %v781, 0.0
  %v898 = vmax.f32 %v784, 0.0
  %v899 = vmax.f32 %v786, 0.0
  %v900 = vmax.f32 %v789, 0.0
  %v901 = vmax.f32 %v791, 0.0
  %v902 = vmax.f32 %v794, 0.0
  %v903 = vmax.f32 %v796, 0.0
  %v904 = vmax.f32 %v799, 0.0
  %v905 = vmax.f32 %v801, 0.0
  %v906 = vmax.f32 %v804, 0.0
  %v907 = vmax.f32 %v806, 0.0
  %v908 = vmax.f32 %v809, 0.0
  %v909 = vmax.f32 %v811, 0.0
  %v910 = vmax.f32 %v814, 0.0
  %v911 = vmax.f32 %v816, 0.0
  %v912 = vmax.f32 %v819, 0.0
  %v913 = vmax.f32 %v821, 0.0
  %v914 = vmax.f32 %v824, 0.0
  %v915 = vmax.f32 %v826, 0.0
  %v916 = vmax.f32 %v829, 0.0
  %v917 = vmax.f32 %v831, 0.0
  %v918 = vmax.f32 %v834, 0.0
  %v919 = vmax.f32 %v836, 0.0
  %v920 = vmax.f32 %v839, 0.0
  %v921 = vmax.f32 %v841, 0.0
  %v922 = vmax.f32 %v844, 0.0
  %v923 = vmax.f32 %v846, 0.0
  %v924 = vmax.f32 %v849, 0.0
  %v925 = vmax.f32 %v851, 0.0
  %v926 = vmax.f32 %v854, 0.0
  %v927 = vmax.f32 %v856, 0.0
  %v928 = vmax.f32 %v859, 0.0
  %v929 = vmax.f32 %v861, 0.0
  %v930 = vmax.f32 %v864, 0.0
  %v931 = vmax.f32 %v866, 0.0
  %v932 = vpack.c.bf16 %v868, %v868
  %v933 = vpack.c.bf16 %v869, %v869
  %v934 = vpack.c.bf16 %v870, %v870
  %v935 = vpack.c.bf16 %v871, %v871
  %v936 = vpack.c.bf16 %v872, %v872
  %v937 = vpack.c.bf16 %v873, %v873
  %v938 = vpack.c.bf16 %v874, %v874
  %v939 = vpack.c.bf16 %v875, %v875
  %v940 = vpack.c.bf16 %v876, %v876
  %v941 = vpack.c.bf16 %v877, %v877
  %v942 = vpack.c.bf16 %v878, %v878
  %v943 = vpack.c.bf16 %v879, %v879
  %v944 = vpack.c.bf16 %v880, %v880
  %v945 = vpack.c.bf16 %v881, %v881
  %v946 = vpack.c.bf16 %v882, %v882
  %v947 = vpack.c.bf16 %v883, %v883
  %v948 = vpack.c.bf16 %v884, %v884
  %v949 = vpack.c.bf16 %v885, %v885
  %v950 = vpack.c.bf16 %v886, %v886
  %v951 = vpack.c.bf16 %v887, %v887
  %v952 = vpack.c.bf16 %v888, %v888
  %v953 = vpack.c.bf16 %v889, %v889
  %v954 = vpack.c.bf16 %v890, %v890
  %v955 = vpack.c.bf16 %v891, %v891
  %v956 = vpack.c.bf16 %v892, %v892
  %v957 = vpack.c.bf16 %v893, %v893
  %v958 = vpack.c.bf16 %v894, %v894
  %v959 = vpack.c.bf16 %v895, %v895
  %v960 = vpack.c.bf16 %v896, %v896
  %v961 = vpack.c.bf16 %v897, %v897
  %v962 = vpack.c.bf16 %v898, %v898
  %v963 = vpack.c.bf16 %v899, %v899
  %v964 = vpack.c.bf16 %v900, %v900
  %v965 = vpack.c.bf16 %v901, %v901
  %v966 = vpack.c.bf16 %v902, %v902
  %v967 = vpack.c.bf16 %v903, %v903
  %v968 = vpack.c.bf16 %v904, %v904
  %v969 = vpack.c.bf16 %v905, %v905
  %v970 = vpack.c.bf16 %v906, %v906
  %v971 = vpack.c.bf16 %v907, %v907
  %v972 = vpack.c.bf16 %v908, %v908
  %v973 = vpack.c.bf16 %v909, %v909
  %v974 = vpack.c.bf16 %v910, %v910
  %v975 = vpack.c.bf16 %v911, %v911
  %v976 = vpack.c.bf16 %v912, %v912
  %v977 = vpack.c.bf16 %v913, %v913
  %v978 = vpack.c.bf16 %v914, %v914
  %v979 = vpack.c.bf16 %v915, %v915
  %v980 = vpack.c.bf16 %v916, %v916
  %v981 = vpack.c.bf16 %v917, %v917
  %v982 = vpack.c.bf16 %v918, %v918
  %v983 = vpack.c.bf16 %v919, %v919
  %v984 = vpack.c.bf16 %v920, %v920
  %v985 = vpack.c.bf16 %v921, %v921
  %v986 = vpack.c.bf16 %v922, %v922
  %v987 = vpack.c.bf16 %v923, %v923
  %v988 = vpack.c.bf16 %v924, %v924
  %v989 = vpack.c.bf16 %v925, %v925
  %v990 = vpack.c.bf16 %v926, %v926
  %v991 = vpack.c.bf16 %v927, %v927
  %v992 = vpack.c.bf16 %v928, %v928
  %v993 = vpack.c.bf16 %v929, %v929
  %v994 = vpack.c.bf16 %v930, %v930
  %v995 = vpack.c.bf16 %v931, %v931
  %vm996 = vcmask 519168
  %997 = vst.msk [vmem:[%s3] sm:$0xf] %vm996, %v932
  %998 = vst.msk [vmem:[%s3 + $0x4] sm:$0xf] %vm996, %v933
  %999 = vst.msk [vmem:[%s3 + $0x8] sm:$0xf] %vm996, %v934
  %1000 = vst.msk [vmem:[%s3 + $0xc] sm:$0xf] %vm996, %v935
  %1001 = vst.msk [vmem:[%s3 + $0x10] sm:$0xf] %vm996, %v936
  %1002 = vst.msk [vmem:[%s3 + $0x14] sm:$0xf] %vm996, %v937
  %1003 = vst.msk [vmem:[%s3 + $0x18] sm:$0xf] %vm996, %v938
  %1004 = vst.msk [vmem:[%s3 + $0x1c] sm:$0xf] %vm996, %v939
  %1005 = vst.msk [vmem:[%s3 + $0x20] sm:$0xf] %vm996, %v940
  %1006 = vst.msk [vmem:[%s3 + $0x24] sm:$0xf] %vm996, %v941
  %1007 = vst.msk [vmem:[%s3 + $0x28] sm:$0xf] %vm996, %v942
  %1008 = vst.msk [vmem:[%s3 + $0x2c] sm:$0xf] %vm996, %v943
  %1009 = vst.msk [vmem:[%s3 + $0x30] sm:$0xf] %vm996, %v944
  %1010 = vst.msk [vmem:[%s3 + $0x34] sm:$0xf] %vm996, %v945
  %1011 = vst.msk [vmem:[%s3 + $0x38] sm:$0xf] %vm996, %v946
  %1012 = vst.msk [vmem:[%s3 + $0x3c] sm:$0xf] %vm996, %v947
  %1013 = vst.msk [vmem:[%s3 + $0x40] sm:$0xf] %vm996, %v948
  %1014 = vst.msk [vmem:[%s3 + $0x44] sm:$0xf] %vm996, %v949
  %1015 = vst.msk [vmem:[%s3 + $0x48] sm:$0xf] %vm996, %v950
  %1016 = vst.msk [vmem:[%s3 + $0x4c] sm:$0xf] %vm996, %v951
  %1017 = vst.msk [vmem:[%s3 + $0x50] sm:$0xf] %vm996, %v952
  %1018 = vst.msk [vmem:[%s3 + $0x54] sm:$0xf] %vm996, %v953
  %1019 = vst.msk [vmem:[%s3 + $0x58] sm:$0xf] %vm996, %v954
  %1020 = vst.msk [vmem:[%s3 + $0x5c] sm:$0xf] %vm996, %v955
  %1021 = vst.msk [vmem:[%s3 + $0x60] sm:$0xf] %vm996, %v956
  %1022 = vst.msk [vmem:[%s3 + $0x64] sm:$0xf] %vm996, %v957
  %1023 = vst.msk [vmem:[%s3 + $0x68] sm:$0xf] %vm996, %v958
  %1024 = vst.msk [vmem:[%s3 + $0x6c] sm:$0xf] %vm996, %v959
  %1025 = vst.msk [vmem:[%s3 + $0x70] sm:$0xf] %vm996, %v960
  %1026 = vst.msk [vmem:[%s3 + $0x74] sm:$0xf] %vm996, %v961
  %1027 = vst.msk [vmem:[%s3 + $0x78] sm:$0xf] %vm996, %v962
  %1028 = vst.msk [vmem:[%s3 + $0x7c] sm:$0xf] %vm996, %v963
  %1029 = vst.msk [vmem:[%s3 + $0x80] sm:$0xf] %vm996, %v964
  %1030 = vst.msk [vmem:[%s3 + $0x84] sm:$0xf] %vm996, %v965
  %1031 = vst.msk [vmem:[%s3 + $0x88] sm:$0xf] %vm996, %v966
  %1032 = vst.msk [vmem:[%s3 + $0x8c] sm:$0xf] %vm996, %v967
  %1033 = vst.msk [vmem:[%s3 + $0x90] sm:$0xf] %vm996, %v968
  %1034 = vst.msk [vmem:[%s3 + $0x94] sm:$0xf] %vm996, %v969
  %1035 = vst.msk [vmem:[%s3 + $0x98] sm:$0xf] %vm996, %v970
  %1036 = vst.msk [vmem:[%s3 + $0x9c] sm:$0xf] %vm996, %v971
  %1037 = vst.msk [vmem:[%s3 + $0xa0] sm:$0xf] %vm996, %v972
  %1038 = vst.msk [vmem:[%s3 + $0xa4] sm:$0xf] %vm996, %v973
  %1039 = vst.msk [vmem:[%s3 + $0xa8] sm:$0xf] %vm996, %v974
  %1040 = vst.msk [vmem:[%s3 + $0xac] sm:$0xf] %vm996, %v975
  %1041 = vst.msk [vmem:[%s3 + $0xb0] sm:$0xf] %vm996, %v976
  %1042 = vst.msk [vmem:[%s3 + $0xb4] sm:$0xf] %vm996, %v977
  %1043 = vst.msk [vmem:[%s3 + $0xb8] sm:$0xf] %vm996, %v978
  %1044 = vst.msk [vmem:[%s3 + $0xbc] sm:$0xf] %vm996, %v979
  %1045 = vst.msk [vmem:[%s3 + $0xc0] sm:$0xf] %vm996, %v980
  %1046 = vst.msk [vmem:[%s3 + $0xc4] sm:$0xf] %vm996, %v981
  %1047 = vst.msk [vmem:[%s3 + $0xc8] sm:$0xf] %vm996, %v982
  %1048 = vst.msk [vmem:[%s3 + $0xcc] sm:$0xf] %vm996, %v983
  %1049 = vst.msk [vmem:[%s3 + $0xd0] sm:$0xf] %vm996, %v984
  %1050 = vst.msk [vmem:[%s3 + $0xd4] sm:$0xf] %vm996, %v985
  %1051 = vst.msk [vmem:[%s3 + $0xd8] sm:$0xf] %vm996, %v986
  %1052 = vst.msk [vmem:[%s3 + $0xdc] sm:$0xf] %vm996, %v987
  %1053 = vst.msk [vmem:[%s3 + $0xe0] sm:$0xf] %vm996, %v988
  %1054 = vst.msk [vmem:[%s3 + $0xe4] sm:$0xf] %vm996, %v989
  %1055 = vst.msk [vmem:[%s3 + $0xe8] sm:$0xf] %vm996, %v990
  %1056 = vst.msk [vmem:[%s3 + $0xec] sm:$0xf] %vm996, %v991
  %1057 = vst.msk [vmem:[%s3 + $0xf0] sm:$0xf] %vm996, %v992
  %1058 = vst.msk [vmem:[%s3 + $0xf4] sm:$0xf] %vm996, %v993
  %1059 = vst.msk [vmem:[%s3 + $0xf8] sm:$0xf] %vm996, %v994
  %1060 = vst.msk [vmem:[%s3 + $0xfc] sm:$0xf] %vm996, %v995
  // Predicated region
  $region14: #{resnet101_encoder_share.12} parent=0 // pred_check
    _
  $region15: #{resnet101_encoder_share.12} parent=0 // pred_check_branch
    %1062 = sbr.rel (0) target = $region17
  $region16: #{resnet101_encoder_share.12} parent=0 // pred_region
    _
  $region17: #{resnet101_encoder_share.12} parent=0 // pred_fallthru
    _
  // Predicated region
  $region18: #{resnet101_encoder_share.12} parent=0 // pred_check
    _
  $region19: #{resnet101_encoder_share.12} parent=0 // pred_check_branch
    %1064 = sbr.rel (0) target = $region21
  $region20: #{resnet101_encoder_share.12} parent=0 // pred_region
    _
  $region21: #{resnet101_encoder_share.12} parent=0 // pred_fallthru
    _

// kernel: resnet101_encoder_share.14
$region0: #{resnet101_encoder_share.14}
  #allocation0 [shape = 'u32[]', space=smem, size = 0x4, offset = 0x4, fixed_abs, tag = 'smem constant byte address 0x4 - core index']
  #allocation1 [shape = 'u32[72,128]{1,0:T(1,128)}', space=vmem, size = 0x9000, scoped, tag = 'internal scratch']
  %s0 = inlined_call_operand.vmem [shape: bf16[128,64], index: 0, kind: input, shape index: {}]
  %s1 = inlined_call_operand.vmem [shape: bf16[64,64], index: 1, kind: input, shape index: {}]
  %s2 = inlined_call_operand.vmem [shape: f32[1,64], index: 2, kind: input, shape index: {}]
  %s3 = inlined_call_operand.vmem [shape: bf16[128,64], index: 3, kind: output, shape index: {}]
  %s4 = sld [smem:[#allocation0]]
  $region22: #{resnet101_encoder_share.14} parent=0
    _
  %s6 = ssub.s32 1, %s4
  %s7 = scalar_select 0, %s6, %s4
  // Predicated region
  $region2: #{resnet101_encoder_share.14} parent=0 // pred_check
    _
  $region3: #{resnet101_encoder_share.14} parent=0 // pred_check_branch
    %9 = sbr.rel (0) target = $region5
  $region4: #{resnet101_encoder_share.14} parent=0 // pred_region
    _
  $region5: #{resnet101_encoder_share.14} parent=0 // pred_fallthru
    _
  // Predicated region
  $region6: #{resnet101_encoder_share.14} parent=0 // pred_check
    _
  $region7: #{resnet101_encoder_share.14} parent=0 // pred_check_branch
    %11 = sbr.rel (0) target = $region9
  $region8: #{resnet101_encoder_share.14} parent=0 // pred_region
    _
  $region9: #{resnet101_encoder_share.14} parent=0 // pred_fallthru
    _
  // Predicated region
  $region10: #{resnet101_encoder_share.14} parent=0 // pred_check
    _
  $region11: #{resnet101_encoder_share.14} parent=0 // pred_check_branch
    %13 = sbr.rel (0) target = $region13
  $region12: #{resnet101_encoder_share.14} parent=0 // pred_region
    _
  $region13: #{resnet101_encoder_share.14} parent=0 // pred_fallthru
    _
  %v15 = vld [vmem:[%s0] sm:$0xf]
  %v16 = vld [vmem:[%s0 + $0x4] sm:$0xf]
  %v17 = vld [vmem:[%s0 + $0x8] sm:$0xf]
  %v18 = vld [vmem:[%s0 + $0xc] sm:$0xf]
  %v19 = vld [vmem:[%s0 + $0x10] sm:$0xf]
  %v20 = vld [vmem:[%s0 + $0x14] sm:$0xf]
  %v21 = vld [vmem:[%s0 + $0x18] sm:$0xf]
  %v22 = vld [vmem:[%s0 + $0x1c] sm:$0xf]
  %v23 = vld [vmem:[%s0 + $0x20] sm:$0xf]
  %v24 = vld [vmem:[%s0 + $0x24] sm:$0xf]
  %v25 = vld [vmem:[%s0 + $0x28] sm:$0xf]
  %v26 = vld [vmem:[%s0 + $0x2c] sm:$0xf]
  %v27 = vld [vmem:[%s0 + $0x30] sm:$0xf]
  %v28 = vld [vmem:[%s0 + $0x34] sm:$0xf]
  %v29 = vld [vmem:[%s0 + $0x38] sm:$0xf]
  %v30 = vld [vmem:[%s0 + $0x3c] sm:$0xf]
  %v31 = vld [vmem:[%s1] sm:$0xf]
  %v32 = vld [vmem:[%s1 + $0x4] sm:$0xf]
  %v33 = vld [vmem:[%s1 + $0x8] sm:$0xf]
  %v34 = vld [vmem:[%s1 + $0xc] sm:$0xf]
  %v35 = vld [vmem:[%s1 + $0x10] sm:$0xf]
  %v36 = vld [vmem:[%s1 + $0x14] sm:$0xf]
  %v37 = vld [vmem:[%s1 + $0x18] sm:$0xf]
  %v38 = vld [vmem:[%s1 + $0x1c] sm:$0xf]
  %v39 = vld [vmem:[%s2] sm:$0x1]
  %v41 = vperm.slane %v39, 0
  %v59 = vunpack.c.l.b16 %v15
  %v60 = vunpack.c.l.b16 %v16
  %v61 = vunpack.c.l.b16 %v17
  %v62 = vunpack.c.l.b16 %v18
  %v63 = vunpack.c.l.b16 %v19
  %v64 = vunpack.c.l.b16 %v20
  %v65 = vunpack.c.l.b16 %v21
  %v66 = vunpack.c.l.b16 %v22
  %v67 = vunpack.c.l.b16 %v23
  %v68 = vunpack.c.l.b16 %v24
  %v69 = vunpack.c.l.b16 %v25
  %v70 = vunpack.c.l.b16 %v26
  %v71 = vunpack.c.l.b16 %v27
  %v72 = vunpack.c.l.b16 %v28
  %v73 = vunpack.c.l.b16 %v29
  %v74 = vunpack.c.l.b16 %v30
  %v75 = vpack.c.b16 %v60, %v59
  %v76 = vpack.c.b16 %v62, %v61
  %v77 = vpack.c.b16 %v64, %v63
  %v78 = vpack.c.b16 %v66, %v65
  %v79 = vpack.c.b16 %v68, %v67
  %v80 = vpack.c.b16 %v70, %v69
  %v81 = vpack.c.b16 %v72, %v71
  %v82 = vpack.c.b16 %v74, %v73
  %v91 = vunpack.c.l.b16 %v31
  %v92 = vunpack.c.l.b16 %v32
  %v93 = vunpack.c.l.b16 %v33
  %v94 = vunpack.c.l.b16 %v34
  %v95 = vunpack.c.l.b16 %v35
  %v96 = vunpack.c.l.b16 %v36
  %v97 = vunpack.c.l.b16 %v37
  %v98 = vunpack.c.l.b16 %v38
  %v99 = vpack.c.b16 %v92, %v91
  %v100 = vpack.c.b16 %v94, %v93
  %v101 = vpack.c.b16 %v96, %v95
  %v102 = vpack.c.b16 %v98, %v97
  %vm107 = vcmask 523264
  %v109 = vsel %vm107, %v75, 0
  %v112 = vsel %vm107, %v76, 0
  %v115 = vsel %vm107, %v77, 0
  %v118 = vsel %vm107, %v78, 0
  %v121 = vsel %vm107, %v79, 0
  %v124 = vsel %vm107, %v80, 0
  %v127 = vsel %vm107, %v81, 0
  %v130 = vsel %vm107, %v82, 0
  %132 = vmatpush.bf16.msra.mxu0 0
  %133 = vmatpush.bf16.msra.mxu0 0
  %134 = vmatpush.bf16.msra.mxu0 0
  %135 = vmatpush.bf16.msra.mxu0 0
  %136 = vmatpush.bf16.msra.mxu0 %v102
  %137 = vmatpush.bf16.msra.mxu0 %v101
  %138 = vmatpush.bf16.msra.mxu0 %v100
  %139 = vmatpush.bf16.msra.mxu0 %v99
  %140 = vmatmul.bf16.gmra.mxu0 %v109
  %v141 = vpop.f32.mrf.mxu0
  %v142 = vadd.f32 %v41, %v141
  %v143 = vpop.f32.mrf.mxu0
  %v144 = vadd.f32 %v41, %v143
  %145 = vmatmul.bf16.gmra.mxu0 %v112
  %v146 = vpop.f32.mrf.mxu0
  %v147 = vadd.f32 %v41, %v146
  %v148 = vpop.f32.mrf.mxu0
  %v149 = vadd.f32 %v41, %v148
  %150 = vmatmul.bf16.gmra.mxu0 %v115
  %v151 = vpop.f32.mrf.mxu0
  %v152 = vadd.f32 %v41, %v151
  %v153 = vpop.f32.mrf.mxu0
  %v154 = vadd.f32 %v41, %v153
  %155 = vmatmul.bf16.gmra.mxu0 %v118
  %v156 = vpop.f32.mrf.mxu0
  %v157 = vadd.f32 %v41, %v156
  %v158 = vpop.f32.mrf.mxu0
  %v159 = vadd.f32 %v41, %v158
  %160 = vmatmul.bf16.gmra.mxu0 %v121
  %v161 = vpop.f32.mrf.mxu0
  %v162 = vadd.f32 %v41, %v161
  %v163 = vpop.f32.mrf.mxu0
  %v164 = vadd.f32 %v41, %v163
  %165 = vmatmul.bf16.gmra.mxu0 %v124
  %v166 = vpop.f32.mrf.mxu0
  %v167 = vadd.f32 %v41, %v166
  %v168 = vpop.f32.mrf.mxu0
  %v169 = vadd.f32 %v41, %v168
  %170 = vmatmul.bf16.gmra.mxu0 %v127
  %v171 = vpop.f32.mrf.mxu0
  %v172 = vadd.f32 %v41, %v171
  %v173 = vpop.f32.mrf.mxu0
  %v174 = vadd.f32 %v41, %v173
  %175 = vmatmul.bf16.gmra.mxu0 %v130
  %v176 = vpop.f32.mrf.mxu0
  %v177 = vadd.f32 %v41, %v176
  %v178 = vpop.f32.mrf.mxu0
  %v179 = vadd.f32 %v41, %v178
  %180 = vdwg.mxu0
  %v181 = vmax.f32 %v142, 0.0
  %v182 = vmax.f32 %v144, 0.0
  %v183 = vmax.f32 %v147, 0.0
  %v184 = vmax.f32 %v149, 0.0
  %v185 = vmax.f32 %v152, 0.0
  %v186 = vmax.f32 %v154, 0.0
  %v187 = vmax.f32 %v157, 0.0
  %v188 = vmax.f32 %v159, 0.0
  %v189 = vmax.f32 %v162, 0.0
  %v190 = vmax.f32 %v164, 0.0
  %v191 = vmax.f32 %v167, 0.0
  %v192 = vmax.f32 %v169, 0.0
  %v193 = vmax.f32 %v172, 0.0
  %v194 = vmax.f32 %v174, 0.0
  %v195 = vmax.f32 %v177, 0.0
  %v196 = vmax.f32 %v179, 0.0
  %v197 = vpack.c.bf16 %v181, %v181
  %v198 = vpack.c.bf16 %v182, %v182
  %v199 = vpack.c.bf16 %v183, %v183
  %v200 = vpack.c.bf16 %v184, %v184
  %v201 = vpack.c.bf16 %v185, %v185
  %v202 = vpack.c.bf16 %v186, %v186
  %v203 = vpack.c.bf16 %v187, %v187
  %v204 = vpack.c.bf16 %v188, %v188
  %v205 = vpack.c.bf16 %v189, %v189
  %v206 = vpack.c.bf16 %v190, %v190
  %v207 = vpack.c.bf16 %v191, %v191
  %v208 = vpack.c.bf16 %v192, %v192
  %v209 = vpack.c.bf16 %v193, %v193
  %v210 = vpack.c.bf16 %v194, %v194
  %v211 = vpack.c.bf16 %v195, %v195
  %v212 = vpack.c.bf16 %v196, %v196
  %vm213 = vcmask 519168
  %214 = vst.msk [vmem:[%s3] sm:$0xf] %vm213, %v197
  %215 = vst.msk [vmem:[%s3 + $0x4] sm:$0xf] %vm213, %v198
  %216 = vst.msk [vmem:[%s3 + $0x8] sm:$0xf] %vm213, %v199
  %217 = vst.msk [vmem:[%s3 + $0xc] sm:$0xf] %vm213, %v200
  %218 = vst.msk [vmem:[%s3 + $0x10] sm:$0xf] %vm213, %v201
  %219 = vst.msk [vmem:[%s3 + $0x14] sm:$0xf] %vm213, %v202
  %220 = vst.msk [vmem:[%s3 + $0x18] sm:$0xf] %vm213, %v203
  %221 = vst.msk [vmem:[%s3 + $0x1c] sm:$0xf] %vm213, %v204
  %222 = vst.msk [vmem:[%s3 + $0x20] sm:$0xf] %vm213, %v205
  %223 = vst.msk [vmem:[%s3 + $0x24] sm:$0xf] %vm213, %v206
  %224 = vst.msk [vmem:[%s3 + $0x28] sm:$0xf] %vm213, %v207
  %225 = vst.msk [vmem:[%s3 + $0x2c] sm:$0xf] %vm213, %v208
  %226 = vst.msk [vmem:[%s3 + $0x30] sm:$0xf] %vm213, %v209
  %227 = vst.msk [vmem:[%s3 + $0x34] sm:$0xf] %vm213, %v210
  %228 = vst.msk [vmem:[%s3 + $0x38] sm:$0xf] %vm213, %v211
  %229 = vst.msk [vmem:[%s3 + $0x3c] sm:$0xf] %vm213, %v212
  // Predicated region
  $region14: #{resnet101_encoder_share.14} parent=0 // pred_check
    _
  $region15: #{resnet101_encoder_share.14} parent=0 // pred_check_branch
    %231 = sbr.rel (0) target = $region17
  $region16: #{resnet101_encoder_share.14} parent=0 // pred_region
    _
  $region17: #{resnet101_encoder_share.14} parent=0 // pred_fallthru
    _
  // Predicated region
  $region18: #{resnet101_encoder_share.14} parent=0 // pred_check
    _
  $region19: #{resnet101_encoder_share.14} parent=0 // pred_check_branch
    %233 = sbr.rel (0) target = $region21
  $region20: #{resnet101_encoder_share.14} parent=0 // pred_region
    _
  $region21: #{resnet101_encoder_share.14} parent=0 // pred_fallthru
    _

// kernel: resnet101_encoder_share.16
$region0: #{resnet101_encoder_share.16}
  #allocation0 [shape = 'u32[]', space=smem, size = 0x4, offset = 0x4, fixed_abs, tag = 'smem constant byte address 0x4 - core index']
  #allocation1 [shape = 'u32[72,128]{1,0:T(1,128)}', space=vmem, size = 0x9000, scoped, tag = 'internal scratch']
  %s0 = inlined_call_operand.vmem [shape: bf16[128,64], index: 0, kind: input, shape index: {}]
  %s1 = inlined_call_operand.vmem [shape: bf16[64,256], index: 1, kind: input, shape index: {}]
  %s2 = inlined_call_operand.vmem [shape: f32[1,256], index: 2, kind: input, shape index: {}]
  %s3 = inlined_call_operand.vmem [shape: bf16[128,256], index: 3, kind: output, shape index: {}]
  %s4 = sld [smem:[#allocation0]]
  $region22: #{resnet101_encoder_share.16} parent=0
    _
  %s6 = ssub.s32 1, %s4
  %s7 = scalar_select 0, %s6, %s4
  // Predicated region
  $region2: #{resnet101_encoder_share.16} parent=0 // pred_check
    _
  $region3: #{resnet101_encoder_share.16} parent=0 // pred_check_branch
    %9 = sbr.rel (0) target = $region5
  $region4: #{resnet101_encoder_share.16} parent=0 // pred_region
    _
  $region5: #{resnet101_encoder_share.16} parent=0 // pred_fallthru
    _
  // Predicated region
  $region6: #{resnet101_encoder_share.16} parent=0 // pred_check
    _
  $region7: #{resnet101_encoder_share.16} parent=0 // pred_check_branch
    %11 = sbr.rel (0) target = $region9
  $region8: #{resnet101_encoder_share.16} parent=0 // pred_region
    _
  $region9: #{resnet101_encoder_share.16} parent=0 // pred_fallthru
    _
  // Predicated region
  $region10: #{resnet101_encoder_share.16} parent=0 // pred_check
    _
  $region11: #{resnet101_encoder_share.16} parent=0 // pred_check_branch
    %13 = sbr.rel (0) target = $region13
  $region12: #{resnet101_encoder_share.16} parent=0 // pred_region
    _
  $region13: #{resnet101_encoder_share.16} parent=0 // pred_fallthru
    _
  %v15 = vld [vmem:[%s0] sm:$0xf]
  %v16 = vld [vmem:[%s0 + $0x4] sm:$0xf]
  %v17 = vld [vmem:[%s0 + $0x8] sm:$0xf]
  %v18 = vld [vmem:[%s0 + $0xc] sm:$0xf]
  %v19 = vld [vmem:[%s0 + $0x10] sm:$0xf]
  %v20 = vld [vmem:[%s0 + $0x14] sm:$0xf]
  %v21 = vld [vmem:[%s0 + $0x18] sm:$0xf]
  %v22 = vld [vmem:[%s0 + $0x1c] sm:$0xf]
  %v23 = vld [vmem:[%s0 + $0x20] sm:$0xf]
  %v24 = vld [vmem:[%s0 + $0x24] sm:$0xf]
  %v25 = vld [vmem:[%s0 + $0x28] sm:$0xf]
  %v26 = vld [vmem:[%s0 + $0x2c] sm:$0xf]
  %v27 = vld [vmem:[%s0 + $0x30] sm:$0xf]
  %v28 = vld [vmem:[%s0 + $0x34] sm:$0xf]
  %v29 = vld [vmem:[%s0 + $0x38] sm:$0xf]
  %v30 = vld [vmem:[%s0 + $0x3c] sm:$0xf]
  %v31 = vld [vmem:[%s1] sm:$0xff]
  %v32 = vld [vmem:[%s1 + $0x8] sm:$0xff]
  %v33 = vld [vmem:[%s1 + $0x10] sm:$0xff]
  %v34 = vld [vmem:[%s1 + $0x18] sm:$0xff]
  %v35 = vld [vmem:[%s1 + $0x20] sm:$0xff]
  %v36 = vld [vmem:[%s1 + $0x28] sm:$0xff]
  %v37 = vld [vmem:[%s1 + $0x30] sm:$0xff]
  %v38 = vld [vmem:[%s1 + $0x38] sm:$0xff]
  %v39 = vld [vmem:[%s2] sm:$0x3]
  %v41 = vperm.slane %v39, 0
  %v42 = vperm.slane %v39, 1
  %v61 = vunpack.c.l.b16 %v15
  %v62 = vunpack.c.l.b16 %v16
  %v63 = vunpack.c.l.b16 %v17
  %v64 = vunpack.c.l.b16 %v18
  %v65 = vunpack.c.l.b16 %v19
  %v66 = vunpack.c.l.b16 %v20
  %v67 = vunpack.c.l.b16 %v21
  %v68 = vunpack.c.l.b16 %v22
  %v69 = vunpack.c.l.b16 %v23
  %v70 = vunpack.c.l.b16 %v24
  %v71 = vunpack.c.l.b16 %v25
  %v72 = vunpack.c.l.b16 %v26
  %v73 = vunpack.c.l.b16 %v27
  %v74 = vunpack.c.l.b16 %v28
  %v75 = vunpack.c.l.b16 %v29
  %v76 = vunpack.c.l.b16 %v30
  %v77 = vpack.c.b16 %v62, %v61
  %v78 = vpack.c.b16 %v64, %v63
  %v79 = vpack.c.b16 %v66, %v65
  %v80 = vpack.c.b16 %v68, %v67
  %v81 = vpack.c.b16 %v70, %v69
  %v82 = vpack.c.b16 %v72, %v71
  %v83 = vpack.c.b16 %v74, %v73
  %v84 = vpack.c.b16 %v76, %v75
  %v93 = vunpack.c.l.b16 %v31
  %v94 = vunpack.c.h.b16 %v31
  %v95 = vunpack.c.l.b16 %v32
  %v96 = vunpack.c.h.b16 %v32
  %v97 = vunpack.c.l.b16 %v33
  %v98 = vunpack.c.h.b16 %v33
  %v99 = vunpack.c.l.b16 %v34
  %v100 = vunpack.c.h.b16 %v34
  %v101 = vunpack.c.l.b16 %v35
  %v102 = vunpack.c.h.b16 %v35
  %v103 = vunpack.c.l.b16 %v36
  %v104 = vunpack.c.h.b16 %v36
  %v105 = vunpack.c.l.b16 %v37
  %v106 = vunpack.c.h.b16 %v37
  %v107 = vunpack.c.l.b16 %v38
  %v108 = vunpack.c.h.b16 %v38
  %v109 = vpack.c.b16 %v95, %v93
  %v110 = vpack.c.b16 %v96, %v94
  %v111 = vpack.c.b16 %v99, %v97
  %v112 = vpack.c.b16 %v100, %v98
  %v113 = vpack.c.b16 %v103, %v101
  %v114 = vpack.c.b16 %v104, %v102
  %v115 = vpack.c.b16 %v107, %v105
  %v116 = vpack.c.b16 %v108, %v106
  %vm125 = vcmask 523264
  %v127 = vsel %vm125, %v77, 0
  %v130 = vsel %vm125, %v78, 0
  %v133 = vsel %vm125, %v79, 0
  %v136 = vsel %vm125, %v80, 0
  %v139 = vsel %vm125, %v81, 0
  %v142 = vsel %vm125, %v82, 0
  %v145 = vsel %vm125, %v83, 0
  %v148 = vsel %vm125, %v84, 0
  %150 = vmatpush.bf16.msra.mxu0 0
  %151 = vmatpush.bf16.msra.mxu0 0
  %152 = vmatpush.bf16.msra.mxu0 0
  %153 = vmatpush.bf16.msra.mxu0 0
  %154 = vmatpush.bf16.msra.mxu0 %v115
  %155 = vmatpush.bf16.msra.mxu0 %v113
  %156 = vmatpush.bf16.msra.mxu0 %v111
  %157 = vmatpush.bf16.msra.mxu0 %v109
  %158 = vmatmul.bf16.gmra.mxu0 %v127
  %v159 = vpop.f32.mrf.mxu0
  %v160 = vadd.f32 %v41, %v159
  %v161 = vpop.f32.mrf.mxu0
  %v162 = vadd.f32 %v41, %v161
  %163 = vmatmul.bf16.gmra.mxu0 %v130
  %v164 = vpop.f32.mrf.mxu0
  %v165 = vadd.f32 %v41, %v164
  %v166 = vpop.f32.mrf.mxu0
  %v167 = vadd.f32 %v41, %v166
  %168 = vmatmul.bf16.gmra.mxu0 %v133
  %v169 = vpop.f32.mrf.mxu0
  %v170 = vadd.f32 %v41, %v169
  %v171 = vpop.f32.mrf.mxu0
  %v172 = vadd.f32 %v41, %v171
  %173 = vmatmul.bf16.gmra.mxu0 %v136
  %v174 = vpop.f32.mrf.mxu0
  %v175 = vadd.f32 %v41, %v174
  %v176 = vpop.f32.mrf.mxu0
  %v177 = vadd.f32 %v41, %v176
  %178 = vmatmul.bf16.gmra.mxu0 %v139
  %v179 = vpop.f32.mrf.mxu0
  %v180 = vadd.f32 %v41, %v179
  %v181 = vpop.f32.mrf.mxu0
  %v182 = vadd.f32 %v41, %v181
  %183 = vmatmul.bf16.gmra.mxu0 %v142
  %v184 = vpop.f32.mrf.mxu0
  %v185 = vadd.f32 %v41, %v184
  %v186 = vpop.f32.mrf.mxu0
  %v187 = vadd.f32 %v41, %v186
  %188 = vmatmul.bf16.gmra.mxu0 %v145
  %v189 = vpop.f32.mrf.mxu0
  %v190 = vadd.f32 %v41, %v189
  %v191 = vpop.f32.mrf.mxu0
  %v192 = vadd.f32 %v41, %v191
  %193 = vmatmul.bf16.gmra.mxu0 %v148
  %v194 = vpop.f32.mrf.mxu0
  %v195 = vadd.f32 %v41, %v194
  %v196 = vpop.f32.mrf.mxu0
  %v197 = vadd.f32 %v41, %v196
  %198 = vdwg.mxu0
  %199 = vmatpush.bf16.msra.mxu0 0
  %200 = vmatpush.bf16.msra.mxu0 0
  %201 = vmatpush.bf16.msra.mxu0 0
  %202 = vmatpush.bf16.msra.mxu0 0
  %203 = vmatpush.bf16.msra.mxu0 %v116
  %204 = vmatpush.bf16.msra.mxu0 %v114
  %205 = vmatpush.bf16.msra.mxu0 %v112
  %206 = vmatpush.bf16.msra.mxu0 %v110
  %207 = vmatmul.bf16.gmra.mxu0 %v127
  %v208 = vpop.f32.mrf.mxu0
  %v209 = vadd.f32 %v42, %v208
  %v210 = vpop.f32.mrf.mxu0
  %v211 = vadd.f32 %v42, %v210
  %212 = vmatmul.bf16.gmra.mxu0 %v130
  %v213 = vpop.f32.mrf.mxu0
  %v214 = vadd.f32 %v42, %v213
  %v215 = vpop.f32.mrf.mxu0
  %v216 = vadd.f32 %v42, %v215
  %217 = vmatmul.bf16.gmra.mxu0 %v133
  %v218 = vpop.f32.mrf.mxu0
  %v219 = vadd.f32 %v42, %v218
  %v220 = vpop.f32.mrf.mxu0
  %v221 = vadd.f32 %v42, %v220
  %222 = vmatmul.bf16.gmra.mxu0 %v136
  %v223 = vpop.f32.mrf.mxu0
  %v224 = vadd.f32 %v42, %v223
  %v225 = vpop.f32.mrf.mxu0
  %v226 = vadd.f32 %v42, %v225
  %227 = vmatmul.bf16.gmra.mxu0 %v139
  %v228 = vpop.f32.mrf.mxu0
  %v229 = vadd.f32 %v42, %v228
  %v230 = vpop.f32.mrf.mxu0
  %v231 = vadd.f32 %v42, %v230
  %232 = vmatmul.bf16.gmra.mxu0 %v142
  %v233 = vpop.f32.mrf.mxu0
  %v234 = vadd.f32 %v42, %v233
  %v235 = vpop.f32.mrf.mxu0
  %v236 = vadd.f32 %v42, %v235
  %237 = vmatmul.bf16.gmra.mxu0 %v145
  %v238 = vpop.f32.mrf.mxu0
  %v239 = vadd.f32 %v42, %v238
  %v240 = vpop.f32.mrf.mxu0
  %v241 = vadd.f32 %v42, %v240
  %242 = vmatmul.bf16.gmra.mxu0 %v148
  %v243 = vpop.f32.mrf.mxu0
  %v244 = vadd.f32 %v42, %v243
  %v245 = vpop.f32.mrf.mxu0
  %v246 = vadd.f32 %v42, %v245
  %247 = vdwg.mxu0
  %v248 = vpack.c.bf16 %v209, %v160
  %v249 = vpack.c.bf16 %v211, %v162
  %v250 = vpack.c.bf16 %v214, %v165
  %v251 = vpack.c.bf16 %v216, %v167
  %v252 = vpack.c.bf16 %v219, %v170
  %v253 = vpack.c.bf16 %v221, %v172
  %v254 = vpack.c.bf16 %v224, %v175
  %v255 = vpack.c.bf16 %v226, %v177
  %v256 = vpack.c.bf16 %v229, %v180
  %v257 = vpack.c.bf16 %v231, %v182
  %v258 = vpack.c.bf16 %v234, %v185
  %v259 = vpack.c.bf16 %v236, %v187
  %v260 = vpack.c.bf16 %v239, %v190
  %v261 = vpack.c.bf16 %v241, %v192
  %v262 = vpack.c.bf16 %v244, %v195
  %v263 = vpack.c.bf16 %v246, %v197
  %264 = vst [vmem:[%s3] sm:$0xff] %v248
  %265 = vst [vmem:[%s3 + $0x8] sm:$0xff] %v249
  %266 = vst [vmem:[%s3 + $0x10] sm:$0xff] %v250
  %267 = vst [vmem:[%s3 + $0x18] sm:$0xff] %v251
  %268 = vst [vmem:[%s3 + $0x20] sm:$0xff] %v252
  %269 = vst [vmem:[%s3 + $0x28] sm:$0xff] %v253
  %270 = vst [vmem:[%s3 + $0x30] sm:$0xff] %v254
  %271 = vst [vmem:[%s3 + $0x38] sm:$0xff] %v255
  %272 = vst [vmem:[%s3 + $0x40] sm:$0xff] %v256
  %273 = vst [vmem:[%s3 + $0x48] sm:$0xff] %v257
  %274 = vst [vmem:[%s3 + $0x50] sm:$0xff] %v258
  %275 = vst [vmem:[%s3 + $0x58] sm:$0xff] %v259
  %276 = vst [vmem:[%s3 + $0x60] sm:$0xff] %v260
  %277 = vst [vmem:[%s3 + $0x68] sm:$0xff] %v261
  %278 = vst [vmem:[%s3 + $0x70] sm:$0xff] %v262
  %279 = vst [vmem:[%s3 + $0x78] sm:$0xff] %v263
  // Predicated region
  $region14: #{resnet101_encoder_share.16} parent=0 // pred_check
    _
  $region15: #{resnet101_encoder_share.16} parent=0 // pred_check_branch
    %281 = sbr.rel (0) target = $region17
  $region16: #{resnet101_encoder_share.16} parent=0 // pred_region
    _
  $region17: #{resnet101_encoder_share.16} parent=0 // pred_fallthru
    _
  // Predicated region
  $region18: #{resnet101_encoder_share.16} parent=0 // pred_check
    _
  $region19: #{resnet101_encoder_share.16} parent=0 // pred_check_branch
    %283 = sbr.rel (0) target = $region21
  $region20: #{resnet101_encoder_share.16} parent=0 // pred_region
    _
  $region21: #{resnet101_encoder_share.16} parent=0 // pred_fallthru
    _

// kernel: resnet101_encoder_share.18
$region0: #{resnet101_encoder_share.18}
  #allocation0 [shape = 'u32[]', space=smem, size = 0x4, offset = 0x4, fixed_abs, tag = 'smem constant byte address 0x4 - core index']
  #allocation1 [shape = 'u32[72,128]{1,0:T(1,128)}', space=vmem, size = 0x9000, scoped, tag = 'internal scratch']
  %s0 = inlined_call_operand.vmem [shape: bf16[128,256], index: 0, kind: input, shape index: {}]
  %s1 = inlined_call_operand.vmem [shape: bf16[256,64], index: 1, kind: input, shape index: {}]
  %s2 = inlined_call_operand.vmem [shape: f32[1,64], index: 2, kind: input, shape index: {}]
  %s3 = inlined_call_operand.vmem [shape: bf16[128,64], index: 3, kind: output, shape index: {}]
  %s4 = sld [smem:[#allocation0]]
  $region22: #{resnet101_encoder_share.18} parent=0
    _
  %s6 = ssub.s32 1, %s4
  %s7 = scalar_select 0, %s6, %s4
  // Predicated region
  $region2: #{resnet101_encoder_share.18} parent=0 // pred_check
    _
  $region3: #{resnet101_encoder_share.18} parent=0 // pred_check_branch
    %9 = sbr.rel (0) target = $region5
  $region4: #{resnet101_encoder_share.18} parent=0 // pred_region
    _
  $region5: #{resnet101_encoder_share.18} parent=0 // pred_fallthru
    _
  // Predicated region
  $region6: #{resnet101_encoder_share.18} parent=0 // pred_check
    _
  $region7: #{resnet101_encoder_share.18} parent=0 // pred_check_branch
    %11 = sbr.rel (0) target = $region9
  $region8: #{resnet101_encoder_share.18} parent=0 // pred_region
    _
  $region9: #{resnet101_encoder_share.18} parent=0 // pred_fallthru
    _
  // Predicated region
  $region10: #{resnet101_encoder_share.18} parent=0 // pred_check
    _
  $region11: #{resnet101_encoder_share.18} parent=0 // pred_check_branch
    %13 = sbr.rel (0) target = $region13
  $region12: #{resnet101_encoder_share.18} parent=0 // pred_region
    _
  $region13: #{resnet101_encoder_share.18} parent=0 // pred_fallthru
    _
  %v14 = vld [vmem:[%s0] sm:$0xff]
  %v15 = vld [vmem:[%s0 + $0x8] sm:$0xff]
  %v16 = vld [vmem:[%s0 + $0x10] sm:$0xff]
  %v17 = vld [vmem:[%s0 + $0x18] sm:$0xff]
  %v18 = vld [vmem:[%s0 + $0x20] sm:$0xff]
  %v19 = vld [vmem:[%s0 + $0x28] sm:$0xff]
  %v20 = vld [vmem:[%s0 + $0x30] sm:$0xff]
  %v21 = vld [vmem:[%s0 + $0x38] sm:$0xff]
  %v22 = vld [vmem:[%s0 + $0x40] sm:$0xff]
  %v23 = vld [vmem:[%s0 + $0x48] sm:$0xff]
  %v24 = vld [vmem:[%s0 + $0x50] sm:$0xff]
  %v25 = vld [vmem:[%s0 + $0x58] sm:$0xff]
  %v26 = vld [vmem:[%s0 + $0x60] sm:$0xff]
  %v27 = vld [vmem:[%s0 + $0x68] sm:$0xff]
  %v28 = vld [vmem:[%s0 + $0x70] sm:$0xff]
  %v29 = vld [vmem:[%s0 + $0x78] sm:$0xff]
  %v30 = vld [vmem:[%s1] sm:$0xf]
  %v31 = vld [vmem:[%s1 + $0x4] sm:$0xf]
  %v32 = vld [vmem:[%s1 + $0x8] sm:$0xf]
  %v33 = vld [vmem:[%s1 + $0xc] sm:$0xf]
  %v34 = vld [vmem:[%s1 + $0x10] sm:$0xf]
  %v35 = vld [vmem:[%s1 + $0x14] sm:$0xf]
  %v36 = vld [vmem:[%s1 + $0x18] sm:$0xf]
  %v37 = vld [vmem:[%s1 + $0x1c] sm:$0xf]
  %v38 = vld [vmem:[%s1 + $0x20] sm:$0xf]
  %v39 = vld [vmem:[%s1 + $0x24] sm:$0xf]
  %v40 = vld [vmem:[%s1 + $0x28] sm:$0xf]
  %v41 = vld [vmem:[%s1 + $0x2c] sm:$0xf]
  %v42 = vld [vmem:[%s1 + $0x30] sm:$0xf]
  %v43 = vld [vmem:[%s1 + $0x34] sm:$0xf]
  %v44 = vld [vmem:[%s1 + $0x38] sm:$0xf]
  %v45 = vld [vmem:[%s1 + $0x3c] sm:$0xf]
  %v46 = vld [vmem:[%s1 + $0x40] sm:$0xf]
  %v47 = vld [vmem:[%s1 + $0x44] sm:$0xf]
  %v48 = vld [vmem:[%s1 + $0x48] sm:$0xf]
  %v49 = vld [vmem:[%s1 + $0x4c] sm:$0xf]
  %v50 = vld [vmem:[%s1 + $0x50] sm:$0xf]
  %v51 = vld [vmem:[%s1 + $0x54] sm:$0xf]
  %v52 = vld [vmem:[%s1 + $0x58] sm:$0xf]
  %v53 = vld [vmem:[%s1 + $0x5c] sm:$0xf]
  %v54 = vld [vmem:[%s1 + $0x60] sm:$0xf]
  %v55 = vld [vmem:[%s1 + $0x64] sm:$0xf]
  %v56 = vld [vmem:[%s1 + $0x68] sm:$0xf]
  %v57 = vld [vmem:[%s1 + $0x6c] sm:$0xf]
  %v58 = vld [vmem:[%s1 + $0x70] sm:$0xf]
  %v59 = vld [vmem:[%s1 + $0x74] sm:$0xf]
  %v60 = vld [vmem:[%s1 + $0x78] sm:$0xf]
  %v61 = vld [vmem:[%s1 + $0x7c] sm:$0xf]
  %v62 = vld [vmem:[%s2] sm:$0x1]
  %v64 = vperm.slane %v62, 0
  %v82 = vunpack.c.l.b16 %v14
  %v83 = vunpack.c.h.b16 %v14
  %v84 = vunpack.c.l.b16 %v15
  %v85 = vunpack.c.h.b16 %v15
  %v86 = vunpack.c.l.b16 %v16
  %v87 = vunpack.c.h.b16 %v16
  %v88 = vunpack.c.l.b16 %v17
  %v89 = vunpack.c.h.b16 %v17
  %v90 = vunpack.c.l.b16 %v18
  %v91 = vunpack.c.h.b16 %v18
  %v92 = vunpack.c.l.b16 %v19
  %v93 = vunpack.c.h.b16 %v19
  %v94 = vunpack.c.l.b16 %v20
  %v95 = vunpack.c.h.b16 %v20
  %v96 = vunpack.c.l.b16 %v21
  %v97 = vunpack.c.h.b16 %v21
  %v98 = vunpack.c.l.b16 %v22
  %v99 = vunpack.c.h.b16 %v22
  %v100 = vunpack.c.l.b16 %v23
  %v101 = vunpack.c.h.b16 %v23
  %v102 = vunpack.c.l.b16 %v24
  %v103 = vunpack.c.h.b16 %v24
  %v104 = vunpack.c.l.b16 %v25
  %v105 = vunpack.c.h.b16 %v25
  %v106 = vunpack.c.l.b16 %v26
  %v107 = vunpack.c.h.b16 %v26
  %v108 = vunpack.c.l.b16 %v27
  %v109 = vunpack.c.h.b16 %v27
  %v110 = vunpack.c.l.b16 %v28
  %v111 = vunpack.c.h.b16 %v28
  %v112 = vunpack.c.l.b16 %v29
  %v113 = vunpack.c.h.b16 %v29
  %v114 = vpack.c.b16 %v84, %v82
  %v115 = vpack.c.b16 %v85, %v83
  %v116 = vpack.c.b16 %v88, %v86
  %v117 = vpack.c.b16 %v89, %v87
  %v118 = vpack.c.b16 %v92, %v90
  %v119 = vpack.c.b16 %v93, %v91
  %v120 = vpack.c.b16 %v96, %v94
  %v121 = vpack.c.b16 %v97, %v95
  %v122 = vpack.c.b16 %v100, %v98
  %v123 = vpack.c.b16 %v101, %v99
  %v124 = vpack.c.b16 %v104, %v102
  %v125 = vpack.c.b16 %v105, %v103
  %v126 = vpack.c.b16 %v108, %v106
  %v127 = vpack.c.b16 %v109, %v107
  %v128 = vpack.c.b16 %v112, %v110
  %v129 = vpack.c.b16 %v113, %v111
  %v178 = vunpack.c.l.b16 %v30
  %v179 = vunpack.c.l.b16 %v31
  %v180 = vunpack.c.l.b16 %v32
  %v181 = vunpack.c.l.b16 %v33
  %v182 = vunpack.c.l.b16 %v34
  %v183 = vunpack.c.l.b16 %v35
  %v184 = vunpack.c.l.b16 %v36
  %v185 = vunpack.c.l.b16 %v37
  %v186 = vunpack.c.l.b16 %v38
  %v187 = vunpack.c.l.b16 %v39
  %v188 = vunpack.c.l.b16 %v40
  %v189 = vunpack.c.l.b16 %v41
  %v190 = vunpack.c.l.b16 %v42
  %v191 = vunpack.c.l.b16 %v43
  %v192 = vunpack.c.l.b16 %v44
  %v193 = vunpack.c.l.b16 %v45
  %v194 = vunpack.c.l.b16 %v46
  %v195 = vunpack.c.l.b16 %v47
  %v196 = vunpack.c.l.b16 %v48
  %v197 = vunpack.c.l.b16 %v49
  %v198 = vunpack.c.l.b16 %v50
  %v199 = vunpack.c.l.b16 %v51
  %v200 = vunpack.c.l.b16 %v52
  %v201 = vunpack.c.l.b16 %v53
  %v202 = vunpack.c.l.b16 %v54
  %v203 = vunpack.c.l.b16 %v55
  %v204 = vunpack.c.l.b16 %v56
  %v205 = vunpack.c.l.b16 %v57
  %v206 = vunpack.c.l.b16 %v58
  %v207 = vunpack.c.l.b16 %v59
  %v208 = vunpack.c.l.b16 %v60
  %v209 = vunpack.c.l.b16 %v61
  %v210 = vpack.c.b16 %v179, %v178
  %v211 = vpack.c.b16 %v181, %v180
  %v212 = vpack.c.b16 %v183, %v182
  %v213 = vpack.c.b16 %v185, %v184
  %v214 = vpack.c.b16 %v187, %v186
  %v215 = vpack.c.b16 %v189, %v188
  %v216 = vpack.c.b16 %v191, %v190
  %v217 = vpack.c.b16 %v193, %v192
  %v218 = vpack.c.b16 %v195, %v194
  %v219 = vpack.c.b16 %v197, %v196
  %v220 = vpack.c.b16 %v199, %v198
  %v221 = vpack.c.b16 %v201, %v200
  %v222 = vpack.c.b16 %v203, %v202
  %v223 = vpack.c.b16 %v205, %v204
  %v224 = vpack.c.b16 %v207, %v206
  %v225 = vpack.c.b16 %v209, %v208
  %242 = vmatpush.bf16.msra.mxu0 %v217
  %243 = vmatpush.bf16.msra.mxu0 %v216
  %244 = vmatpush.bf16.msra.mxu0 %v215
  %245 = vmatpush.bf16.msra.mxu0 %v214
  %246 = vmatpush.bf16.msra.mxu0 %v213
  %247 = vmatpush.bf16.msra.mxu0 %v212
  %248 = vmatpush.bf16.msra.mxu0 %v211
  %249 = vmatpush.bf16.msra.mxu0 %v210
  %250 = vmatmul.bf16.gmra.mxu0 %v114
  %v251 = vpop.f32.mrf.mxu0
  %v252 = vadd.f32 %v64, %v251
  %v253 = vpop.f32.mrf.mxu0
  %v254 = vadd.f32 %v64, %v253
  %255 = vmatmul.bf16.gmra.mxu0 %v116
  %v256 = vpop.f32.mrf.mxu0
  %v257 = vadd.f32 %v64, %v256
  %v258 = vpop.f32.mrf.mxu0
  %v259 = vadd.f32 %v64, %v258
  %260 = vmatmul.bf16.gmra.mxu0 %v118
  %v261 = vpop.f32.mrf.mxu0
  %v262 = vadd.f32 %v64, %v261
  %v263 = vpop.f32.mrf.mxu0
  %v264 = vadd.f32 %v64, %v263
  %265 = vmatmul.bf16.gmra.mxu0 %v120
  %v266 = vpop.f32.mrf.mxu0
  %v267 = vadd.f32 %v64, %v266
  %v268 = vpop.f32.mrf.mxu0
  %v269 = vadd.f32 %v64, %v268
  %270 = vmatmul.bf16.gmra.mxu0 %v122
  %v271 = vpop.f32.mrf.mxu0
  %v272 = vadd.f32 %v64, %v271
  %v273 = vpop.f32.mrf.mxu0
  %v274 = vadd.f32 %v64, %v273
  %275 = vmatmul.bf16.gmra.mxu0 %v124
  %v276 = vpop.f32.mrf.mxu0
  %v277 = vadd.f32 %v64, %v276
  %v278 = vpop.f32.mrf.mxu0
  %v279 = vadd.f32 %v64, %v278
  %280 = vmatmul.bf16.gmra.mxu0 %v126
  %v281 = vpop.f32.mrf.mxu0
  %v282 = vadd.f32 %v64, %v281
  %v283 = vpop.f32.mrf.mxu0
  %v284 = vadd.f32 %v64, %v283
  %285 = vmatmul.bf16.gmra.mxu0 %v128
  %v286 = vpop.f32.mrf.mxu0
  %v287 = vadd.f32 %v64, %v286
  %v288 = vpop.f32.mrf.mxu0
  %v289 = vadd.f32 %v64, %v288
  %290 = vdwg.mxu0
  %291 = vmatpush.bf16.msra.mxu0 %v225
  %292 = vmatpush.bf16.msra.mxu0 %v224
  %293 = vmatpush.bf16.msra.mxu0 %v223
  %294 = vmatpush.bf16.msra.mxu0 %v222
  %295 = vmatpush.bf16.msra.mxu0 %v221
  %296 = vmatpush.bf16.msra.mxu0 %v220
  %297 = vmatpush.bf16.msra.mxu0 %v219
  %298 = vmatpush.bf16.msra.mxu0 %v218
  %299 = vmatmul.bf16.gmra.mxu0 %v115
  %v300 = vpop.f32.mrf.mxu0
  %v301 = vadd.f32 %v252, %v300
  %v302 = vpop.f32.mrf.mxu0
  %v303 = vadd.f32 %v254, %v302
  %304 = vmatmul.bf16.gmra.mxu0 %v117
  %v305 = vpop.f32.mrf.mxu0
  %v306 = vadd.f32 %v257, %v305
  %v307 = vpop.f32.mrf.mxu0
  %v308 = vadd.f32 %v259, %v307
  %309 = vmatmul.bf16.gmra.mxu0 %v119
  %v310 = vpop.f32.mrf.mxu0
  %v311 = vadd.f32 %v262, %v310
  %v312 = vpop.f32.mrf.mxu0
  %v313 = vadd.f32 %v264, %v312
  %314 = vmatmul.bf16.gmra.mxu0 %v121
  %v315 = vpop.f32.mrf.mxu0
  %v316 = vadd.f32 %v267, %v315
  %v317 = vpop.f32.mrf.mxu0
  %v318 = vadd.f32 %v269, %v317
  %319 = vmatmul.bf16.gmra.mxu0 %v123
  %v320 = vpop.f32.mrf.mxu0
  %v321 = vadd.f32 %v272, %v320
  %v322 = vpop.f32.mrf.mxu0
  %v323 = vadd.f32 %v274, %v322
  %324 = vmatmul.bf16.gmra.mxu0 %v125
  %v325 = vpop.f32.mrf.mxu0
  %v326 = vadd.f32 %v277, %v325
  %v327 = vpop.f32.mrf.mxu0
  %v328 = vadd.f32 %v279, %v327
  %329 = vmatmul.bf16.gmra.mxu0 %v127
  %v330 = vpop.f32.mrf.mxu0
  %v331 = vadd.f32 %v282, %v330
  %v332 = vpop.f32.mrf.mxu0
  %v333 = vadd.f32 %v284, %v332
  %334 = vmatmul.bf16.gmra.mxu0 %v129
  %v335 = vpop.f32.mrf.mxu0
  %v336 = vadd.f32 %v287, %v335
  %v337 = vpop.f32.mrf.mxu0
  %v338 = vadd.f32 %v289, %v337
  %339 = vdwg.mxu0
  %v340 = vmax.f32 %v301, 0.0
  %v341 = vmax.f32 %v303, 0.0
  %v342 = vmax.f32 %v306, 0.0
  %v343 = vmax.f32 %v308, 0.0
  %v344 = vmax.f32 %v311, 0.0
  %v345 = vmax.f32 %v313, 0.0
  %v346 = vmax.f32 %v316, 0.0
  %v347 = vmax.f32 %v318, 0.0
  %v348 = vmax.f32 %v321, 0.0
  %v349 = vmax.f32 %v323, 0.0
  %v350 = vmax.f32 %v326, 0.0
  %v351 = vmax.f32 %v328, 0.0
  %v352 = vmax.f32 %v331, 0.0
  %v353 = vmax.f32 %v333, 0.0
  %v354 = vmax.f32 %v336, 0.0
  %v355 = vmax.f32 %v338, 0.0
  %v356 = vpack.c.bf16 %v340, %v340
  %v357 = vpack.c.bf16 %v341, %v341
  %v358 = vpack.c.bf16 %v342, %v342
  %v359 = vpack.c.bf16 %v343, %v343
  %v360 = vpack.c.bf16 %v344, %v344
  %v361 = vpack.c.bf16 %v345, %v345
  %v362 = vpack.c.bf16 %v346, %v346
  %v363 = vpack.c.bf16 %v347, %v347
  %v364 = vpack.c.bf16 %v348, %v348
  %v365 = vpack.c.bf16 %v349, %v349
  %v366 = vpack.c.bf16 %v350, %v350
  %v367 = vpack.c.bf16 %v351, %v351
  %v368 = vpack.c.bf16 %v352, %v352
  %v369 = vpack.c.bf16 %v353, %v353
  %v370 = vpack.c.bf16 %v354, %v354
  %v371 = vpack.c.bf16 %v355, %v355
  %vm372 = vcmask 519168
  %373 = vst.msk [vmem:[%s3] sm:$0xf] %vm372, %v356
  %374 = vst.msk [vmem:[%s3 + $0x4] sm:$0xf] %vm372, %v357
  %375 = vst.msk [vmem:[%s3 + $0x8] sm:$0xf] %vm372, %v358
  %376 = vst.msk [vmem:[%s3 + $0xc] sm:$0xf] %vm372, %v359
  %377 = vst.msk [vmem:[%s3 + $0x10] sm:$0xf] %vm372, %v360
  %378 = vst.msk [vmem:[%s3 + $0x14] sm:$0xf] %vm372, %v361
  %379 = vst.msk [vmem:[%s3 + $0x18] sm:$0xf] %vm372, %v362
  %380 = vst.msk [vmem:[%s3 + $0x1c] sm:$0xf] %vm372, %v363
  %381 = vst.msk [vmem:[%s3 + $0x20] sm:$0xf] %vm372, %v364
  %382 = vst.msk [vmem:[%s3 + $0x24] sm:$0xf] %vm372, %v365
  %383 = vst.msk [vmem:[%s3 + $0x28] sm:$0xf] %vm372, %v366
  %384 = vst.msk [vmem:[%s3 + $0x2c] sm:$0xf] %vm372, %v367
  %385 = vst.msk [vmem:[%s3 + $0x30] sm:$0xf] %vm372, %v368
  %386 = vst.msk [vmem:[%s3 + $0x34] sm:$0xf] %vm372, %v369
  %387 = vst.msk [vmem:[%s3 + $0x38] sm:$0xf] %vm372, %v370
  %388 = vst.msk [vmem:[%s3 + $0x3c] sm:$0xf] %vm372, %v371
  // Predicated region
  $region14: #{resnet101_encoder_share.18} parent=0 // pred_check
    _
  $region15: #{resnet101_encoder_share.18} parent=0 // pred_check_branch
    %390 = sbr.rel (0) target = $region17
  $region16: #{resnet101_encoder_share.18} parent=0 // pred_region
    _
  $region17: #{resnet101_encoder_share.18} parent=0 // pred_fallthru
    _
  // Predicated region
  $region18: #{resnet101_encoder_share.18} parent=0 // pred_check
    _
  $region19: #{resnet101_encoder_share.18} parent=0 // pred_check_branch
    %392 = sbr.rel (0) target = $region21
  $region20: #{resnet101_encoder_share.18} parent=0 // pred_region
    _
  $region21: #{resnet101_encoder_share.18} parent=0 // pred_fallthru
    _

// kernel: resnet101_encoder_share.15
$region0: #{resnet101_encoder_share.15}
  #allocation0 [shape = 'u32[]', space=smem, size = 0x4, offset = 0x4, fixed_abs, tag = 'smem constant byte address 0x4 - core index']
  #allocation1 [shape = 'u32[72,128]{1,0:T(1,128)}', space=vmem, size = 0x9000, scoped, tag = 'internal scratch']
  %s0 = inlined_call_operand.vmem [shape: bf16[2,10,10,64], index: 0, kind: input, shape index: {}]
  %s1 = inlined_call_operand.vmem [shape: bf16[9,64,64], index: 1, kind: input, shape index: {}]
  %s2 = inlined_call_operand.vmem [shape: f32[1,64], index: 2, kind: input, shape index: {}]
  %s3 = inlined_call_operand.vmem [shape: bf16[2,8,8,64], index: 3, kind: output, shape index: {}]
  %s4 = sld [smem:[#allocation0]]
  $region45: #{resnet101_encoder_share.15} parent=0
    _
  %s6 = ssub.s32 1, %s4
  %s7 = scalar_select 0, %s6, %s4
  loop: start=0, step=1, limit=4
  $region2: #{resnet101_encoder_share.15} parent=0 // loop_pre_header
    _
  $region3: #{resnet101_encoder_share.15} parent=0 // loop_header
    %s9 = sphi 0, %s13
    %p10 = scmp.ge.s32.totalorder %s9, 4
    %s19 = sphi 0, %s21
    %s22 = sphi 0, %s19
    %s23 = sphi 0, %s22
    %s39 = sphi 0, %s23
    %s43 = sphi 0, %s43
    %s45 = sphi 0, %s43
    %s46 = sphi 0, %s45
    %s60 = sphi 0, %s46
    %s64 = sphi 0, %s64
    %s66 = sphi 0, %s64
    %s67 = sphi 0, %s66
    %s81 = sphi 0, %s67
    %s87 = sphi 0, %s89
    %s90 = sphi 0, %s87
    %s91 = sphi 0, %s90
    %s107 = sphi 0, %s91
  $region4: #{resnet101_encoder_share.15} parent=0 // loop_header_branch
    %12 = sbr.rel (%p10) target = $region8
  $region5: #{resnet101_encoder_share.15} parent=0 // loop_body
    %s14 = ssub.s32 %s9, 1
    %s15 = ssub.s32 %s9, 2
    %s16 = sadd.s32 %s9, 1
    %s17 = ssub.s32 %s9, %s16
    %p18 = scmp.eq.s32.totalorder %s17, 0
    %s20 = sadd.s32 %s19, 1
    %s21 = scalar_select %p18, %s19, %s20
    %p24 = pneg %p18
    %p25 = scmp.eq.s32.totalorder %s9, 1
    %p26 = por %p24, %p25
    %p27 = scmp.ne.s32.totalorder %s19, %s22
    %p28 = scmp.eq.s32.totalorder %s9, 0
    %p29 = por %p27, %p28
    %p30 = scmp.ne.s32.totalorder %s19, %s22
    %p31 = scmp.eq.s32.totalorder %s14, 1
    %p32 = por %p30, %p31
    %p33 = scmp.ne.s32.totalorder %s22, %s23
    %p34 = scmp.eq.s32.totalorder %s14, 0
    %p35 = por %p33, %p34
    %p36 = scmp.ne.s32.totalorder %s22, %s23
    %p37 = scmp.eq.s32.totalorder %s15, 1
    %p38 = por %p36, %p37
    %p40 = scmp.ne.s32.totalorder %s23, %s39
    %p41 = scmp.eq.s32.totalorder %s15, 0
    %p42 = por %p40, %p41
    %s44 = sadd.s32 %s43, 1
    %p47 = scmp.eq.s32.totalorder %s9, 1
    %p48 = scmp.ne.s32.totalorder %s43, %s45
    %p49 = scmp.eq.s32.totalorder %s9, 0
    %p50 = por %p48, %p49
    %p51 = scmp.ne.s32.totalorder %s43, %s45
    %p52 = scmp.eq.s32.totalorder %s14, 1
    %p53 = por %p51, %p52
    %p54 = scmp.ne.s32.totalorder %s45, %s46
    %p55 = scmp.eq.s32.totalorder %s14, 0
    %p56 = por %p54, %p55
    %p57 = scmp.ne.s32.totalorder %s45, %s46
    %p58 = scmp.eq.s32.totalorder %s15, 1
    %p59 = por %p57, %p58
    %p61 = scmp.ne.s32.totalorder %s46, %s60
    %p62 = scmp.eq.s32.totalorder %s15, 0
    %p63 = por %p61, %p62
    %s65 = sadd.s32 %s64, 1
    %p68 = scmp.eq.s32.totalorder %s9, 1
    %p69 = scmp.ne.s32.totalorder %s64, %s66
    %p70 = scmp.eq.s32.totalorder %s9, 0
    %p71 = por %p69, %p70
    %p72 = scmp.ne.s32.totalorder %s64, %s66
    %p73 = scmp.eq.s32.totalorder %s14, 1
    %p74 = por %p72, %p73
    %p75 = scmp.ne.s32.totalorder %s66, %s67
    %p76 = scmp.eq.s32.totalorder %s14, 0
    %p77 = por %p75, %p76
    %p78 = scmp.ne.s32.totalorder %s66, %s67
    %p79 = scmp.eq.s32.totalorder %s15, 1
    %p80 = por %p78, %p79
    %p82 = scmp.ne.s32.totalorder %s67, %s81
    %p83 = scmp.eq.s32.totalorder %s15, 0
    %p84 = por %p82, %p83
    %s85 = ssub.s32 %s9, %s16
    %p86 = scmp.eq.s32.totalorder %s85, 0
    %s88 = sadd.s32 %s87, 1
    %s89 = scalar_select %p86, %s87, %s88
    %p92 = pneg %p86
    %p93 = scmp.eq.s32.totalorder %s9, 1
    %p94 = por %p92, %p93
    %p95 = scmp.ne.s32.totalorder %s87, %s90
    %p96 = scmp.eq.s32.totalorder %s9, 0
    %p97 = por %p95, %p96
    %p98 = scmp.ne.s32.totalorder %s87, %s90
    %p99 = scmp.eq.s32.totalorder %s14, 1
    %p100 = por %p98, %p99
    %p101 = scmp.ne.s32.totalorder %s90, %s91
    %p102 = scmp.eq.s32.totalorder %s14, 0
    %p103 = por %p101, %p102
    %p104 = scmp.ne.s32.totalorder %s90, %s91
    %p105 = scmp.eq.s32.totalorder %s15, 1
    %p106 = por %p104, %p105
    %p108 = scmp.ne.s32.totalorder %s91, %s107
    %p109 = scmp.eq.s32.totalorder %s15, 0
    %p110 = por %p108, %p109
    %p111 = scmp.le.s32.totalorder 1, %s9
    %p112 = scmp.lt.s32.totalorder %s9, 3
    %p113 = pnand %p111, %p112
    %p114 = pneg %p113
    // Predicated region
    $region9: #{resnet101_encoder_share.15} parent=5 // pred_check
      _
    $region10: #{resnet101_encoder_share.15} parent=5 // pred_check_branch
      %116 = sbr.rel (%p113) target = $region12
    $region11: #{resnet101_encoder_share.15} parent=5 // pred_region
      %s117 = ssub.s32 %s9, 1
      // Predicated region
      $region13: #{resnet101_encoder_share.15} parent=11 // pred_check
        %p118 = pneg %p56
      $region14: #{resnet101_encoder_share.15} parent=11 // pred_check_branch
        %120 = sbr.rel (%p118) target = $region16
      $region15: #{resnet101_encoder_share.15} parent=11 // pred_region
        _
      $region16: #{resnet101_encoder_share.15} parent=11 // pred_fallthru
        _
      // Predicated region
      $region17: #{resnet101_encoder_share.15} parent=11 // pred_check
        %p121 = pneg %p77
      $region18: #{resnet101_encoder_share.15} parent=11 // pred_check_branch
        %123 = sbr.rel (%p121) target = $region20
      $region19: #{resnet101_encoder_share.15} parent=11 // pred_region
        _
      $region20: #{resnet101_encoder_share.15} parent=11 // pred_fallthru
        _
    $region12: #{resnet101_encoder_share.15} parent=5 // pred_fallthru
      _
    %p124 = scmp.lt.s32.totalorder %s9, 2
    // Predicated region
    $region21: #{resnet101_encoder_share.15} parent=5 // pred_check
      %p125 = pneg %p124
    $region22: #{resnet101_encoder_share.15} parent=5 // pred_check_branch
      %127 = sbr.rel (%p125) target = $region24
    $region23: #{resnet101_encoder_share.15} parent=5 // pred_region
      // Predicated region
      $region25: #{resnet101_encoder_share.15} parent=23 // pred_check
        %p128 = pneg %p29
      $region26: #{resnet101_encoder_share.15} parent=23 // pred_check_branch
        %130 = sbr.rel (%p128) target = $region28
      $region27: #{resnet101_encoder_share.15} parent=23 // pred_region
        %p131 = scmp.lt.s32.totalorder %s9, 1
        %s132 = scalar_select %p131, %s9, 1
        %s133 = smul.addr %s132, 20
        %s134 = smul.addr %s133, 4
        %s135 = scalar_lea.vmem %s0, %s134
      $region28: #{resnet101_encoder_share.15} parent=23 // pred_fallthru
        _
    $region24: #{resnet101_encoder_share.15} parent=5 // pred_fallthru
      _
    %p136 = scmp.le.s32.totalorder 1, %s9
    %p137 = scmp.lt.s32.totalorder %s9, 3
    %p138 = pnand %p136, %p137
    %p139 = pneg %p138
    // Predicated region
    $region29: #{resnet101_encoder_share.15} parent=5 // pred_check
      _
    $region30: #{resnet101_encoder_share.15} parent=5 // pred_check_branch
      %141 = sbr.rel (%p138) target = $region32
    $region31: #{resnet101_encoder_share.15} parent=5 // pred_region
      %s142 = ssub.s32 %s9, 1
      %p143 = scmp.lt.s32.totalorder %s14, 1
      %s144 = scalar_select %p143, %s14, 1
      %s145 = smul.addr %s144, 20
      %s146 = smul.addr %s145, 4
      %s147 = scalar_lea.vmem %s0, %s146
      %p148 = pneg %p35
      %p149 = pneg %p32
      %p150 = pneg %p56
      %p151 = pneg %p53
      %p152 = pneg %p77
      %p153 = pneg %p74
      %p154 = pneg %p103
      %p155 = pneg %p100
      %p156 = scmp.lt.s32.totalorder %s14, 1
      %s157 = scalar_select %p156, %s14, 1
      %s158 = smul.addr %s157, 8
      %s159 = smul.addr %s158, 4
      %s160 = scalar_lea.vmem %s3, %s159
      %p161 = scmp.lt.s32.totalorder %s14, 1
      %s162 = scalar_select %p161, %s14, 1
      %s163 = smul.addr %s162, 20
      %s164 = smul.addr %s163, 4
      %s165 = scalar_lea.vmem %s0, %s164
      %p166 = scmp.lt.s32.totalorder %s14, 1
      %s167 = scalar_select %p166, %s14, 1
      %s168 = smul.addr %s167, 8
      %s169 = smul.addr %s168, 4
      %s170 = scalar_lea.vmem %s3, %s169
      %v172 = vld [vmem:[%s165] sm:$0xf]
      %v173 = vld [vmem:[%s165 + $0x8] sm:$0xf]
      %v174 = vld [vmem:[%s165 + $0x10] sm:$0xf]
      %v175 = vld [vmem:[%s165 + $0x18] sm:$0xf]
      %v176 = vld [vmem:[%s165 + $0x20] sm:$0xf]
      %v177 = vld [vmem:[%s165 + $0x28] sm:$0xf]
      %v178 = vld [vmem:[%s165 + $0x30] sm:$0xf]
      %v179 = vld [vmem:[%s165 + $0x38] sm:$0xf]
      %v180 = vld [vmem:[%s1] sm:$0xf]
      %v181 = vld [vmem:[%s1 + $0x4] sm:$0xf]
      %v182 = vld [vmem:[%s1 + $0x8] sm:$0xf]
      %v183 = vld [vmem:[%s1 + $0xc] sm:$0xf]
      %v184 = vld [vmem:[%s1 + $0x10] sm:$0xf]
      %v185 = vld [vmem:[%s1 + $0x14] sm:$0xf]
      %v186 = vld [vmem:[%s1 + $0x18] sm:$0xf]
      %v187 = vld [vmem:[%s1 + $0x1c] sm:$0xf]
      %v188 = vld [vmem:[%s165 + $0x4] sm:$0x1]
      %v189 = vld [vmem:[%s165 + $0xc] sm:$0x1]
      %v190 = vld [vmem:[%s165 + $0x14] sm:$0x1]
      %v191 = vld [vmem:[%s165 + $0x1c] sm:$0x1]
      %v192 = vld [vmem:[%s165 + $0x24] sm:$0x1]
      %v193 = vld [vmem:[%s165 + $0x2c] sm:$0x1]
      %v194 = vld [vmem:[%s165 + $0x34] sm:$0x1]
      %v195 = vld [vmem:[%s165 + $0x3c] sm:$0x1]
      %vm196 = vsmask.f32 3328
      %vm197 = vsmask.f32 7440
      %vm198 = vmor %vm196, %vm197
      %v200 = vshrl.u32 %v172, 16
      %v202 = vrot.slane %v200, 4
      %v203 = vshll.u32 %v172, 16
      %v205 = vrot.slane %v203, 5
      %v206 = vor.u32 %v202, %v205
      %v207 = vrot.slane %v206, 4
      %v209 = vshll.u32 %v188, 16
      %v211 = vrot.slane %v209, 5
      %v212 = vsel %vm198, %v207, %v211
      %v214 = vshrl.u32 %v173, 16
      %v216 = vrot.slane %v214, 4
      %v217 = vshll.u32 %v173, 16
      %v219 = vrot.slane %v217, 5
      %v220 = vor.u32 %v216, %v219
      %v221 = vrot.slane %v220, 4
      %v223 = vshll.u32 %v189, 16
      %v225 = vrot.slane %v223, 5
      %v226 = vsel %vm198, %v221, %v225
      %v228 = vshrl.u32 %v174, 16
      %v230 = vrot.slane %v228, 4
      %v231 = vshll.u32 %v174, 16
      %v233 = vrot.slane %v231, 5
      %v234 = vor.u32 %v230, %v233
      %v235 = vrot.slane %v234, 4
      %v237 = vshll.u32 %v190, 16
      %v239 = vrot.slane %v237, 5
      %v240 = vsel %vm198, %v235, %v239
      %v242 = vshrl.u32 %v175, 16
      %v244 = vrot.slane %v242, 4
      %v245 = vshll.u32 %v175, 16
      %v247 = vrot.slane %v245, 5
      %v248 = vor.u32 %v244, %v247
      %v249 = vrot.slane %v248, 4
      %v251 = vshll.u32 %v191, 16
      %v253 = vrot.slane %v251, 5
      %v254 = vsel %vm198, %v249, %v253
      %v256 = vshrl.u32 %v176, 16
      %v258 = vrot.slane %v256, 4
      %v259 = vshll.u32 %v176, 16
      %v261 = vrot.slane %v259, 5
      %v262 = vor.u32 %v258, %v261
      %v263 = vrot.slane %v262, 4
      %v265 = vshll.u32 %v192, 16
      %v267 = vrot.slane %v265, 5
      %v268 = vsel %vm198, %v263, %v267
      %v270 = vshrl.u32 %v177, 16
      %v272 = vrot.slane %v270, 4
      %v273 = vshll.u32 %v177, 16
      %v275 = vrot.slane %v273, 5
      %v276 = vor.u32 %v272, %v275
      %v277 = vrot.slane %v276, 4
      %v279 = vshll.u32 %v193, 16
      %v281 = vrot.slane %v279, 5
      %v282 = vsel %vm198, %v277, %v281
      %v284 = vshrl.u32 %v178, 16
      %v286 = vrot.slane %v284, 4
      %v287 = vshll.u32 %v178, 16
      %v289 = vrot.slane %v287, 5
      %v290 = vor.u32 %v286, %v289
      %v291 = vrot.slane %v290, 4
      %v293 = vshll.u32 %v194, 16
      %v295 = vrot.slane %v293, 5
      %v296 = vsel %vm198, %v291, %v295
      %v298 = vshrl.u32 %v179, 16
      %v300 = vrot.slane %v298, 4
      %v301 = vshll.u32 %v179, 16
      %v303 = vrot.slane %v301, 5
      %v304 = vor.u32 %v300, %v303
      %v305 = vrot.slane %v304, 4
      %v307 = vshll.u32 %v195, 16
      %v309 = vrot.slane %v307, 5
      %v310 = vsel %vm198, %v305, %v309
      %s311 = scalar_lea.vmem %s1, 32
      %v312 = vld [vmem:[%s311] sm:$0xf]
      %v313 = vld [vmem:[%s311 + $0x4] sm:$0xf]
      %v314 = vld [vmem:[%s311 + $0x8] sm:$0xf]
      %v315 = vld [vmem:[%s311 + $0xc] sm:$0xf]
      %v316 = vld [vmem:[%s311 + $0x10] sm:$0xf]
      %v317 = vld [vmem:[%s311 + $0x14] sm:$0xf]
      %v318 = vld [vmem:[%s311 + $0x18] sm:$0xf]
      %v319 = vld [vmem:[%s311 + $0x1c] sm:$0xf]
      %v320 = vunpack.c.l.b16 %v212
      %v321 = vunpack.c.l.b16 %v226
      %v322 = vunpack.c.l.b16 %v240
      %v323 = vunpack.c.l.b16 %v254
      %v324 = vunpack.c.l.b16 %v268
      %v325 = vunpack.c.l.b16 %v282
      %v326 = vunpack.c.l.b16 %v296
      %v327 = vunpack.c.l.b16 %v310
      %v328 = vpack.c.b16 %v321, %v320
      %v329 = vpack.c.b16 %v323, %v322
      %v330 = vpack.c.b16 %v325, %v324
      %v331 = vpack.c.b16 %v327, %v326
      %v340 = vunpack.c.l.b16 %v312
      %v341 = vunpack.c.l.b16 %v313
      %v342 = vunpack.c.l.b16 %v314
      %v343 = vunpack.c.l.b16 %v315
      %v344 = vunpack.c.l.b16 %v316
      %v345 = vunpack.c.l.b16 %v317
      %v346 = vunpack.c.l.b16 %v318
      %v347 = vunpack.c.l.b16 %v319
      %v348 = vpack.c.b16 %v341, %v340
      %v349 = vpack.c.b16 %v343, %v342
      %v350 = vpack.c.b16 %v345, %v344
      %v351 = vpack.c.b16 %v347, %v346
      %vm356 = vcmask 523264
      %v358 = vsel %vm356, %v328, 0
      %v361 = vsel %vm356, %v329, 0
      %v364 = vsel %vm356, %v330, 0
      %v367 = vsel %vm356, %v331, 0
      %369 = vmatpush.bf16.msra.mxu0 0
      %370 = vmatpush.bf16.msra.mxu0 0
      %371 = vmatpush.bf16.msra.mxu0 0
      %372 = vmatpush.bf16.msra.mxu0 0
      %373 = vmatpush.bf16.msra.mxu0 %v351
      %374 = vmatpush.bf16.msra.mxu0 %v350
      %375 = vmatpush.bf16.msra.mxu0 %v349
      %376 = vmatpush.bf16.msra.mxu0 %v348
      %377 = vmatmul.bf16.gmra.mxu0 %v358
      %v378 = vpop.f32.mrf.mxu0
      %v379 = vadd.f32 0.0, %v378
      %v380 = vpop.f32.mrf.mxu0
      %v381 = vadd.f32 0.0, %v380
      %382 = vmatmul.bf16.gmra.mxu0 %v361
      %v383 = vpop.f32.mrf.mxu0
      %v384 = vadd.f32 0.0, %v383
      %v385 = vpop.f32.mrf.mxu0
      %v386 = vadd.f32 0.0, %v385
      %387 = vmatmul.bf16.gmra.mxu0 %v364
      %v388 = vpop.f32.mrf.mxu0
      %v389 = vadd.f32 0.0, %v388
      %v390 = vpop.f32.mrf.mxu0
      %v391 = vadd.f32 0.0, %v390
      %392 = vmatmul.bf16.gmra.mxu0 %v367
      %v393 = vpop.f32.mrf.mxu0
      %v394 = vadd.f32 0.0, %v393
      %v395 = vpop.f32.mrf.mxu0
      %v396 = vadd.f32 0.0, %v395
      %397 = vdwg.mxu0
      %v406 = vunpack.c.l.b16 %v172
      %v407 = vunpack.c.l.b16 %v173
      %v408 = vunpack.c.l.b16 %v174
      %v409 = vunpack.c.l.b16 %v175
      %v410 = vunpack.c.l.b16 %v176
      %v411 = vunpack.c.l.b16 %v177
      %v412 = vunpack.c.l.b16 %v178
      %v413 = vunpack.c.l.b16 %v179
      %v414 = vpack.c.b16 %v407, %v406
      %v415 = vpack.c.b16 %v409, %v408
      %v416 = vpack.c.b16 %v411, %v410
      %v417 = vpack.c.b16 %v413, %v412
      %v426 = vunpack.c.l.b16 %v180
      %v427 = vunpack.c.l.b16 %v181
      %v428 = vunpack.c.l.b16 %v182
      %v429 = vunpack.c.l.b16 %v183
      %v430 = vunpack.c.l.b16 %v184
      %v431 = vunpack.c.l.b16 %v185
      %v432 = vunpack.c.l.b16 %v186
      %v433 = vunpack.c.l.b16 %v187
      %v434 = vpack.c.b16 %v427, %v426
      %v435 = vpack.c.b16 %v429, %v428
      %v436 = vpack.c.b16 %v431, %v430
      %v437 = vpack.c.b16 %v433, %v432
      %v443 = vsel %vm356, %v414, 0
      %v446 = vsel %vm356, %v415, 0
      %v449 = vsel %vm356, %v416, 0
      %v452 = vsel %vm356, %v417, 0
      %454 = vmatpush.bf16.msra.mxu0 0
      %455 = vmatpush.bf16.msra.mxu0 0
      %456 = vmatpush.bf16.msra.mxu0 0
      %457 = vmatpush.bf16.msra.mxu0 0
      %458 = vmatpush.bf16.msra.mxu0 %v437
      %459 = vmatpush.bf16.msra.mxu0 %v436
      %460 = vmatpush.bf16.msra.mxu0 %v435
      %461 = vmatpush.bf16.msra.mxu0 %v434
      %462 = vmatmul.bf16.gmra.mxu0 %v443
      %v463 = vpop.f32.mrf.mxu0
      %v464 = vadd.f32 %v379, %v463
      %v465 = vpop.f32.mrf.mxu0
      %v466 = vadd.f32 %v381, %v465
      %467 = vmatmul.bf16.gmra.mxu0 %v446
      %v468 = vpop.f32.mrf.mxu0
      %v469 = vadd.f32 %v384, %v468
      %v470 = vpop.f32.mrf.mxu0
      %v471 = vadd.f32 %v386, %v470
      %472 = vmatmul.bf16.gmra.mxu0 %v449
      %v473 = vpop.f32.mrf.mxu0
      %v474 = vadd.f32 %v389, %v473
      %v475 = vpop.f32.mrf.mxu0
      %v476 = vadd.f32 %v391, %v475
      %477 = vmatmul.bf16.gmra.mxu0 %v452
      %v478 = vpop.f32.mrf.mxu0
      %v479 = vadd.f32 %v394, %v478
      %v480 = vpop.f32.mrf.mxu0
      %v481 = vadd.f32 %v396, %v480
      %482 = vdwg.mxu0
      %v483 = vld [vmem:[%s165] sm:$0xe]
      %v484 = vld [vmem:[%s165 + $0x8] sm:$0xe]
      %v485 = vld [vmem:[%s165 + $0x10] sm:$0xe]
      %v486 = vld [vmem:[%s165 + $0x18] sm:$0xe]
      %v487 = vld [vmem:[%s165 + $0x20] sm:$0xe]
      %v488 = vld [vmem:[%s165 + $0x28] sm:$0xe]
      %v489 = vld [vmem:[%s165 + $0x30] sm:$0xe]
      %v490 = vld [vmem:[%s165 + $0x38] sm:$0xe]
      %vm507 = vcmask 1042432
      %vm508 = vcmask 1046532
      %vm509 = vmor %vm507, %vm508
      %v510 = vrot.slane %v483, 5
      %v511 = vrot.slane %v510, 4
      %v512 = vrot.slane %v188, 5
      %v513 = vsel %vm509, %v511, %v512
      %v514 = vrot.slane %v484, 5
      %v515 = vrot.slane %v514, 4
      %v516 = vrot.slane %v189, 5
      %v517 = vsel %vm509, %v515, %v516
      %v518 = vrot.slane %v485, 5
      %v519 = vrot.slane %v518, 4
      %v520 = vrot.slane %v190, 5
      %v521 = vsel %vm509, %v519, %v520
      %v522 = vrot.slane %v486, 5
      %v523 = vrot.slane %v522, 4
      %v524 = vrot.slane %v191, 5
      %v525 = vsel %vm509, %v523, %v524
      %v526 = vrot.slane %v487, 5
      %v527 = vrot.slane %v526, 4
      %v528 = vrot.slane %v192, 5
      %v529 = vsel %vm509, %v527, %v528
      %v530 = vrot.slane %v488, 5
      %v531 = vrot.slane %v530, 4
      %v532 = vrot.slane %v193, 5
      %v533 = vsel %vm509, %v531, %v532
      %v534 = vrot.slane %v489, 5
      %v535 = vrot.slane %v534, 4
      %v536 = vrot.slane %v194, 5
      %v537 = vsel %vm509, %v535, %v536
      %v538 = vrot.slane %v490, 5
      %v539 = vrot.slane %v538, 4
      %v540 = vrot.slane %v195, 5
      %v541 = vsel %vm509, %v539, %v540
      %s542 = scalar_lea.vmem %s1, 64
      %v543 = vld [vmem:[%s542] sm:$0xf]
      %v544 = vld [vmem:[%s542 + $0x4] sm:$0xf]
      %v545 = vld [vmem:[%s542 + $0x8] sm:$0xf]
      %v546 = vld [vmem:[%s542 + $0xc] sm:$0xf]
      %v547 = vld [vmem:[%s542 + $0x10] sm:$0xf]
      %v548 = vld [vmem:[%s542 + $0x14] sm:$0xf]
      %v549 = vld [vmem:[%s542 + $0x18] sm:$0xf]
      %v550 = vld [vmem:[%s542 + $0x1c] sm:$0xf]
      %v551 = vunpack.c.l.b16 %v513
      %v552 = vunpack.c.l.b16 %v517
      %v553 = vunpack.c.l.b16 %v521
      %v554 = vunpack.c.l.b16 %v525
      %v555 = vunpack.c.l.b16 %v529
      %v556 = vunpack.c.l.b16 %v533
      %v557 = vunpack.c.l.b16 %v537
      %v558 = vunpack.c.l.b16 %v541
      %v559 = vpack.c.b16 %v552, %v551
      %v560 = vpack.c.b16 %v554, %v553
      %v561 = vpack.c.b16 %v556, %v555
      %v562 = vpack.c.b16 %v558, %v557
      %v571 = vunpack.c.l.b16 %v543
      %v572 = vunpack.c.l.b16 %v544
      %v573 = vunpack.c.l.b16 %v545
      %v574 = vunpack.c.l.b16 %v546
      %v575 = vunpack.c.l.b16 %v547
      %v576 = vunpack.c.l.b16 %v548
      %v577 = vunpack.c.l.b16 %v549
      %v578 = vunpack.c.l.b16 %v550
      %v579 = vpack.c.b16 %v572, %v571
      %v580 = vpack.c.b16 %v574, %v573
      %v581 = vpack.c.b16 %v576, %v575
      %v582 = vpack.c.b16 %v578, %v577
      %v588 = vsel %vm356, %v559, 0
      %v591 = vsel %vm356, %v560, 0
      %v594 = vsel %vm356, %v561, 0
      %v597 = vsel %vm356, %v562, 0
      %599 = vmatpush.bf16.msra.mxu0 0
      %600 = vmatpush.bf16.msra.mxu0 0
      %601 = vmatpush.bf16.msra.mxu0 0
      %602 = vmatpush.bf16.msra.mxu0 0
      %603 = vmatpush.bf16.msra.mxu0 %v582
      %604 = vmatpush.bf16.msra.mxu0 %v581
      %605 = vmatpush.bf16.msra.mxu0 %v580
      %606 = vmatpush.bf16.msra.mxu0 %v579
      %607 = vmatmul.bf16.gmra.mxu0 %v588
      %v608 = vpop.f32.mrf.mxu0
      %v609 = vadd.f32 0.0, %v608
      %v610 = vpop.f32.mrf.mxu0
      %v611 = vadd.f32 0.0, %v610
      %612 = vmatmul.bf16.gmra.mxu0 %v591
      %v613 = vpop.f32.mrf.mxu0
      %v614 = vadd.f32 0.0, %v613
      %v615 = vpop.f32.mrf.mxu0
      %v616 = vadd.f32 0.0, %v615
      %617 = vmatmul.bf16.gmra.mxu0 %v594
      %v618 = vpop.f32.mrf.mxu0
      %v619 = vadd.f32 0.0, %v618
      %v620 = vpop.f32.mrf.mxu0
      %v621 = vadd.f32 0.0, %v620
      %622 = vmatmul.bf16.gmra.mxu0 %v597
      %v623 = vpop.f32.mrf.mxu0
      %v624 = vadd.f32 0.0, %v623
      %v625 = vpop.f32.mrf.mxu0
      %v626 = vadd.f32 0.0, %v625
      %627 = vdwg.mxu0
      %v628 = vadd.f32 %v464, %v609
      %v629 = vadd.f32 %v466, %v611
      %v630 = vadd.f32 %v469, %v614
      %v631 = vadd.f32 %v471, %v616
      %v632 = vadd.f32 %v474, %v619
      %v633 = vadd.f32 %v476, %v621
      %v634 = vadd.f32 %v479, %v624
      %v635 = vadd.f32 %v481, %v626
      %s636 = scalar_lea.vmem %s165, 8
      %v637 = vld [vmem:[%s636] sm:$0xf]
      %v638 = vld [vmem:[%s636 + $0x8] sm:$0xf]
      %v639 = vld [vmem:[%s636 + $0x10] sm:$0xf]
      %v640 = vld [vmem:[%s636 + $0x18] sm:$0xf]
      %v641 = vld [vmem:[%s636 + $0x20] sm:$0xf]
      %v642 = vld [vmem:[%s636 + $0x28] sm:$0xf]
      %v643 = vld [vmem:[%s636 + $0x30] sm:$0xf]
      %v644 = vld [vmem:[%s636 + $0x38] sm:$0xf]
      %s645 = scalar_lea.vmem %s1, 96
      %v646 = vld [vmem:[%s645] sm:$0xf]
      %v647 = vld [vmem:[%s645 + $0x4] sm:$0xf]
      %v648 = vld [vmem:[%s645 + $0x8] sm:$0xf]
      %v649 = vld [vmem:[%s645 + $0xc] sm:$0xf]
      %v650 = vld [vmem:[%s645 + $0x10] sm:$0xf]
      %v651 = vld [vmem:[%s645 + $0x14] sm:$0xf]
      %v652 = vld [vmem:[%s645 + $0x18] sm:$0xf]
      %v653 = vld [vmem:[%s645 + $0x1c] sm:$0xf]
      %v662 = vunpack.c.l.b16 %v637
      %v663 = vunpack.c.l.b16 %v638
      %v664 = vunpack.c.l.b16 %v639
      %v665 = vunpack.c.l.b16 %v640
      %v666 = vunpack.c.l.b16 %v641
      %v667 = vunpack.c.l.b16 %v642
      %v668 = vunpack.c.l.b16 %v643
      %v669 = vunpack.c.l.b16 %v644
      %v670 = vpack.c.b16 %v663, %v662
      %v671 = vpack.c.b16 %v665, %v664
      %v672 = vpack.c.b16 %v667, %v666
      %v673 = vpack.c.b16 %v669, %v668
      %v682 = vunpack.c.l.b16 %v646
      %v683 = vunpack.c.l.b16 %v647
      %v684 = vunpack.c.l.b16 %v648
      %v685 = vunpack.c.l.b16 %v649
      %v686 = vunpack.c.l.b16 %v650
      %v687 = vunpack.c.l.b16 %v651
      %v688 = vunpack.c.l.b16 %v652
      %v689 = vunpack.c.l.b16 %v653
      %v690 = vpack.c.b16 %v683, %v682
      %v691 = vpack.c.b16 %v685, %v684
      %v692 = vpack.c.b16 %v687, %v686
      %v693 = vpack.c.b16 %v689, %v688
      %v699 = vsel %vm356, %v670, 0
      %v702 = vsel %vm356, %v671, 0
      %v705 = vsel %vm356, %v672, 0
      %v708 = vsel %vm356, %v673, 0
      %710 = vmatpush.bf16.msra.mxu0 0
      %711 = vmatpush.bf16.msra.mxu0 0
      %712 = vmatpush.bf16.msra.mxu0 0
      %713 = vmatpush.bf16.msra.mxu0 0
      %714 = vmatpush.bf16.msra.mxu0 %v693
      %715 = vmatpush.bf16.msra.mxu0 %v692
      %716 = vmatpush.bf16.msra.mxu0 %v691
      %717 = vmatpush.bf16.msra.mxu0 %v690
      %718 = vmatmul.bf16.gmra.mxu0 %v699
      %v719 = vpop.f32.mrf.mxu0
      %v720 = vadd.f32 0.0, %v719
      %v721 = vpop.f32.mrf.mxu0
      %v722 = vadd.f32 0.0, %v721
      %723 = vmatmul.bf16.gmra.mxu0 %v702
      %v724 = vpop.f32.mrf.mxu0
      %v725 = vadd.f32 0.0, %v724
      %v726 = vpop.f32.mrf.mxu0
      %v727 = vadd.f32 0.0, %v726
      %728 = vmatmul.bf16.gmra.mxu0 %v705
      %v729 = vpop.f32.mrf.mxu0
      %v730 = vadd.f32 0.0, %v729
      %v731 = vpop.f32.mrf.mxu0
      %v732 = vadd.f32 0.0, %v731
      %733 = vmatmul.bf16.gmra.mxu0 %v708
      %v734 = vpop.f32.mrf.mxu0
      %v735 = vadd.f32 0.0, %v734
      %v736 = vpop.f32.mrf.mxu0
      %v737 = vadd.f32 0.0, %v736
      %738 = vdwg.mxu0
      %v739 = vadd.f32 %v628, %v720
      %v740 = vadd.f32 %v629, %v722
      %v741 = vadd.f32 %v630, %v725
      %v742 = vadd.f32 %v631, %v727
      %v743 = vadd.f32 %v632, %v730
      %v744 = vadd.f32 %v633, %v732
      %v745 = vadd.f32 %v634, %v735
      %v746 = vadd.f32 %v635, %v737
      %v747 = vld [vmem:[%s636] sm:$0xf]
      %v748 = vld [vmem:[%s636 + $0x4] sm:$0x1]
      %v749 = vld [vmem:[%s636 + $0x8] sm:$0xf]
      %v750 = vld [vmem:[%s636 + $0xc] sm:$0x1]
      %v751 = vld [vmem:[%s636 + $0x10] sm:$0xf]
      %v752 = vld [vmem:[%s636 + $0x14] sm:$0x1]
      %v753 = vld [vmem:[%s636 + $0x18] sm:$0xf]
      %v754 = vld [vmem:[%s636 + $0x1c] sm:$0x1]
      %v755 = vld [vmem:[%s636 + $0x20] sm:$0xf]
      %v756 = vld [vmem:[%s636 + $0x24] sm:$0x1]
      %v757 = vld [vmem:[%s636 + $0x28] sm:$0xf]
      %v758 = vld [vmem:[%s636 + $0x2c] sm:$0x1]
      %v759 = vld [vmem:[%s636 + $0x30] sm:$0xf]
      %v760 = vld [vmem:[%s636 + $0x34] sm:$0x1]
      %v761 = vld [vmem:[%s636 + $0x38] sm:$0xf]
      %v762 = vld [vmem:[%s636 + $0x3c] sm:$0x1]
      %v764 = vshrl.u32 %v747, 16
      %v766 = vrot.slane %v764, 4
      %v767 = vshll.u32 %v747, 16
      %v769 = vrot.slane %v767, 5
      %v770 = vor.u32 %v766, %v769
      %v771 = vrot.slane %v770, 4
      %v773 = vshll.u32 %v748, 16
      %v775 = vrot.slane %v773, 5
      %v776 = vsel %vm198, %v771, %v775
      %v778 = vshrl.u32 %v749, 16
      %v780 = vrot.slane %v778, 4
      %v781 = vshll.u32 %v749, 16
      %v783 = vrot.slane %v781, 5
      %v784 = vor.u32 %v780, %v783
      %v785 = vrot.slane %v784, 4
      %v787 = vshll.u32 %v750, 16
      %v789 = vrot.slane %v787, 5
      %v790 = vsel %vm198, %v785, %v789
      %v792 = vshrl.u32 %v751, 16
      %v794 = vrot.slane %v792, 4
      %v795 = vshll.u32 %v751, 16
      %v797 = vrot.slane %v795, 5
      %v798 = vor.u32 %v794, %v797
      %v799 = vrot.slane %v798, 4
      %v801 = vshll.u32 %v752, 16
      %v803 = vrot.slane %v801, 5
      %v804 = vsel %vm198, %v799, %v803
      %v806 = vshrl.u32 %v753, 16
      %v808 = vrot.slane %v806, 4
      %v809 = vshll.u32 %v753, 16
      %v811 = vrot.slane %v809, 5
      %v812 = vor.u32 %v808, %v811
      %v813 = vrot.slane %v812, 4
      %v815 = vshll.u32 %v754, 16
      %v817 = vrot.slane %v815, 5
      %v818 = vsel %vm198, %v813, %v817
      %v820 = vshrl.u32 %v755, 16
      %v822 = vrot.slane %v820, 4
      %v823 = vshll.u32 %v755, 16
      %v825 = vrot.slane %v823, 5
      %v826 = vor.u32 %v822, %v825
      %v827 = vrot.slane %v826, 4
      %v829 = vshll.u32 %v756, 16
      %v831 = vrot.slane %v829, 5
      %v832 = vsel %vm198, %v827, %v831
      %v834 = vshrl.u32 %v757, 16
      %v836 = vrot.slane %v834, 4
      %v837 = vshll.u32 %v757, 16
      %v839 = vrot.slane %v837, 5
      %v840 = vor.u32 %v836, %v839
      %v841 = vrot.slane %v840, 4
      %v843 = vshll.u32 %v758, 16
      %v845 = vrot.slane %v843, 5
      %v846 = vsel %vm198, %v841, %v845
      %v848 = vshrl.u32 %v759, 16
      %v850 = vrot.slane %v848, 4
      %v851 = vshll.u32 %v759, 16
      %v853 = vrot.slane %v851, 5
      %v854 = vor.u32 %v850, %v853
      %v855 = vrot.slane %v854, 4
      %v857 = vshll.u32 %v760, 16
      %v859 = vrot.slane %v857, 5
      %v860 = vsel %vm198, %v855, %v859
      %v862 = vshrl.u32 %v761, 16
      %v864 = vrot.slane %v862, 4
      %v865 = vshll.u32 %v761, 16
      %v867 = vrot.slane %v865, 5
      %v868 = vor.u32 %v864, %v867
      %v869 = vrot.slane %v868, 4
      %v871 = vshll.u32 %v762, 16
      %v873 = vrot.slane %v871, 5
      %v874 = vsel %vm198, %v869, %v873
      %s875 = scalar_lea.vmem %s1, 128
      %v876 = vld [vmem:[%s875] sm:$0xf]
      %v877 = vld [vmem:[%s875 + $0x4] sm:$0xf]
      %v878 = vld [vmem:[%s875 + $0x8] sm:$0xf]
      %v879 = vld [vmem:[%s875 + $0xc] sm:$0xf]
      %v880 = vld [vmem:[%s875 + $0x10] sm:$0xf]
      %v881 = vld [vmem:[%s875 + $0x14] sm:$0xf]
      %v882 = vld [vmem:[%s875 + $0x18] sm:$0xf]
      %v883 = vld [vmem:[%s875 + $0x1c] sm:$0xf]
      %v884 = vunpack.c.l.b16 %v776
      %v885 = vunpack.c.l.b16 %v790
      %v886 = vunpack.c.l.b16 %v804
      %v887 = vunpack.c.l.b16 %v818
      %v888 = vunpack.c.l.b16 %v832
      %v889 = vunpack.c.l.b16 %v846
      %v890 = vunpack.c.l.b16 %v860
      %v891 = vunpack.c.l.b16 %v874
      %v892 = vpack.c.b16 %v885, %v884
      %v893 = vpack.c.b16 %v887, %v886
      %v894 = vpack.c.b16 %v889, %v888
      %v895 = vpack.c.b16 %v891, %v890
      %v904 = vunpack.c.l.b16 %v876
      %v905 = vunpack.c.l.b16 %v877
      %v906 = vunpack.c.l.b16 %v878
      %v907 = vunpack.c.l.b16 %v879
      %v908 = vunpack.c.l.b16 %v880
      %v909 = vunpack.c.l.b16 %v881
      %v910 = vunpack.c.l.b16 %v882
      %v911 = vunpack.c.l.b16 %v883
      %v912 = vpack.c.b16 %v905, %v904
      %v913 = vpack.c.b16 %v907, %v906
      %v914 = vpack.c.b16 %v909, %v908
      %v915 = vpack.c.b16 %v911, %v910
      %v921 = vsel %vm356, %v892, 0
      %v924 = vsel %vm356, %v893, 0
      %v927 = vsel %vm356, %v894, 0
      %v930 = vsel %vm356, %v895, 0
      %932 = vmatpush.bf16.msra.mxu0 0
      %933 = vmatpush.bf16.msra.mxu0 0
      %934 = vmatpush.bf16.msra.mxu0 0
      %935 = vmatpush.bf16.msra.mxu0 0
      %936 = vmatpush.bf16.msra.mxu0 %v915
      %937 = vmatpush.bf16.msra.mxu0 %v914
      %938 = vmatpush.bf16.msra.mxu0 %v913
      %939 = vmatpush.bf16.msra.mxu0 %v912
      %940 = vmatmul.bf16.gmra.mxu0 %v921
      %v941 = vpop.f32.mrf.mxu0
      %v942 = vadd.f32 0.0, %v941
      %v943 = vpop.f32.mrf.mxu0
      %v944 = vadd.f32 0.0, %v943
      %945 = vmatmul.bf16.gmra.mxu0 %v924
      %v946 = vpop.f32.mrf.mxu0
      %v947 = vadd.f32 0.0, %v946
      %v948 = vpop.f32.mrf.mxu0
      %v949 = vadd.f32 0.0, %v948
      %950 = vmatmul.bf16.gmra.mxu0 %v927
      %v951 = vpop.f32.mrf.mxu0
      %v952 = vadd.f32 0.0, %v951
      %v953 = vpop.f32.mrf.mxu0
      %v954 = vadd.f32 0.0, %v953
      %955 = vmatmul.bf16.gmra.mxu0 %v930
      %v956 = vpop.f32.mrf.mxu0
      %v957 = vadd.f32 0.0, %v956
      %v958 = vpop.f32.mrf.mxu0
      %v959 = vadd.f32 0.0, %v958
      %960 = vdwg.mxu0
      %v961 = vadd.f32 %v739, %v942
      %v962 = vadd.f32 %v740, %v944
      %v963 = vadd.f32 %v741, %v947
      %v964 = vadd.f32 %v742, %v949
      %v965 = vadd.f32 %v743, %v952
      %v966 = vadd.f32 %v744, %v954
      %v967 = vadd.f32 %v745, %v957
      %v968 = vadd.f32 %v746, %v959
      %v969 = vld [vmem:[%s636] sm:$0xe]
      %v970 = vld [vmem:[%s636 + $0x8] sm:$0xe]
      %v971 = vld [vmem:[%s636 + $0x10] sm:$0xe]
      %v972 = vld [vmem:[%s636 + $0x18] sm:$0xe]
      %v973 = vld [vmem:[%s636 + $0x20] sm:$0xe]
      %v974 = vld [vmem:[%s636 + $0x28] sm:$0xe]
      %v975 = vld [vmem:[%s636 + $0x30] sm:$0xe]
      %v976 = vld [vmem:[%s636 + $0x38] sm:$0xe]
      %v993 = vrot.slane %v969, 5
      %v994 = vrot.slane %v993, 4
      %v995 = vrot.slane %v748, 5
      %v996 = vsel %vm509, %v994, %v995
      %v997 = vrot.slane %v970, 5
      %v998 = vrot.slane %v997, 4
      %v999 = vrot.slane %v750, 5
      %v1000 = vsel %vm509, %v998, %v999
      %v1001 = vrot.slane %v971, 5
      %v1002 = vrot.slane %v1001, 4
      %v1003 = vrot.slane %v752, 5
      %v1004 = vsel %vm509, %v1002, %v1003
      %v1005 = vrot.slane %v972, 5
      %v1006 = vrot.slane %v1005, 4
      %v1007 = vrot.slane %v754, 5
      %v1008 = vsel %vm509, %v1006, %v1007
      %v1009 = vrot.slane %v973, 5
      %v1010 = vrot.slane %v1009, 4
      %v1011 = vrot.slane %v756, 5
      %v1012 = vsel %vm509, %v1010, %v1011
      %v1013 = vrot.slane %v974, 5
      %v1014 = vrot.slane %v1013, 4
      %v1015 = vrot.slane %v758, 5
      %v1016 = vsel %vm509, %v1014, %v1015
      %v1017 = vrot.slane %v975, 5
      %v1018 = vrot.slane %v1017, 4
      %v1019 = vrot.slane %v760, 5
      %v1020 = vsel %vm509, %v1018, %v1019
      %v1021 = vrot.slane %v976, 5
      %v1022 = vrot.slane %v1021, 4
      %v1023 = vrot.slane %v762, 5
      %v1024 = vsel %vm509, %v1022, %v1023
      %s1025 = scalar_lea.vmem %s1, 160
      %v1026 = vld [vmem:[%s1025] sm:$0xf]
      %v1027 = vld [vmem:[%s1025 + $0x4] sm:$0xf]
      %v1028 = vld [vmem:[%s1025 + $0x8] sm:$0xf]
      %v1029 = vld [vmem:[%s1025 + $0xc] sm:$0xf]
      %v1030 = vld [vmem:[%s1025 + $0x10] sm:$0xf]
      %v1031 = vld [vmem:[%s1025 + $0x14] sm:$0xf]
      %v1032 = vld [vmem:[%s1025 + $0x18] sm:$0xf]
      %v1033 = vld [vmem:[%s1025 + $0x1c] sm:$0xf]
      %v1034 = vunpack.c.l.b16 %v996
      %v1035 = vunpack.c.l.b16 %v1000
      %v1036 = vunpack.c.l.b16 %v1004
      %v1037 = vunpack.c.l.b16 %v1008
      %v1038 = vunpack.c.l.b16 %v1012
      %v1039 = vunpack.c.l.b16 %v1016
      %v1040 = vunpack.c.l.b16 %v1020
      %v1041 = vunpack.c.l.b16 %v1024
      %v1042 = vpack.c.b16 %v1035, %v1034
      %v1043 = vpack.c.b16 %v1037, %v1036
      %v1044 = vpack.c.b16 %v1039, %v1038
      %v1045 = vpack.c.b16 %v1041, %v1040
      %v1054 = vunpack.c.l.b16 %v1026
      %v1055 = vunpack.c.l.b16 %v1027
      %v1056 = vunpack.c.l.b16 %v1028
      %v1057 = vunpack.c.l.b16 %v1029
      %v1058 = vunpack.c.l.b16 %v1030
      %v1059 = vunpack.c.l.b16 %v1031
      %v1060 = vunpack.c.l.b16 %v1032
      %v1061 = vunpack.c.l.b16 %v1033
      %v1062 = vpack.c.b16 %v1055, %v1054
      %v1063 = vpack.c.b16 %v1057, %v1056
      %v1064 = vpack.c.b16 %v1059, %v1058
      %v1065 = vpack.c.b16 %v1061, %v1060
      %v1071 = vsel %vm356, %v1042, 0
      %v1074 = vsel %vm356, %v1043, 0
      %v1077 = vsel %vm356, %v1044, 0
      %v1080 = vsel %vm356, %v1045, 0
      %1082 = vmatpush.bf16.msra.mxu0 0
      %1083 = vmatpush.bf16.msra.mxu0 0
      %1084 = vmatpush.bf16.msra.mxu0 0
      %1085 = vmatpush.bf16.msra.mxu0 0
      %1086 = vmatpush.bf16.msra.mxu0 %v1065
      %1087 = vmatpush.bf16.msra.mxu0 %v1064
      %1088 = vmatpush.bf16.msra.mxu0 %v1063
      %1089 = vmatpush.bf16.msra.mxu0 %v1062
      %1090 = vmatmul.bf16.gmra.mxu0 %v1071
      %v1091 = vpop.f32.mrf.mxu0
      %v1092 = vadd.f32 0.0, %v1091
      %v1093 = vpop.f32.mrf.mxu0
      %v1094 = vadd.f32 0.0, %v1093
      %1095 = vmatmul.bf16.gmra.mxu0 %v1074
      %v1096 = vpop.f32.mrf.mxu0
      %v1097 = vadd.f32 0.0, %v1096
      %v1098 = vpop.f32.mrf.mxu0
      %v1099 = vadd.f32 0.0, %v1098
      %1100 = vmatmul.bf16.gmra.mxu0 %v1077
      %v1101 = vpop.f32.mrf.mxu0
      %v1102 = vadd.f32 0.0, %v1101
      %v1103 = vpop.f32.mrf.mxu0
      %v1104 = vadd.f32 0.0, %v1103
      %1105 = vmatmul.bf16.gmra.mxu0 %v1080
      %v1106 = vpop.f32.mrf.mxu0
      %v1107 = vadd.f32 0.0, %v1106
      %v1108 = vpop.f32.mrf.mxu0
      %v1109 = vadd.f32 0.0, %v1108
      %1110 = vdwg.mxu0
      %v1111 = vadd.f32 %v961, %v1092
      %v1112 = vadd.f32 %v962, %v1094
      %v1113 = vadd.f32 %v963, %v1097
      %v1114 = vadd.f32 %v964, %v1099
      %v1115 = vadd.f32 %v965, %v1102
      %v1116 = vadd.f32 %v966, %v1104
      %v1117 = vadd.f32 %v967, %v1107
      %v1118 = vadd.f32 %v968, %v1109
      %s1119 = scalar_lea.vmem %s165, 16
      %v1120 = vld [vmem:[%s1119] sm:$0xf]
      %v1121 = vld [vmem:[%s1119 + $0x8] sm:$0xf]
      %v1122 = vld [vmem:[%s1119 + $0x10] sm:$0xf]
      %v1123 = vld [vmem:[%s1119 + $0x18] sm:$0xf]
      %v1124 = vld [vmem:[%s1119 + $0x20] sm:$0xf]
      %v1125 = vld [vmem:[%s1119 + $0x28] sm:$0xf]
      %v1126 = vld [vmem:[%s1119 + $0x30] sm:$0xf]
      %v1127 = vld [vmem:[%s1119 + $0x38] sm:$0xf]
      %s1128 = scalar_lea.vmem %s1, 192
      %v1129 = vld [vmem:[%s1128] sm:$0xf]
      %v1130 = vld [vmem:[%s1128 + $0x4] sm:$0xf]
      %v1131 = vld [vmem:[%s1128 + $0x8] sm:$0xf]
      %v1132 = vld [vmem:[%s1128 + $0xc] sm:$0xf]
      %v1133 = vld [vmem:[%s1128 + $0x10] sm:$0xf]
      %v1134 = vld [vmem:[%s1128 + $0x14] sm:$0xf]
      %v1135 = vld [vmem:[%s1128 + $0x18] sm:$0xf]
      %v1136 = vld [vmem:[%s1128 + $0x1c] sm:$0xf]
      %v1145 = vunpack.c.l.b16 %v1120
      %v1146 = vunpack.c.l.b16 %v1121
      %v1147 = vunpack.c.l.b16 %v1122
      %v1148 = vunpack.c.l.b16 %v1123
      %v1149 = vunpack.c.l.b16 %v1124
      %v1150 = vunpack.c.l.b16 %v1125
      %v1151 = vunpack.c.l.b16 %v1126
      %v1152 = vunpack.c.l.b16 %v1127
      %v1153 = vpack.c.b16 %v1146, %v1145
      %v1154 = vpack.c.b16 %v1148, %v1147
      %v1155 = vpack.c.b16 %v1150, %v1149
      %v1156 = vpack.c.b16 %v1152, %v1151
      %v1165 = vunpack.c.l.b16 %v1129
      %v1166 = vunpack.c.l.b16 %v1130
      %v1167 = vunpack.c.l.b16 %v1131
      %v1168 = vunpack.c.l.b16 %v1132
      %v1169 = vunpack.c.l.b16 %v1133
      %v1170 = vunpack.c.l.b16 %v1134
      %v1171 = vunpack.c.l.b16 %v1135
      %v1172 = vunpack.c.l.b16 %v1136
      %v1173 = vpack.c.b16 %v1166, %v1165
      %v1174 = vpack.c.b16 %v1168, %v1167
      %v1175 = vpack.c.b16 %v1170, %v1169
      %v1176 = vpack.c.b16 %v1172, %v1171
      %v1182 = vsel %vm356, %v1153, 0
      %v1185 = vsel %vm356, %v1154, 0
      %v1188 = vsel %vm356, %v1155, 0
      %v1191 = vsel %vm356, %v1156, 0
      %1193 = vmatpush.bf16.msra.mxu0 0
      %1194 = vmatpush.bf16.msra.mxu0 0
      %1195 = vmatpush.bf16.msra.mxu0 0
      %1196 = vmatpush.bf16.msra.mxu0 0
      %1197 = vmatpush.bf16.msra.mxu0 %v1176
      %1198 = vmatpush.bf16.msra.mxu0 %v1175
      %1199 = vmatpush.bf16.msra.mxu0 %v1174
      %1200 = vmatpush.bf16.msra.mxu0 %v1173
      %1201 = vmatmul.bf16.gmra.mxu0 %v1182
      %v1202 = vpop.f32.mrf.mxu0
      %v1203 = vadd.f32 0.0, %v1202
      %v1204 = vpop.f32.mrf.mxu0
      %v1205 = vadd.f32 0.0, %v1204
      %1206 = vmatmul.bf16.gmra.mxu0 %v1185
      %v1207 = vpop.f32.mrf.mxu0
      %v1208 = vadd.f32 0.0, %v1207
      %v1209 = vpop.f32.mrf.mxu0
      %v1210 = vadd.f32 0.0, %v1209
      %1211 = vmatmul.bf16.gmra.mxu0 %v1188
      %v1212 = vpop.f32.mrf.mxu0
      %v1213 = vadd.f32 0.0, %v1212
      %v1214 = vpop.f32.mrf.mxu0
      %v1215 = vadd.f32 0.0, %v1214
      %1216 = vmatmul.bf16.gmra.mxu0 %v1191
      %v1217 = vpop.f32.mrf.mxu0
      %v1218 = vadd.f32 0.0, %v1217
      %v1219 = vpop.f32.mrf.mxu0
      %v1220 = vadd.f32 0.0, %v1219
      %1221 = vdwg.mxu0
      %v1222 = vadd.f32 %v1111, %v1203
      %v1223 = vadd.f32 %v1112, %v1205
      %v1224 = vadd.f32 %v1113, %v1208
      %v1225 = vadd.f32 %v1114, %v1210
      %v1226 = vadd.f32 %v1115, %v1213
      %v1227 = vadd.f32 %v1116, %v1215
      %v1228 = vadd.f32 %v1117, %v1218
      %v1229 = vadd.f32 %v1118, %v1220
      %v1230 = vld [vmem:[%s1119] sm:$0xf]
      %v1231 = vld [vmem:[%s1119 + $0x4] sm:$0x1]
      %v1232 = vld [vmem:[%s1119 + $0x8] sm:$0xf]
      %v1233 = vld [vmem:[%s1119 + $0xc] sm:$0x1]
      %v1234 = vld [vmem:[%s1119 + $0x10] sm:$0xf]
      %v1235 = vld [vmem:[%s1119 + $0x14] sm:$0x1]
      %v1236 = vld [vmem:[%s1119 + $0x18] sm:$0xf]
      %v1237 = vld [vmem:[%s1119 + $0x1c] sm:$0x1]
      %v1238 = vld [vmem:[%s1119 + $0x20] sm:$0xf]
      %v1239 = vld [vmem:[%s1119 + $0x24] sm:$0x1]
      %v1240 = vld [vmem:[%s1119 + $0x28] sm:$0xf]
      %v1241 = vld [vmem:[%s1119 + $0x2c] sm:$0x1]
      %v1242 = vld [vmem:[%s1119 + $0x30] sm:$0xf]
      %v1243 = vld [vmem:[%s1119 + $0x34] sm:$0x1]
      %v1244 = vld [vmem:[%s1119 + $0x38] sm:$0xf]
      %v1245 = vld [vmem:[%s1119 + $0x3c] sm:$0x1]
      %v1247 = vshrl.u32 %v1230, 16
      %v1249 = vrot.slane %v1247, 4
      %v1250 = vshll.u32 %v1230, 16
      %v1252 = vrot.slane %v1250, 5
      %v1253 = vor.u32 %v1249, %v1252
      %v1254 = vrot.slane %v1253, 4
      %v1256 = vshll.u32 %v1231, 16
      %v1258 = vrot.slane %v1256, 5
      %v1259 = vsel %vm198, %v1254, %v1258
      %v1261 = vshrl.u32 %v1232, 16
      %v1263 = vrot.slane %v1261, 4
      %v1264 = vshll.u32 %v1232, 16
      %v1266 = vrot.slane %v1264, 5
      %v1267 = vor.u32 %v1263, %v1266
      %v1268 = vrot.slane %v1267, 4
      %v1270 = vshll.u32 %v1233, 16
      %v1272 = vrot.slane %v1270, 5
      %v1273 = vsel %vm198, %v1268, %v1272
      %v1275 = vshrl.u32 %v1234, 16
      %v1277 = vrot.slane %v1275, 4
      %v1278 = vshll.u32 %v1234, 16
      %v1280 = vrot.slane %v1278, 5
      %v1281 = vor.u32 %v1277, %v1280
      %v1282 = vrot.slane %v1281, 4
      %v1284 = vshll.u32 %v1235, 16
      %v1286 = vrot.slane %v1284, 5
      %v1287 = vsel %vm198, %v1282, %v1286
      %v1289 = vshrl.u32 %v1236, 16
      %v1291 = vrot.slane %v1289, 4
      %v1292 = vshll.u32 %v1236, 16
      %v1294 = vrot.slane %v1292, 5
      %v1295 = vor.u32 %v1291, %v1294
      %v1296 = vrot.slane %v1295, 4
      %v1298 = vshll.u32 %v1237, 16
      %v1300 = vrot.slane %v1298, 5
      %v1301 = vsel %vm198, %v1296, %v1300
      %v1303 = vshrl.u32 %v1238, 16
      %v1305 = vrot.slane %v1303, 4
      %v1306 = vshll.u32 %v1238, 16
      %v1308 = vrot.slane %v1306, 5
      %v1309 = vor.u32 %v1305, %v1308
      %v1310 = vrot.slane %v1309, 4
      %v1312 = vshll.u32 %v1239, 16
      %v1314 = vrot.slane %v1312, 5
      %v1315 = vsel %vm198, %v1310, %v1314
      %v1317 = vshrl.u32 %v1240, 16
      %v1319 = vrot.slane %v1317, 4
      %v1320 = vshll.u32 %v1240, 16
      %v1322 = vrot.slane %v1320, 5
      %v1323 = vor.u32 %v1319, %v1322
      %v1324 = vrot.slane %v1323, 4
      %v1326 = vshll.u32 %v1241, 16
      %v1328 = vrot.slane %v1326, 5
      %v1329 = vsel %vm198, %v1324, %v1328
      %v1331 = vshrl.u32 %v1242, 16
      %v1333 = vrot.slane %v1331, 4
      %v1334 = vshll.u32 %v1242, 16
      %v1336 = vrot.slane %v1334, 5
      %v1337 = vor.u32 %v1333, %v1336
      %v1338 = vrot.slane %v1337, 4
      %v1340 = vshll.u32 %v1243, 16
      %v1342 = vrot.slane %v1340, 5
      %v1343 = vsel %vm198, %v1338, %v1342
      %v1345 = vshrl.u32 %v1244, 16
      %v1347 = vrot.slane %v1345, 4
      %v1348 = vshll.u32 %v1244, 16
      %v1350 = vrot.slane %v1348, 5
      %v1351 = vor.u32 %v1347, %v1350
      %v1352 = vrot.slane %v1351, 4
      %v1354 = vshll.u32 %v1245, 16
      %v1356 = vrot.slane %v1354, 5
      %v1357 = vsel %vm198, %v1352, %v1356
      %s1358 = scalar_lea.vmem %s1, 224
      %v1359 = vld [vmem:[%s1358] sm:$0xf]
      %v1360 = vld [vmem:[%s1358 + $0x4] sm:$0xf]
      %v1361 = vld [vmem:[%s1358 + $0x8] sm:$0xf]
      %v1362 = vld [vmem:[%s1358 + $0xc] sm:$0xf]
      %v1363 = vld [vmem:[%s1358 + $0x10] sm:$0xf]
      %v1364 = vld [vmem:[%s1358 + $0x14] sm:$0xf]
      %v1365 = vld [vmem:[%s1358 + $0x18] sm:$0xf]
      %v1366 = vld [vmem:[%s1358 + $0x1c] sm:$0xf]
      %v1367 = vunpack.c.l.b16 %v1259
      %v1368 = vunpack.c.l.b16 %v1273
      %v1369 = vunpack.c.l.b16 %v1287
      %v1370 = vunpack.c.l.b16 %v1301
      %v1371 = vunpack.c.l.b16 %v1315
      %v1372 = vunpack.c.l.b16 %v1329
      %v1373 = vunpack.c.l.b16 %v1343
      %v1374 = vunpack.c.l.b16 %v1357
      %v1375 = vpack.c.b16 %v1368, %v1367
      %v1376 = vpack.c.b16 %v1370, %v1369
      %v1377 = vpack.c.b16 %v1372, %v1371
      %v1378 = vpack.c.b16 %v1374, %v1373
      %v1387 = vunpack.c.l.b16 %v1359
      %v1388 = vunpack.c.l.b16 %v1360
      %v1389 = vunpack.c.l.b16 %v1361
      %v1390 = vunpack.c.l.b16 %v1362
      %v1391 = vunpack.c.l.b16 %v1363
      %v1392 = vunpack.c.l.b16 %v1364
      %v1393 = vunpack.c.l.b16 %v1365
      %v1394 = vunpack.c.l.b16 %v1366
      %v1395 = vpack.c.b16 %v1388, %v1387
      %v1396 = vpack.c.b16 %v1390, %v1389
      %v1397 = vpack.c.b16 %v1392, %v1391
      %v1398 = vpack.c.b16 %v1394, %v1393
      %v1404 = vsel %vm356, %v1375, 0
      %v1407 = vsel %vm356, %v1376, 0
      %v1410 = vsel %vm356, %v1377, 0
      %v1413 = vsel %vm356, %v1378, 0
      %1415 = vmatpush.bf16.msra.mxu0 0
      %1416 = vmatpush.bf16.msra.mxu0 0
      %1417 = vmatpush.bf16.msra.mxu0 0
      %1418 = vmatpush.bf16.msra.mxu0 0
      %1419 = vmatpush.bf16.msra.mxu0 %v1398
      %1420 = vmatpush.bf16.msra.mxu0 %v1397
      %1421 = vmatpush.bf16.msra.mxu0 %v1396
      %1422 = vmatpush.bf16.msra.mxu0 %v1395
      %1423 = vmatmul.bf16.gmra.mxu0 %v1404
      %v1424 = vpop.f32.mrf.mxu0
      %v1425 = vadd.f32 0.0, %v1424
      %v1426 = vpop.f32.mrf.mxu0
      %v1427 = vadd.f32 0.0, %v1426
      %1428 = vmatmul.bf16.gmra.mxu0 %v1407
      %v1429 = vpop.f32.mrf.mxu0
      %v1430 = vadd.f32 0.0, %v1429
      %v1431 = vpop.f32.mrf.mxu0
      %v1432 = vadd.f32 0.0, %v1431
      %1433 = vmatmul.bf16.gmra.mxu0 %v1410
      %v1434 = vpop.f32.mrf.mxu0
      %v1435 = vadd.f32 0.0, %v1434
      %v1436 = vpop.f32.mrf.mxu0
      %v1437 = vadd.f32 0.0, %v1436
      %1438 = vmatmul.bf16.gmra.mxu0 %v1413
      %v1439 = vpop.f32.mrf.mxu0
      %v1440 = vadd.f32 0.0, %v1439
      %v1441 = vpop.f32.mrf.mxu0
      %v1442 = vadd.f32 0.0, %v1441
      %1443 = vdwg.mxu0
      %v1444 = vadd.f32 %v1222, %v1425
      %v1445 = vadd.f32 %v1223, %v1427
      %v1446 = vadd.f32 %v1224, %v1430
      %v1447 = vadd.f32 %v1225, %v1432
      %v1448 = vadd.f32 %v1226, %v1435
      %v1449 = vadd.f32 %v1227, %v1437
      %v1450 = vadd.f32 %v1228, %v1440
      %v1451 = vadd.f32 %v1229, %v1442
      %v1452 = vld [vmem:[%s1119] sm:$0xe]
      %v1453 = vld [vmem:[%s1119 + $0x8] sm:$0xe]
      %v1454 = vld [vmem:[%s1119 + $0x10] sm:$0xe]
      %v1455 = vld [vmem:[%s1119 + $0x18] sm:$0xe]
      %v1456 = vld [vmem:[%s1119 + $0x20] sm:$0xe]
      %v1457 = vld [vmem:[%s1119 + $0x28] sm:$0xe]
      %v1458 = vld [vmem:[%s1119 + $0x30] sm:$0xe]
      %v1459 = vld [vmem:[%s1119 + $0x38] sm:$0xe]
      %v1476 = vrot.slane %v1452, 5
      %v1477 = vrot.slane %v1476, 4
      %v1478 = vrot.slane %v1231, 5
      %v1479 = vsel %vm509, %v1477, %v1478
      %v1480 = vrot.slane %v1453, 5
      %v1481 = vrot.slane %v1480, 4
      %v1482 = vrot.slane %v1233, 5
      %v1483 = vsel %vm509, %v1481, %v1482
      %v1484 = vrot.slane %v1454, 5
      %v1485 = vrot.slane %v1484, 4
      %v1486 = vrot.slane %v1235, 5
      %v1487 = vsel %vm509, %v1485, %v1486
      %v1488 = vrot.slane %v1455, 5
      %v1489 = vrot.slane %v1488, 4
      %v1490 = vrot.slane %v1237, 5
      %v1491 = vsel %vm509, %v1489, %v1490
      %v1492 = vrot.slane %v1456, 5
      %v1493 = vrot.slane %v1492, 4
      %v1494 = vrot.slane %v1239, 5
      %v1495 = vsel %vm509, %v1493, %v1494
      %v1496 = vrot.slane %v1457, 5
      %v1497 = vrot.slane %v1496, 4
      %v1498 = vrot.slane %v1241, 5
      %v1499 = vsel %vm509, %v1497, %v1498
      %v1500 = vrot.slane %v1458, 5
      %v1501 = vrot.slane %v1500, 4
      %v1502 = vrot.slane %v1243, 5
      %v1503 = vsel %vm509, %v1501, %v1502
      %v1504 = vrot.slane %v1459, 5
      %v1505 = vrot.slane %v1504, 4
      %v1506 = vrot.slane %v1245, 5
      %v1507 = vsel %vm509, %v1505, %v1506
      %s1508 = scalar_lea.vmem %s1, 256
      %v1509 = vld [vmem:[%s1508] sm:$0xf]
      %v1510 = vld [vmem:[%s1508 + $0x4] sm:$0xf]
      %v1511 = vld [vmem:[%s1508 + $0x8] sm:$0xf]
      %v1512 = vld [vmem:[%s1508 + $0xc] sm:$0xf]
      %v1513 = vld [vmem:[%s1508 + $0x10] sm:$0xf]
      %v1514 = vld [vmem:[%s1508 + $0x14] sm:$0xf]
      %v1515 = vld [vmem:[%s1508 + $0x18] sm:$0xf]
      %v1516 = vld [vmem:[%s1508 + $0x1c] sm:$0xf]
      %v1517 = vunpack.c.l.b16 %v1479
      %v1518 = vunpack.c.l.b16 %v1483
      %v1519 = vunpack.c.l.b16 %v1487
      %v1520 = vunpack.c.l.b16 %v1491
      %v1521 = vunpack.c.l.b16 %v1495
      %v1522 = vunpack.c.l.b16 %v1499
      %v1523 = vunpack.c.l.b16 %v1503
      %v1524 = vunpack.c.l.b16 %v1507
      %v1525 = vpack.c.b16 %v1518, %v1517
      %v1526 = vpack.c.b16 %v1520, %v1519
      %v1527 = vpack.c.b16 %v1522, %v1521
      %v1528 = vpack.c.b16 %v1524, %v1523
      %v1537 = vunpack.c.l.b16 %v1509
      %v1538 = vunpack.c.l.b16 %v1510
      %v1539 = vunpack.c.l.b16 %v1511
      %v1540 = vunpack.c.l.b16 %v1512
      %v1541 = vunpack.c.l.b16 %v1513
      %v1542 = vunpack.c.l.b16 %v1514
      %v1543 = vunpack.c.l.b16 %v1515
      %v1544 = vunpack.c.l.b16 %v1516
      %v1545 = vpack.c.b16 %v1538, %v1537
      %v1546 = vpack.c.b16 %v1540, %v1539
      %v1547 = vpack.c.b16 %v1542, %v1541
      %v1548 = vpack.c.b16 %v1544, %v1543
      %v1554 = vsel %vm356, %v1525, 0
      %v1557 = vsel %vm356, %v1526, 0
      %v1560 = vsel %vm356, %v1527, 0
      %v1563 = vsel %vm356, %v1528, 0
      %1565 = vmatpush.bf16.msra.mxu0 0
      %1566 = vmatpush.bf16.msra.mxu0 0
      %1567 = vmatpush.bf16.msra.mxu0 0
      %1568 = vmatpush.bf16.msra.mxu0 0
      %1569 = vmatpush.bf16.msra.mxu0 %v1548
      %1570 = vmatpush.bf16.msra.mxu0 %v1547
      %1571 = vmatpush.bf16.msra.mxu0 %v1546
      %1572 = vmatpush.bf16.msra.mxu0 %v1545
      %1573 = vmatmul.bf16.gmra.mxu0 %v1554
      %v1574 = vpop.f32.mrf.mxu0
      %v1575 = vadd.f32 0.0, %v1574
      %v1576 = vpop.f32.mrf.mxu0
      %v1577 = vadd.f32 0.0, %v1576
      %1578 = vmatmul.bf16.gmra.mxu0 %v1557
      %v1579 = vpop.f32.mrf.mxu0
      %v1580 = vadd.f32 0.0, %v1579
      %v1581 = vpop.f32.mrf.mxu0
      %v1582 = vadd.f32 0.0, %v1581
      %1583 = vmatmul.bf16.gmra.mxu0 %v1560
      %v1584 = vpop.f32.mrf.mxu0
      %v1585 = vadd.f32 0.0, %v1584
      %v1586 = vpop.f32.mrf.mxu0
      %v1587 = vadd.f32 0.0, %v1586
      %1588 = vmatmul.bf16.gmra.mxu0 %v1563
      %v1589 = vpop.f32.mrf.mxu0
      %v1590 = vadd.f32 0.0, %v1589
      %v1591 = vpop.f32.mrf.mxu0
      %v1592 = vadd.f32 0.0, %v1591
      %1593 = vdwg.mxu0
      %v1594 = vadd.f32 %v1444, %v1575
      %v1595 = vadd.f32 %v1445, %v1577
      %v1596 = vadd.f32 %v1446, %v1580
      %v1597 = vadd.f32 %v1447, %v1582
      %v1598 = vadd.f32 %v1448, %v1585
      %v1599 = vadd.f32 %v1449, %v1587
      %v1600 = vadd.f32 %v1450, %v1590
      %v1601 = vadd.f32 %v1451, %v1592
      %v1602 = vld [vmem:[%s2] sm:$0x1]
      %v1604 = vperm.slane %v1602, 0
      %v1606 = vadd.f32 %v1594, %v1604
      %v1607 = vadd.f32 %v1595, %v1604
      %v1608 = vadd.f32 %v1596, %v1604
      %v1609 = vadd.f32 %v1597, %v1604
      %v1610 = vadd.f32 %v1598, %v1604
      %v1611 = vadd.f32 %v1599, %v1604
      %v1612 = vadd.f32 %v1600, %v1604
      %v1613 = vadd.f32 %v1601, %v1604
      %v1614 = vmax.f32 %v1606, 0.0
      %v1615 = vmax.f32 %v1607, 0.0
      %v1616 = vmax.f32 %v1608, 0.0
      %v1617 = vmax.f32 %v1609, 0.0
      %v1618 = vmax.f32 %v1610, 0.0
      %v1619 = vmax.f32 %v1611, 0.0
      %v1620 = vmax.f32 %v1612, 0.0
      %v1621 = vmax.f32 %v1613, 0.0
      %v1622 = vpack.c.bf16 %v1614, %v1614
      %v1623 = vpack.c.bf16 %v1615, %v1615
      %v1624 = vpack.c.bf16 %v1616, %v1616
      %v1625 = vpack.c.bf16 %v1617, %v1617
      %v1626 = vpack.c.bf16 %v1618, %v1618
      %v1627 = vpack.c.bf16 %v1619, %v1619
      %v1628 = vpack.c.bf16 %v1620, %v1620
      %v1629 = vpack.c.bf16 %v1621, %v1621
      %vm1630 = vcmask 519168
      %1631 = vst.msk [vmem:[%s170] sm:$0xf] %vm1630, %v1622
      %1632 = vst.msk [vmem:[%s170 + $0x4] sm:$0xf] %vm1630, %v1623
      %1633 = vst.msk [vmem:[%s170 + $0x8] sm:$0xf] %vm1630, %v1624
      %1634 = vst.msk [vmem:[%s170 + $0xc] sm:$0xf] %vm1630, %v1625
      %1635 = vst.msk [vmem:[%s170 + $0x10] sm:$0xf] %vm1630, %v1626
      %1636 = vst.msk [vmem:[%s170 + $0x14] sm:$0xf] %vm1630, %v1627
      %1637 = vst.msk [vmem:[%s170 + $0x18] sm:$0xf] %vm1630, %v1628
      %1638 = vst.msk [vmem:[%s170 + $0x1c] sm:$0xf] %vm1630, %v1629
      %p1639 = scmp.lt.s32.totalorder %s14, 1
      %s1640 = scalar_select %p1639, %s14, 1
      %s1641 = smul.addr %s1640, 8
      %s1642 = smul.addr %s1641, 4
      %s1643 = scalar_lea.vmem %s3, %s1642
      // Predicated region
      $region33: #{resnet101_encoder_share.15} parent=31 // pred_check
        %p1644 = pneg %p100
      $region34: #{resnet101_encoder_share.15} parent=31 // pred_check_branch
        %1646 = sbr.rel (%p1644) target = $region36
      $region35: #{resnet101_encoder_share.15} parent=31 // pred_region
        _
      $region36: #{resnet101_encoder_share.15} parent=31 // pred_fallthru
        _
    $region32: #{resnet101_encoder_share.15} parent=5 // pred_fallthru
      _
    %p1647 = scmp.le.s32.totalorder 2, %s9
    // Predicated region
    $region37: #{resnet101_encoder_share.15} parent=5 // pred_check
      %p1648 = pneg %p1647
    $region38: #{resnet101_encoder_share.15} parent=5 // pred_check_branch
      %1650 = sbr.rel (%p1648) target = $region40
    $region39: #{resnet101_encoder_share.15} parent=5 // pred_region
      %s1651 = ssub.s32 %s9, 2
      // Predicated region
      $region41: #{resnet101_encoder_share.15} parent=39 // pred_check
        %p1652 = pneg %p106
      $region42: #{resnet101_encoder_share.15} parent=39 // pred_check_branch
        %1654 = sbr.rel (%p1652) target = $region44
      $region43: #{resnet101_encoder_share.15} parent=39 // pred_region
        %p1655 = scmp.lt.s32.totalorder %s15, 1
        %s1656 = scalar_select %p1655, %s15, 1
        %s1657 = smul.addr %s1656, 8
        %s1658 = smul.addr %s1657, 4
        %s1659 = scalar_lea.vmem %s3, %s1658
      $region44: #{resnet101_encoder_share.15} parent=39 // pred_fallthru
        _
    $region40: #{resnet101_encoder_share.15} parent=5 // pred_fallthru
      _
  $region6: #{resnet101_encoder_share.15} parent=0 // loop_footer
    %s13 = sadd.s32 1, %s9
  $region7: #{resnet101_encoder_share.15} parent=0 // loop_footer_branch
    %8 = sbr.rel target = $region3
  $region8: #{resnet101_encoder_share.15} parent=0 // loop_exit
    _

// kernel: resnet101_encoder_share.17
$region0: #{resnet101_encoder_share.17}
  #allocation0 [shape = 'u32[]', space=smem, size = 0x4, offset = 0x4, fixed_abs, tag = 'smem constant byte address 0x4 - core index']
  #allocation1 [shape = 'u32[72,128]{1,0:T(1,128)}', space=vmem, size = 0x9000, scoped, tag = 'internal scratch']
  %s0 = inlined_call_operand.vmem [shape: bf16[128,64], index: 0, kind: input, shape index: {}]
  %s1 = inlined_call_operand.vmem [shape: bf16[64,256], index: 1, kind: input, shape index: {}]
  %s2 = inlined_call_operand.vmem [shape: f32[1,256], index: 2, kind: input, shape index: {}]
  %s3 = inlined_call_operand.vmem [shape: bf16[128,256], index: 3, kind: input, shape index: {}]
  %s4 = inlined_call_operand.vmem [shape: bf16[128,256], index: 4, kind: output, shape index: {}]
  %s5 = sld [smem:[#allocation0]]
  $region26: #{resnet101_encoder_share.17} parent=0
    _
  %s7 = ssub.s32 1, %s5
  %s8 = scalar_select 0, %s7, %s5
  // Predicated region
  $region2: #{resnet101_encoder_share.17} parent=0 // pred_check
    _
  $region3: #{resnet101_encoder_share.17} parent=0 // pred_check_branch
    %10 = sbr.rel (0) target = $region5
  $region4: #{resnet101_encoder_share.17} parent=0 // pred_region
    _
  $region5: #{resnet101_encoder_share.17} parent=0 // pred_fallthru
    _
  // Predicated region
  $region6: #{resnet101_encoder_share.17} parent=0 // pred_check
    _
  $region7: #{resnet101_encoder_share.17} parent=0 // pred_check_branch
    %12 = sbr.rel (0) target = $region9
  $region8: #{resnet101_encoder_share.17} parent=0 // pred_region
    _
  $region9: #{resnet101_encoder_share.17} parent=0 // pred_fallthru
    _
  // Predicated region
  $region10: #{resnet101_encoder_share.17} parent=0 // pred_check
    _
  $region11: #{resnet101_encoder_share.17} parent=0 // pred_check_branch
    %14 = sbr.rel (0) target = $region13
  $region12: #{resnet101_encoder_share.17} parent=0 // pred_region
    _
  $region13: #{resnet101_encoder_share.17} parent=0 // pred_fallthru
    _
  // Predicated region
  $region14: #{resnet101_encoder_share.17} parent=0 // pred_check
    _
  $region15: #{resnet101_encoder_share.17} parent=0 // pred_check_branch
    %16 = sbr.rel (0) target = $region17
  $region16: #{resnet101_encoder_share.17} parent=0 // pred_region
    _
  $region17: #{resnet101_encoder_share.17} parent=0 // pred_fallthru
    _
  %v18 = vld [vmem:[%s0] sm:$0xf]
  %v19 = vld [vmem:[%s0 + $0x4] sm:$0xf]
  %v20 = vld [vmem:[%s0 + $0x8] sm:$0xf]
  %v21 = vld [vmem:[%s0 + $0xc] sm:$0xf]
  %v22 = vld [vmem:[%s0 + $0x10] sm:$0xf]
  %v23 = vld [vmem:[%s0 + $0x14] sm:$0xf]
  %v24 = vld [vmem:[%s0 + $0x18] sm:$0xf]
  %v25 = vld [vmem:[%s0 + $0x1c] sm:$0xf]
  %v26 = vld [vmem:[%s0 + $0x20] sm:$0xf]
  %v27 = vld [vmem:[%s0 + $0x24] sm:$0xf]
  %v28 = vld [vmem:[%s0 + $0x28] sm:$0xf]
  %v29 = vld [vmem:[%s0 + $0x2c] sm:$0xf]
  %v30 = vld [vmem:[%s0 + $0x30] sm:$0xf]
  %v31 = vld [vmem:[%s0 + $0x34] sm:$0xf]
  %v32 = vld [vmem:[%s0 + $0x38] sm:$0xf]
  %v33 = vld [vmem:[%s0 + $0x3c] sm:$0xf]
  %v34 = vld [vmem:[%s1] sm:$0xff]
  %v35 = vld [vmem:[%s1 + $0x8] sm:$0xff]
  %v36 = vld [vmem:[%s1 + $0x10] sm:$0xff]
  %v37 = vld [vmem:[%s1 + $0x18] sm:$0xff]
  %v38 = vld [vmem:[%s1 + $0x20] sm:$0xff]
  %v39 = vld [vmem:[%s1 + $0x28] sm:$0xff]
  %v40 = vld [vmem:[%s1 + $0x30] sm:$0xff]
  %v41 = vld [vmem:[%s1 + $0x38] sm:$0xff]
  %v42 = vld [vmem:[%s2] sm:$0x3]
  %v44 = vperm.slane %v42, 0
  %v45 = vperm.slane %v42, 1
  %v64 = vunpack.c.l.b16 %v18
  %v65 = vunpack.c.l.b16 %v19
  %v66 = vunpack.c.l.b16 %v20
  %v67 = vunpack.c.l.b16 %v21
  %v68 = vunpack.c.l.b16 %v22
  %v69 = vunpack.c.l.b16 %v23
  %v70 = vunpack.c.l.b16 %v24
  %v71 = vunpack.c.l.b16 %v25
  %v72 = vunpack.c.l.b16 %v26
  %v73 = vunpack.c.l.b16 %v27
  %v74 = vunpack.c.l.b16 %v28
  %v75 = vunpack.c.l.b16 %v29
  %v76 = vunpack.c.l.b16 %v30
  %v77 = vunpack.c.l.b16 %v31
  %v78 = vunpack.c.l.b16 %v32
  %v79 = vunpack.c.l.b16 %v33
  %v80 = vpack.c.b16 %v65, %v64
  %v81 = vpack.c.b16 %v67, %v66
  %v82 = vpack.c.b16 %v69, %v68
  %v83 = vpack.c.b16 %v71, %v70
  %v84 = vpack.c.b16 %v73, %v72
  %v85 = vpack.c.b16 %v75, %v74
  %v86 = vpack.c.b16 %v77, %v76
  %v87 = vpack.c.b16 %v79, %v78
  %v96 = vunpack.c.l.b16 %v34
  %v97 = vunpack.c.h.b16 %v34
  %v98 = vunpack.c.l.b16 %v35
  %v99 = vunpack.c.h.b16 %v35
  %v100 = vunpack.c.l.b16 %v36
  %v101 = vunpack.c.h.b16 %v36
  %v102 = vunpack.c.l.b16 %v37
  %v103 = vunpack.c.h.b16 %v37
  %v104 = vunpack.c.l.b16 %v38
  %v105 = vunpack.c.h.b16 %v38
  %v106 = vunpack.c.l.b16 %v39
  %v107 = vunpack.c.h.b16 %v39
  %v108 = vunpack.c.l.b16 %v40
  %v109 = vunpack.c.h.b16 %v40
  %v110 = vunpack.c.l.b16 %v41
  %v111 = vunpack.c.h.b16 %v41
  %v112 = vpack.c.b16 %v98, %v96
  %v113 = vpack.c.b16 %v99, %v97
  %v114 = vpack.c.b16 %v102, %v100
  %v115 = vpack.c.b16 %v103, %v101
  %v116 = vpack.c.b16 %v106, %v104
  %v117 = vpack.c.b16 %v107, %v105
  %v118 = vpack.c.b16 %v110, %v108
  %v119 = vpack.c.b16 %v111, %v109
  %vm128 = vcmask 523264
  %v130 = vsel %vm128, %v80, 0
  %v133 = vsel %vm128, %v81, 0
  %v136 = vsel %vm128, %v82, 0
  %v139 = vsel %vm128, %v83, 0
  %v142 = vsel %vm128, %v84, 0
  %v145 = vsel %vm128, %v85, 0
  %v148 = vsel %vm128, %v86, 0
  %v151 = vsel %vm128, %v87, 0
  %153 = vmatpush.bf16.msra.mxu0 0
  %154 = vmatpush.bf16.msra.mxu0 0
  %155 = vmatpush.bf16.msra.mxu0 0
  %156 = vmatpush.bf16.msra.mxu0 0
  %157 = vmatpush.bf16.msra.mxu0 %v118
  %158 = vmatpush.bf16.msra.mxu0 %v116
  %159 = vmatpush.bf16.msra.mxu0 %v114
  %160 = vmatpush.bf16.msra.mxu0 %v112
  %161 = vmatmul.bf16.gmra.mxu0 %v130
  %v162 = vpop.f32.mrf.mxu0
  %v163 = vadd.f32 %v44, %v162
  %v164 = vpop.f32.mrf.mxu0
  %v165 = vadd.f32 %v44, %v164
  %166 = vmatmul.bf16.gmra.mxu0 %v133
  %v167 = vpop.f32.mrf.mxu0
  %v168 = vadd.f32 %v44, %v167
  %v169 = vpop.f32.mrf.mxu0
  %v170 = vadd.f32 %v44, %v169
  %171 = vmatmul.bf16.gmra.mxu0 %v136
  %v172 = vpop.f32.mrf.mxu0
  %v173 = vadd.f32 %v44, %v172
  %v174 = vpop.f32.mrf.mxu0
  %v175 = vadd.f32 %v44, %v174
  %176 = vmatmul.bf16.gmra.mxu0 %v139
  %v177 = vpop.f32.mrf.mxu0
  %v178 = vadd.f32 %v44, %v177
  %v179 = vpop.f32.mrf.mxu0
  %v180 = vadd.f32 %v44, %v179
  %181 = vmatmul.bf16.gmra.mxu0 %v142
  %v182 = vpop.f32.mrf.mxu0
  %v183 = vadd.f32 %v44, %v182
  %v184 = vpop.f32.mrf.mxu0
  %v185 = vadd.f32 %v44, %v184
  %186 = vmatmul.bf16.gmra.mxu0 %v145
  %v187 = vpop.f32.mrf.mxu0
  %v188 = vadd.f32 %v44, %v187
  %v189 = vpop.f32.mrf.mxu0
  %v190 = vadd.f32 %v44, %v189
  %191 = vmatmul.bf16.gmra.mxu0 %v148
  %v192 = vpop.f32.mrf.mxu0
  %v193 = vadd.f32 %v44, %v192
  %v194 = vpop.f32.mrf.mxu0
  %v195 = vadd.f32 %v44, %v194
  %196 = vmatmul.bf16.gmra.mxu0 %v151
  %v197 = vpop.f32.mrf.mxu0
  %v198 = vadd.f32 %v44, %v197
  %v199 = vpop.f32.mrf.mxu0
  %v200 = vadd.f32 %v44, %v199
  %201 = vdwg.mxu0
  %202 = vmatpush.bf16.msra.mxu0 0
  %203 = vmatpush.bf16.msra.mxu0 0
  %204 = vmatpush.bf16.msra.mxu0 0
  %205 = vmatpush.bf16.msra.mxu0 0
  %206 = vmatpush.bf16.msra.mxu0 %v119
  %207 = vmatpush.bf16.msra.mxu0 %v117
  %208 = vmatpush.bf16.msra.mxu0 %v115
  %209 = vmatpush.bf16.msra.mxu0 %v113
  %210 = vmatmul.bf16.gmra.mxu0 %v130
  %v211 = vpop.f32.mrf.mxu0
  %v212 = vadd.f32 %v45, %v211
  %v213 = vpop.f32.mrf.mxu0
  %v214 = vadd.f32 %v45, %v213
  %215 = vmatmul.bf16.gmra.mxu0 %v133
  %v216 = vpop.f32.mrf.mxu0
  %v217 = vadd.f32 %v45, %v216
  %v218 = vpop.f32.mrf.mxu0
  %v219 = vadd.f32 %v45, %v218
  %220 = vmatmul.bf16.gmra.mxu0 %v136
  %v221 = vpop.f32.mrf.mxu0
  %v222 = vadd.f32 %v45, %v221
  %v223 = vpop.f32.mrf.mxu0
  %v224 = vadd.f32 %v45, %v223
  %225 = vmatmul.bf16.gmra.mxu0 %v139
  %v226 = vpop.f32.mrf.mxu0
  %v227 = vadd.f32 %v45, %v226
  %v228 = vpop.f32.mrf.mxu0
  %v229 = vadd.f32 %v45, %v228
  %230 = vmatmul.bf16.gmra.mxu0 %v142
  %v231 = vpop.f32.mrf.mxu0
  %v232 = vadd.f32 %v45, %v231
  %v233 = vpop.f32.mrf.mxu0
  %v234 = vadd.f32 %v45, %v233
  %235 = vmatmul.bf16.gmra.mxu0 %v145
  %v236 = vpop.f32.mrf.mxu0
  %v237 = vadd.f32 %v45, %v236
  %v238 = vpop.f32.mrf.mxu0
  %v239 = vadd.f32 %v45, %v238
  %240 = vmatmul.bf16.gmra.mxu0 %v148
  %v241 = vpop.f32.mrf.mxu0
  %v242 = vadd.f32 %v45, %v241
  %v243 = vpop.f32.mrf.mxu0
  %v244 = vadd.f32 %v45, %v243
  %245 = vmatmul.bf16.gmra.mxu0 %v151
  %v246 = vpop.f32.mrf.mxu0
  %v247 = vadd.f32 %v45, %v246
  %v248 = vpop.f32.mrf.mxu0
  %v249 = vadd.f32 %v45, %v248
  %250 = vdwg.mxu0
  %v251 = vld [vmem:[%s3] sm:$0xff]
  %v252 = vld [vmem:[%s3 + $0x8] sm:$0xff]
  %v253 = vld [vmem:[%s3 + $0x10] sm:$0xff]
  %v254 = vld [vmem:[%s3 + $0x18] sm:$0xff]
  %v255 = vld [vmem:[%s3 + $0x20] sm:$0xff]
  %v256 = vld [vmem:[%s3 + $0x28] sm:$0xff]
  %v257 = vld [vmem:[%s3 + $0x30] sm:$0xff]
  %v258 = vld [vmem:[%s3 + $0x38] sm:$0xff]
  %v259 = vld [vmem:[%s3 + $0x40] sm:$0xff]
  %v260 = vld [vmem:[%s3 + $0x48] sm:$0xff]
  %v261 = vld [vmem:[%s3 + $0x50] sm:$0xff]
  %v262 = vld [vmem:[%s3 + $0x58] sm:$0xff]
  %v263 = vld [vmem:[%s3 + $0x60] sm:$0xff]
  %v264 = vld [vmem:[%s3 + $0x68] sm:$0xff]
  %v265 = vld [vmem:[%s3 + $0x70] sm:$0xff]
  %v266 = vld [vmem:[%s3 + $0x78] sm:$0xff]
  %v267 = vunpack.c.l.bf16 %v251
  %v268 = vunpack.c.h.bf16 %v251
  %v269 = vunpack.c.l.bf16 %v252
  %v270 = vunpack.c.h.bf16 %v252
  %v271 = vunpack.c.l.bf16 %v253
  %v272 = vunpack.c.h.bf16 %v253
  %v273 = vunpack.c.l.bf16 %v254
  %v274 = vunpack.c.h.bf16 %v254
  %v275 = vunpack.c.l.bf16 %v255
  %v276 = vunpack.c.h.bf16 %v255
  %v277 = vunpack.c.l.bf16 %v256
  %v278 = vunpack.c.h.bf16 %v256
  %v279 = vunpack.c.l.bf16 %v257
  %v280 = vunpack.c.h.bf16 %v257
  %v281 = vunpack.c.l.bf16 %v258
  %v282 = vunpack.c.h.bf16 %v258
  %v283 = vunpack.c.l.bf16 %v259
  %v284 = vunpack.c.h.bf16 %v259
  %v285 = vunpack.c.l.bf16 %v260
  %v286 = vunpack.c.h.bf16 %v260
  %v287 = vunpack.c.l.bf16 %v261
  %v288 = vunpack.c.h.bf16 %v261
  %v289 = vunpack.c.l.bf16 %v262
  %v290 = vunpack.c.h.bf16 %v262
  %v291 = vunpack.c.l.bf16 %v263
  %v292 = vunpack.c.h.bf16 %v263
  %v293 = vunpack.c.l.bf16 %v264
  %v294 = vunpack.c.h.bf16 %v264
  %v295 = vunpack.c.l.bf16 %v265
  %v296 = vunpack.c.h.bf16 %v265
  %v297 = vunpack.c.l.bf16 %v266
  %v298 = vunpack.c.h.bf16 %v266
  %v299 = vadd.f32 %v163, %v267
  %v300 = vadd.f32 %v212, %v268
  %v301 = vadd.f32 %v165, %v269
  %v302 = vadd.f32 %v214, %v270
  %v303 = vadd.f32 %v168, %v271
  %v304 = vadd.f32 %v217, %v272
  %v305 = vadd.f32 %v170, %v273
  %v306 = vadd.f32 %v219, %v274
  %v307 = vadd.f32 %v173, %v275
  %v308 = vadd.f32 %v222, %v276
  %v309 = vadd.f32 %v175, %v277
  %v310 = vadd.f32 %v224, %v278
  %v311 = vadd.f32 %v178, %v279
  %v312 = vadd.f32 %v227, %v280
  %v313 = vadd.f32 %v180, %v281
  %v314 = vadd.f32 %v229, %v282
  %v315 = vadd.f32 %v183, %v283
  %v316 = vadd.f32 %v232, %v284
  %v317 = vadd.f32 %v185, %v285
  %v318 = vadd.f32 %v234, %v286
  %v319 = vadd.f32 %v188, %v287
  %v320 = vadd.f32 %v237, %v288
  %v321 = vadd.f32 %v190, %v289
  %v322 = vadd.f32 %v239, %v290
  %v323 = vadd.f32 %v193, %v291
  %v324 = vadd.f32 %v242, %v292
  %v325 = vadd.f32 %v195, %v293
  %v326 = vadd.f32 %v244, %v294
  %v327 = vadd.f32 %v198, %v295
  %v328 = vadd.f32 %v247, %v296
  %v329 = vadd.f32 %v200, %v297
  %v330 = vadd.f32 %v249, %v298
  %v331 = vmax.f32 %v299, 0.0
  %v332 = vmax.f32 %v300, 0.0
  %v333 = vmax.f32 %v301, 0.0
  %v334 = vmax.f32 %v302, 0.0
  %v335 = vmax.f32 %v303, 0.0
  %v336 = vmax.f32 %v304, 0.0
  %v337 = vmax.f32 %v305, 0.0
  %v338 = vmax.f32 %v306, 0.0
  %v339 = vmax.f32 %v307, 0.0
  %v340 = vmax.f32 %v308, 0.0
  %v341 = vmax.f32 %v309, 0.0
  %v342 = vmax.f32 %v310, 0.0
  %v343 = vmax.f32 %v311, 0.0
  %v344 = vmax.f32 %v312, 0.0
  %v345 = vmax.f32 %v313, 0.0
  %v346 = vmax.f32 %v314, 0.0
  %v347 = vmax.f32 %v315, 0.0
  %v348 = vmax.f32 %v316, 0.0
  %v349 = vmax.f32 %v317, 0.0
  %v350 = vmax.f32 %v318, 0.0
  %v351 = vmax.f32 %v319, 0.0
  %v352 = vmax.f32 %v320, 0.0
  %v353 = vmax.f32 %v321, 0.0
  %v354 = vmax.f32 %v322, 0.0
  %v355 = vmax.f32 %v323, 0.0
  %v356 = vmax.f32 %v324, 0.0
  %v357 = vmax.f32 %v325, 0.0
  %v358 = vmax.f32 %v326, 0.0
  %v359 = vmax.f32 %v327, 0.0
  %v360 = vmax.f32 %v328, 0.0
  %v361 = vmax.f32 %v329, 0.0
  %v362 = vmax.f32 %v330, 0.0
  %v363 = vpack.c.bf16 %v332, %v331
  %v364 = vpack.c.bf16 %v334, %v333
  %v365 = vpack.c.bf16 %v336, %v335
  %v366 = vpack.c.bf16 %v338, %v337
  %v367 = vpack.c.bf16 %v340, %v339
  %v368 = vpack.c.bf16 %v342, %v341
  %v369 = vpack.c.bf16 %v344, %v343
  %v370 = vpack.c.bf16 %v346, %v345
  %v371 = vpack.c.bf16 %v348, %v347
  %v372 = vpack.c.bf16 %v350, %v349
  %v373 = vpack.c.bf16 %v352, %v351
  %v374 = vpack.c.bf16 %v354, %v353
  %v375 = vpack.c.bf16 %v356, %v355
  %v376 = vpack.c.bf16 %v358, %v357
  %v377 = vpack.c.bf16 %v360, %v359
  %v378 = vpack.c.bf16 %v362, %v361
  %379 = vst [vmem:[%s4] sm:$0xff] %v363
  %380 = vst [vmem:[%s4 + $0x8] sm:$0xff] %v364
  %381 = vst [vmem:[%s4 + $0x10] sm:$0xff] %v365
  %382 = vst [vmem:[%s4 + $0x18] sm:$0xff] %v366
  %383 = vst [vmem:[%s4 + $0x20] sm:$0xff] %v367
  %384 = vst [vmem:[%s4 + $0x28] sm:$0xff] %v368
  %385 = vst [vmem:[%s4 + $0x30] sm:$0xff] %v369
  %386 = vst [vmem:[%s4 + $0x38] sm:$0xff] %v370
  %387 = vst [vmem:[%s4 + $0x40] sm:$0xff] %v371
  %388 = vst [vmem:[%s4 + $0x48] sm:$0xff] %v372
  %389 = vst [vmem:[%s4 + $0x50] sm:$0xff] %v373
  %390 = vst [vmem:[%s4 + $0x58] sm:$0xff] %v374
  %391 = vst [vmem:[%s4 + $0x60] sm:$0xff] %v375
  %392 = vst [vmem:[%s4 + $0x68] sm:$0xff] %v376
  %393 = vst [vmem:[%s4 + $0x70] sm:$0xff] %v377
  %394 = vst [vmem:[%s4 + $0x78] sm:$0xff] %v378
  // Predicated region
  $region18: #{resnet101_encoder_share.17} parent=0 // pred_check
    _
  $region19: #{resnet101_encoder_share.17} parent=0 // pred_check_branch
    %396 = sbr.rel (0) target = $region21
  $region20: #{resnet101_encoder_share.17} parent=0 // pred_region
    _
  $region21: #{resnet101_encoder_share.17} parent=0 // pred_fallthru
    _
  // Predicated region
  $region22: #{resnet101_encoder_share.17} parent=0 // pred_check
    _
  $region23: #{resnet101_encoder_share.17} parent=0 // pred_check_branch
    %398 = sbr.rel (0) target = $region25
  $region24: #{resnet101_encoder_share.17} parent=0 // pred_region
    _
  $region25: #{resnet101_encoder_share.17} parent=0 // pred_fallthru
    _

</llo_original>
